<compile_context>
chip_gen: v7x
topology: tpu7x:2x2x1
jax: 0.10.0
libtpu: 0.0.40
codegen_flags: <defaults>
</compile_context>

<pallas_src>
import functools

import jax
import jax.numpy as jnp
from jax.experimental import pallas as pl
from jax.experimental.pallas import tpu as pltpu


def _zero_halo(pad_ref, *, H, W):
    """Zero only the 1-pixel halo strips of an (N, H+2, W+2, C) scratch.

    The interior is fully overwritten afterwards, so halo-only zeroing is
    sufficient and skips ~all of the old full-buffer zero-fill stores.
    """
    N = pad_ref.shape[0]
    C = pad_ref.shape[3]
    zrow = jnp.zeros((N, 1, W + 2, C), jnp.float32)
    zcol = jnp.zeros((N, H, 1, C), jnp.float32)
    pad_ref[:, 0:1, :, :] = zrow                     # top halo row (incl. corners)
    pad_ref[:, H + 1:H + 2, :, :] = zrow             # bottom halo row (incl. corners)
    pad_ref[:, 1:H + 1, 0:1, :] = zcol               # left halo column
    pad_ref[:, 1:H + 1, W + 1:W + 2, :] = zcol       # right halo column


def _conv3x3_taps(pad_ref, w_ref, b_ref, *, H, W):
    """3x3 'same' conv + bias + ReLU as 9 accumulating per-tap MXU matmuls.

    pad_ref : (N, H+2, W+2, Cin) VMEM scratch, halo zeroed, interior = input.
    w_ref   : (9*Cin, Cout) weights (rows ordered dy-major, then dx, then cin).
    b_ref   : (1, Cout) bias.
    returns : (N*H*W, Cout) lane-dense f32 activation (post-ReLU).
    """
    N = pad_ref.shape[0]
    Cin = pad_ref.shape[3]
    NHW = N * H * W

    acc = None
    for dy in range(3):
        for dx in range(3):
            t = dy * 3 + dx
            tap = pad_ref[:, dy:dy + H, dx:dx + W, :].reshape(NHW, Cin)
            w_t = w_ref[t * Cin:(t + 1) * Cin, :]        # static (Cin, Cout) slice
            p = jnp.dot(tap, w_t, preferred_element_type=jnp.float32)
            acc = p if acc is None else acc + p
    return jnp.maximum(acc + b_ref[...], 0.0)            # bias + ReLU


def _fused_kernel(x1_ref, w1_ref, b1_ref, w2_ref, b2_ref, w3_ref, b3_ref,
                  o_ref, pad2, pad3, *, N, H, W):
    """conv1+relu -> conv2+relu -> conv3+relu, all activations kept in VMEM."""
    c1 = w1_ref.shape[1]
    c2 = w2_ref.shape[1]

    _zero_halo(pad2, H=H, W=W)
    _zero_halo(pad3, H=H, W=W)

    # Layer 1: im2col (NHW, 9) was built wrapper-side (Cin == 1); one small-K
    # matmul + bias + ReLU, no padded scratch, no in-kernel relayout.
    a1 = jnp.dot(x1_ref[...], w1_ref[...], preferred_element_type=jnp.float32)
    a1 = jnp.maximum(a1 + b1_ref[...], 0.0)                              # (NHW, 32)

    # Layer 2: write interior of zero-halo scratch, then 9 per-tap matmuls.
    pad2[:, 1:H + 1, 1:W + 1, :] = a1.reshape(N, H, W, c1)
    a2 = _conv3x3_taps(pad2, w2_ref, b2_ref, H=H, W=W)                   # (NHW, 64)

    # Layer 3.
    pad3[:, 1:H + 1, 1:W + 1, :] = a2.reshape(N, H, W, c2)
    a3 = _conv3x3_taps(pad3, w3_ref, b3_ref, H=H, W=W)                   # (NHW, 128)

    o_ref[...] = a3.astype(o_ref.dtype)                  # lane-dense (N*H*W, 128)


def match3_features_extractor(x_nchw, params):
    """Forward pass equivalent to Match3FeaturesExtractor.forward.
    Input: NCHW float32 (N, 1, H, W); output: NCHW float32 (N, 128, H, W)."""
    (w1, b1), (w2, b2), (w3, b3) = params
    N, cin, H, W = x_nchw.shape
    assert cin == 1, "Match3FeaturesExtractor expects a single input channel"
    c1, c2, c3 = w1.shape[-1], w2.shape[-1], w3.shape[-1]
    NHW = N * H * W

    # Layer-1 im2col built wrapper-side: with Cin == 1 this is a tiny
    # (NHW, 9) slab (a few KiB of HBM) that XLA fuses with input prep, and it
    # removes the lane-sparse Cin=1 relayout path from the kernel entirely.
    xp = jnp.pad(x_nchw.reshape(N, H, W), ((0, 0), (1, 1), (1, 1)))
    cols = [xp[:, dy:dy + H, dx:dx + W].reshape(NHW, 1)
            for dy in range(3) for dx in range(3)]
    x_im2col = jnp.concatenate(cols, axis=1)                             # (NHW, 9)

    kernel = functools.partial(_fused_kernel, N=N, H=H, W=W)
    out2d = pl.pallas_call(
        kernel,
        out_shape=jax.ShapeDtypeStruct((NHW, c3), jnp.float32),
        in_specs=[
            pl.BlockSpec((NHW, 9 * cin), lambda: (0, 0)),
            pl.BlockSpec((9 * cin, c1), lambda: (0, 0)),
            pl.BlockSpec((1, c1), lambda: (0, 0)),
            pl.BlockSpec((9 * c1, c2), lambda: (0, 0)),
            pl.BlockSpec((1, c2), lambda: (0, 0)),
            pl.BlockSpec((9 * c2, c3), lambda: (0, 0)),
            pl.BlockSpec((1, c3), lambda: (0, 0)),
        ],
        out_specs=pl.BlockSpec((NHW, c3), lambda: (0, 0)),
        scratch_shapes=[
            pltpu.VMEM((N, H + 2, W + 2, c1), jnp.float32),   # padded layer-2 input
            pltpu.VMEM((N, H + 2, W + 2, c2), jnp.float32),   # padded layer-3 input
        ],
    )(
        x_im2col,
        w1.reshape(9 * cin, c1), b1.reshape(1, c1),
        w2.reshape(9 * c1, c2), b2.reshape(1, c2),
        w3.reshape(9 * c2, c3), b3.reshape(1, c3),
    )

    # Lane-dense (N*H*W, 128) -> NCHW outside the kernel (cheap XLA transpose;
    # keeping it in-kernel would force 64-lane masked stores + XLU transposes).
    return jnp.transpose(out2d.reshape(N, H, W, c3), (0, 3, 1, 2))


def init_params(key):
    """Deterministic parameter init mimicking torch's default Conv2d init
    (uniform(-1/sqrt(fan_in), 1/sqrt(fan_in))).  Weights stored as
    (kh, kw, Cin, Cout)."""
    ks = jax.random.split(key, 6)

    def conv_init(kw, kb, cin, cout):
        fan_in = cin * 3 * 3
        bound = 1.0 / (fan_in ** 0.5)
        w = jax.random.uniform(kw, (3, 3, cin, cout), jnp.float32, -bound, bound)
        b = jax.random.uniform(kb, (cout,), jnp.float32, -bound, bound)
        return w, b

    return (
        conv_init(ks[0], ks[1], 1, 32),
        conv_init(ks[2], ks[3], 32, 64),
        conv_init(ks[4], ks[5], 64, 128),
    )


def _reference_forward(x_nchw, params):
    """Pure-JAX (XLA) reference for correctness checking."""
    x = x_nchw
    for (w, b) in params:
        w_oihw = jnp.transpose(w, (3, 2, 0, 1))
        x = jax.lax.conv_general_dilated(
            x, w_oihw, window_strides=(1, 1), padding=((1, 1), (1, 1)),
            dimension_numbers=("NCHW", "OIHW", "NCHW"))
        x = jnp.maximum(x + b[None, :, None, None], 0.0)
    return x


if __name__ == "__main__":
    key = jax.random.PRNGKey(0)
    k_params, k_x = jax.random.split(key)

    params = init_params(k_params)
    # Small match-3 board: batch=2, 1 channel, 8x8 spatial (NCHW like torch).
    x = jax.random.normal(k_x, (2, 1, 8, 8), dtype=jnp.float32)

    fwd = jax.jit(match3_features_extractor)
    out = jax.block_until_ready(fwd(x, params))

    ref = jax.block_until_ready(_reference_forward(x, params))
    assert out.shape == (2, 128, 8, 8), out.shape
    assert jnp.allclose(out, ref, rtol=1e-3, atol=1e-3), "mismatch vs XLA reference"

    print("KERNEL_OK")
</pallas_src>

<mosaic_0001>
module attributes {stable_mosaic.version = 11 : i64} {
  func.func @_fused_kernel(%arg0: memref<128x9xf32, #tpu.memory_space<vmem>>, %arg1: memref<9x32xf32, #tpu.memory_space<vmem>>, %arg2: memref<1x32xf32, #tpu.memory_space<vmem>>, %arg3: memref<288x64xf32, #tpu.memory_space<vmem>>, %arg4: memref<1x64xf32, #tpu.memory_space<vmem>>, %arg5: memref<576x128xf32, #tpu.memory_space<vmem>>, %arg6: memref<1x128xf32, #tpu.memory_space<vmem>>, %arg7: memref<128x128xf32, #tpu.memory_space<vmem>>, %arg8: memref<2x10x10x32xf32, #tpu.memory_space<vmem>>, %arg9: memref<2x10x10x64xf32, #tpu.memory_space<vmem>>) attributes {dimension_semantics = [], scalar_prefetch = 0 : i64, scratch_operands = 2 : i64, tpu.core_type = #tpu.core_type<tc>} {
    %cst = arith.constant 0.000000e+00 : f32
    %0 = vector.broadcast %cst : f32 to vector<2x1x10x32xf32>
    %cst_0 = arith.constant 0.000000e+00 : f32
    %1 = vector.broadcast %cst_0 : f32 to vector<2x8x1x32xf32>
    %c0 = arith.constant 0 : index
    %c0_1 = arith.constant 0 : index
    %c0_2 = arith.constant 0 : index
    %c0_3 = arith.constant 0 : index
    %2 = vector.load %arg8[%c0, %c0_1, %c0_2, %c0_3] : memref<2x10x10x32xf32, #tpu.memory_space<vmem>>, vector<2x1x10x32xf32>
    tpu.vector_store %arg8[%c0, %c0_1, %c0_2, %c0_3], %0 {strides = array<i32>} : memref<2x10x10x32xf32, #tpu.memory_space<vmem>>, vector<2x1x10x32xf32>,
    %c0_4 = arith.constant 0 : index
    %c9 = arith.constant 9 : index
    %c0_5 = arith.constant 0 : index
    %c0_6 = arith.constant 0 : index
    %3 = vector.load %arg8[%c0_4, %c9, %c0_5, %c0_6] : memref<2x10x10x32xf32, #tpu.memory_space<vmem>>, vector<2x1x10x32xf32>
    tpu.vector_store %arg8[%c0_4, %c9, %c0_5, %c0_6], %0 {strides = array<i32>} : memref<2x10x10x32xf32, #tpu.memory_space<vmem>>, vector<2x1x10x32xf32>,
    %c0_7 = arith.constant 0 : index
    %c1 = arith.constant 1 : index
    %c0_8 = arith.constant 0 : index
    %c0_9 = arith.constant 0 : index
    %4 = vector.load %arg8[%c0_7, %c1, %c0_8, %c0_9] : memref<2x10x10x32xf32, #tpu.memory_space<vmem>>, vector<2x8x1x32xf32>
    tpu.vector_store %arg8[%c0_7, %c1, %c0_8, %c0_9], %1 {strides = array<i32>} : memref<2x10x10x32xf32, #tpu.memory_space<vmem>>, vector<2x8x1x32xf32>,
    %c0_10 = arith.constant 0 : index
    %c1_11 = arith.constant 1 : index
    %c9_12 = arith.constant 9 : index
    %c0_13 = arith.constant 0 : index
    %5 = vector.load %arg8[%c0_10, %c1_11, %c9_12, %c0_13] : memref<2x10x10x32xf32, #tpu.memory_space<vmem>>, vector<2x8x1x32xf32>
    tpu.vector_store %arg8[%c0_10, %c1_11, %c9_12, %c0_13], %1 {strides = array<i32>} : memref<2x10x10x32xf32, #tpu.memory_space<vmem>>, vector<2x8x1x32xf32>,
    %cst_14 = arith.constant 0.000000e+00 : f32
    %6 = vector.broadcast %cst_14 : f32 to vector<2x1x10x64xf32>
    %cst_15 = arith.constant 0.000000e+00 : f32
    %7 = vector.broadcast %cst_15 : f32 to vector<2x8x1x64xf32>
    %c0_16 = arith.constant 0 : index
    %c0_17 = arith.constant 0 : index
    %c0_18 = arith.constant 0 : index
    %c0_19 = arith.constant 0 : index
    %8 = vector.load %arg9[%c0_16, %c0_17, %c0_18, %c0_19] : memref<2x10x10x64xf32, #tpu.memory_space<vmem>>, vector<2x1x10x64xf32>
    tpu.vector_store %arg9[%c0_16, %c0_17, %c0_18, %c0_19], %6 {strides = array<i32>} : memref<2x10x10x64xf32, #tpu.memory_space<vmem>>, vector<2x1x10x64xf32>,
    %c0_20 = arith.constant 0 : index
    %c9_21 = arith.constant 9 : index
    %c0_22 = arith.constant 0 : index
    %c0_23 = arith.constant 0 : index
    %9 = vector.load %arg9[%c0_20, %c9_21, %c0_22, %c0_23] : memref<2x10x10x64xf32, #tpu.memory_space<vmem>>, vector<2x1x10x64xf32>
    tpu.vector_store %arg9[%c0_20, %c9_21, %c0_22, %c0_23], %6 {strides = array<i32>} : memref<2x10x10x64xf32, #tpu.memory_space<vmem>>, vector<2x1x10x64xf32>,
    %c0_24 = arith.constant 0 : index
    %c1_25 = arith.constant 1 : index
    %c0_26 = arith.constant 0 : index
    %c0_27 = arith.constant 0 : index
    %10 = vector.load %arg9[%c0_24, %c1_25, %c0_26, %c0_27] : memref<2x10x10x64xf32, #tpu.memory_space<vmem>>, vector<2x8x1x64xf32>
    tpu.vector_store %arg9[%c0_24, %c1_25, %c0_26, %c0_27], %7 {strides = array<i32>} : memref<2x10x10x64xf32, #tpu.memory_space<vmem>>, vector<2x8x1x64xf32>,
    %c0_28 = arith.constant 0 : index
    %c1_29 = arith.constant 1 : index
    %c9_30 = arith.constant 9 : index
    %c0_31 = arith.constant 0 : index
    %11 = vector.load %arg9[%c0_28, %c1_29, %c9_30, %c0_31] : memref<2x10x10x64xf32, #tpu.memory_space<vmem>>, vector<2x8x1x64xf32>
    tpu.vector_store %arg9[%c0_28, %c1_29, %c9_30, %c0_31], %7 {strides = array<i32>} : memref<2x10x10x64xf32, #tpu.memory_space<vmem>>, vector<2x8x1x64xf32>,
    %c0_32 = arith.constant 0 : index
    %c0_33 = arith.constant 0 : index
    %12 = vector.load %arg0[%c0_32, %c0_33] : memref<128x9xf32, #tpu.memory_space<vmem>>, vector<128x9xf32>
    %c0_34 = arith.constant 0 : index
    %c0_35 = arith.constant 0 : index
    %13 = vector.load %arg1[%c0_34, %c0_35] : memref<9x32xf32, #tpu.memory_space<vmem>>, vector<9x32xf32>
    %cst_36 = arith.constant dense<0.000000e+00> : vector<128x32xf32>
    %14 = tpu.matmul %12, %13, %cst_36 {dimension_numbers = #tpu.dot_dimension_numbers<[1], [0], [0], [1], [0, 0, 1, 1], [], []>} : vector<128x9xf32>, vector<9x32xf32>, vector<128x32xf32> -> vector<128x32xf32>
    %c0_37 = arith.constant 0 : index
    %c0_38 = arith.constant 0 : index
    %15 = vector.load %arg2[%c0_37, %c0_38] : memref<1x32xf32, #tpu.memory_space<vmem>>, vector<1x32xf32>
    %16 = vector.broadcast %15 : vector<1x32xf32> to vector<128x32xf32>
    %17 = arith.addf %14, %16 : vector<128x32xf32>
    %cst_39 = arith.constant 0.000000e+00 : f32
    %18 = vector.broadcast %cst_39 : f32 to vector<128x32xf32>
    %19 = arith.maximumf %17, %18 : vector<128x32xf32>
    %20 = vector.shape_cast %19 : vector<128x32xf32> to vector<2x8x8x32xf32>
    %c0_40 = arith.constant 0 : index
    %c1_41 = arith.constant 1 : index
    %c1_42 = arith.constant 1 : index
    %c0_43 = arith.constant 0 : index
    %21 = vector.load %arg8[%c0_40, %c1_41, %c1_42, %c0_43] : memref<2x10x10x32xf32, #tpu.memory_space<vmem>>, vector<2x8x8x32xf32>
    tpu.vector_store %arg8[%c0_40, %c1_41, %c1_42, %c0_43], %20 {strides = array<i32>} : memref<2x10x10x32xf32, #tpu.memory_space<vmem>>, vector<2x8x8x32xf32>,
    %c0_44 = arith.constant 0 : index
    %c0_45 = arith.constant 0 : index
    %c0_46 = arith.constant 0 : index
    %c0_47 = arith.constant 0 : index
    %22 = vector.load %arg8[%c0_44, %c0_45, %c0_46, %c0_47] : memref<2x10x10x32xf32, #tpu.memory_space<vmem>>, vector<2x8x8x32xf32>
    %23 = vector.shape_cast %22 : vector<2x8x8x32xf32> to vector<128x32xf32>
    %c0_48 = arith.constant 0 : index
    %c0_49 = arith.constant 0 : index
    %24 = vector.load %arg3[%c0_48, %c0_49] : memref<288x64xf32, #tpu.memory_space<vmem>>, vector<32x64xf32>
    %cst_50 = arith.constant dense<0.000000e+00> : vector<128x64xf32>
    %25 = tpu.matmul %23, %24, %cst_50 {dimension_numbers = #tpu.dot_dimension_numbers<[1], [0], [0], [1], [0, 0, 1, 1], [], []>} : vector<128x32xf32>, vector<32x64xf32>, vector<128x64xf32> -> vector<128x64xf32>
    %c0_51 = arith.constant 0 : index
    %c0_52 = arith.constant 0 : index
    %c1_53 = arith.constant 1 : index
    %c0_54 = arith.constant 0 : index
    %26 = vector.load %arg8[%c0_51, %c0_52, %c1_53, %c0_54] : memref<2x10x10x32xf32, #tpu.memory_space<vmem>>, vector<2x8x8x32xf32>
    %27 = vector.shape_cast %26 : vector<2x8x8x32xf32> to vector<128x32xf32>
    %c32 = arith.constant 32 : index
    %c0_55 = arith.constant 0 : index
    %28 = vector.load %arg3[%c32, %c0_55] : memref<288x64xf32, #tpu.memory_space<vmem>>, vector<32x64xf32>
    %cst_56 = arith.constant dense<0.000000e+00> : vector<128x64xf32>
    %29 = tpu.matmul %27, %28, %cst_56 {dimension_numbers = #tpu.dot_dimension_numbers<[1], [0], [0], [1], [0, 0, 1, 1], [], []>} : vector<128x32xf32>, vector<32x64xf32>, vector<128x64xf32> -> vector<128x64xf32>
    %30 = arith.addf %25, %29 : vector<128x64xf32>
    %c0_57 = arith.constant 0 : index
    %c0_58 = arith.constant 0 : index
    %c2 = arith.constant 2 : index
    %c0_59 = arith.constant 0 : index
    %31 = vector.load %arg8[%c0_57, %c0_58, %c2, %c0_59] : memref<2x10x10x32xf32, #tpu.memory_space<vmem>>, vector<2x8x8x32xf32>
    %32 = vector.shape_cast %31 : vector<2x8x8x32xf32> to vector<128x32xf32>
    %c64 = arith.constant 64 : index
    %c0_60 = arith.constant 0 : index
    %33 = vector.load %arg3[%c64, %c0_60] : memref<288x64xf32, #tpu.memory_space<vmem>>, vector<32x64xf32>
    %cst_61 = arith.constant dense<0.000000e+00> : vector<128x64xf32>
    %34 = tpu.matmul %32, %33, %cst_61 {dimension_numbers = #tpu.dot_dimension_numbers<[1], [0], [0], [1], [0, 0, 1, 1], [], []>} : vector<128x32xf32>, vector<32x64xf32>, vector<128x64xf32> -> vector<128x64xf32>
    %35 = arith.addf %30, %34 : vector<128x64xf32>
    %c0_62 = arith.constant 0 : index
    %c1_63 = arith.constant 1 : index
    %c0_64 = arith.constant 0 : index
    %c0_65 = arith.constant 0 : index
    %36 = vector.load %arg8[%c0_62, %c1_63, %c0_64, %c0_65] : memref<2x10x10x32xf32, #tpu.memory_space<vmem>>, vector<2x8x8x32xf32>
    %37 = vector.shape_cast %36 : vector<2x8x8x32xf32> to vector<128x32xf32>
    %c96 = arith.constant 96 : index
    %c0_66 = arith.constant 0 : index
    %38 = vector.load %arg3[%c96, %c0_66] : memref<288x64xf32, #tpu.memory_space<vmem>>, vector<32x64xf32>
    %cst_67 = arith.constant dense<0.000000e+00> : vector<128x64xf32>
    %39 = tpu.matmul %37, %38, %cst_67 {dimension_numbers = #tpu.dot_dimension_numbers<[1], [0], [0], [1], [0, 0, 1, 1], [], []>} : vector<128x32xf32>, vector<32x64xf32>, vector<128x64xf32> -> vector<128x64xf32>
    %40 = arith.addf %35, %39 : vector<128x64xf32>
    %c0_68 = arith.constant 0 : index
    %c1_69 = arith.constant 1 : index
    %c1_70 = arith.constant 1 : index
    %c0_71 = arith.constant 0 : index
    %41 = vector.load %arg8[%c0_68, %c1_69, %c1_70, %c0_71] : memref<2x10x10x32xf32, #tpu.memory_space<vmem>>, vector<2x8x8x32xf32>
    %42 = vector.shape_cast %41 : vector<2x8x8x32xf32> to vector<128x32xf32>
    %c128 = arith.constant 128 : index
    %c0_72 = arith.constant 0 : index
    %43 = vector.load %arg3[%c128, %c0_72] : memref<288x64xf32, #tpu.memory_space<vmem>>, vector<32x64xf32>
    %cst_73 = arith.constant dense<0.000000e+00> : vector<128x64xf32>
    %44 = tpu.matmul %42, %43, %cst_73 {dimension_numbers = #tpu.dot_dimension_numbers<[1], [0], [0], [1], [0, 0, 1, 1], [], []>} : vector<128x32xf32>, vector<32x64xf32>, vector<128x64xf32> -> vector<128x64xf32>
    %45 = arith.addf %40, %44 : vector<128x64xf32>
    %c0_74 = arith.constant 0 : index
    %c1_75 = arith.constant 1 : index
    %c2_76 = arith.constant 2 : index
    %c0_77 = arith.constant 0 : index
    %46 = vector.load %arg8[%c0_74, %c1_75, %c2_76, %c0_77] : memref<2x10x10x32xf32, #tpu.memory_space<vmem>>, vector<2x8x8x32xf32>
    %47 = vector.shape_cast %46 : vector<2x8x8x32xf32> to vector<128x32xf32>
    %c160 = arith.constant 160 : index
    %c0_78 = arith.constant 0 : index
    %48 = vector.load %arg3[%c160, %c0_78] : memref<288x64xf32, #tpu.memory_space<vmem>>, vector<32x64xf32>
    %cst_79 = arith.constant dense<0.000000e+00> : vector<128x64xf32>
    %49 = tpu.matmul %47, %48, %cst_79 {dimension_numbers = #tpu.dot_dimension_numbers<[1], [0], [0], [1], [0, 0, 1, 1], [], []>} : vector<128x32xf32>, vector<32x64xf32>, vector<128x64xf32> -> vector<128x64xf32>
    %50 = arith.addf %45, %49 : vector<128x64xf32>
    %c0_80 = arith.constant 0 : index
    %c2_81 = arith.constant 2 : index
    %c0_82 = arith.constant 0 : index
    %c0_83 = arith.constant 0 : index
    %51 = vector.load %arg8[%c0_80, %c2_81, %c0_82, %c0_83] : memref<2x10x10x32xf32, #tpu.memory_space<vmem>>, vector<2x8x8x32xf32>
    %52 = vector.shape_cast %51 : vector<2x8x8x32xf32> to vector<128x32xf32>
    %c192 = arith.constant 192 : index
    %c0_84 = arith.constant 0 : index
    %53 = vector.load %arg3[%c192, %c0_84] : memref<288x64xf32, #tpu.memory_space<vmem>>, vector<32x64xf32>
    %cst_85 = arith.constant dense<0.000000e+00> : vector<128x64xf32>
    %54 = tpu.matmul %52, %53, %cst_85 {dimension_numbers = #tpu.dot_dimension_numbers<[1], [0], [0], [1], [0, 0, 1, 1], [], []>} : vector<128x32xf32>, vector<32x64xf32>, vector<128x64xf32> -> vector<128x64xf32>
    %55 = arith.addf %50, %54 : vector<128x64xf32>
    %c0_86 = arith.constant 0 : index
    %c2_87 = arith.constant 2 : index
    %c1_88 = arith.constant 1 : index
    %c0_89 = arith.constant 0 : index
    %56 = vector.load %arg8[%c0_86, %c2_87, %c1_88, %c0_89] : memref<2x10x10x32xf32, #tpu.memory_space<vmem>>, vector<2x8x8x32xf32>
    %57 = vector.shape_cast %56 : vector<2x8x8x32xf32> to vector<128x32xf32>
    %c224 = arith.constant 224 : index
    %c0_90 = arith.constant 0 : index
    %58 = vector.load %arg3[%c224, %c0_90] : memref<288x64xf32, #tpu.memory_space<vmem>>, vector<32x64xf32>
    %cst_91 = arith.constant dense<0.000000e+00> : vector<128x64xf32>
    %59 = tpu.matmul %57, %58, %cst_91 {dimension_numbers = #tpu.dot_dimension_numbers<[1], [0], [0], [1], [0, 0, 1, 1], [], []>} : vector<128x32xf32>, vector<32x64xf32>, vector<128x64xf32> -> vector<128x64xf32>
    %60 = arith.addf %55, %59 : vector<128x64xf32>
    %c0_92 = arith.constant 0 : index
    %c2_93 = arith.constant 2 : index
    %c2_94 = arith.constant 2 : index
    %c0_95 = arith.constant 0 : index
    %61 = vector.load %arg8[%c0_92, %c2_93, %c2_94, %c0_95] : memref<2x10x10x32xf32, #tpu.memory_space<vmem>>, vector<2x8x8x32xf32>
    %62 = vector.shape_cast %61 : vector<2x8x8x32xf32> to vector<128x32xf32>
    %c256 = arith.constant 256 : index
    %c0_96 = arith.constant 0 : index
    %63 = vector.load %arg3[%c256, %c0_96] : memref<288x64xf32, #tpu.memory_space<vmem>>, vector<32x64xf32>
    %cst_97 = arith.constant dense<0.000000e+00> : vector<128x64xf32>
    %64 = tpu.matmul %62, %63, %cst_97 {dimension_numbers = #tpu.dot_dimension_numbers<[1], [0], [0], [1], [0, 0, 1, 1], [], []>} : vector<128x32xf32>, vector<32x64xf32>, vector<128x64xf32> -> vector<128x64xf32>
    %65 = arith.addf %60, %64 : vector<128x64xf32>
    %c0_98 = arith.constant 0 : index
    %c0_99 = arith.constant 0 : index
    %66 = vector.load %arg4[%c0_98, %c0_99] : memref<1x64xf32, #tpu.memory_space<vmem>>, vector<1x64xf32>
    %67 = vector.broadcast %66 : vector<1x64xf32> to vector<128x64xf32>
    %68 = arith.addf %65, %67 : vector<128x64xf32>
    %cst_100 = arith.constant 0.000000e+00 : f32
    %69 = vector.broadcast %cst_100 : f32 to vector<128x64xf32>
    %70 = arith.maximumf %68, %69 : vector<128x64xf32>
    %71 = vector.shape_cast %70 : vector<128x64xf32> to vector<2x8x8x64xf32>
    %c0_101 = arith.constant 0 : index
    %c1_102 = arith.constant 1 : index
    %c1_103 = arith.constant 1 : index
    %c0_104 = arith.constant 0 : index
    %72 = vector.load %arg9[%c0_101, %c1_102, %c1_103, %c0_104] : memref<2x10x10x64xf32, #tpu.memory_space<vmem>>, vector<2x8x8x64xf32>
    tpu.vector_store %arg9[%c0_101, %c1_102, %c1_103, %c0_104], %71 {strides = array<i32>} : memref<2x10x10x64xf32, #tpu.memory_space<vmem>>, vector<2x8x8x64xf32>,
    %c0_105 = arith.constant 0 : index
    %c0_106 = arith.constant 0 : index
    %c0_107 = arith.constant 0 : index
    %c0_108 = arith.constant 0 : index
    %73 = vector.load %arg9[%c0_105, %c0_106, %c0_107, %c0_108] : memref<2x10x10x64xf32, #tpu.memory_space<vmem>>, vector<2x8x8x64xf32>
    %74 = vector.shape_cast %73 : vector<2x8x8x64xf32> to vector<128x64xf32>
    %c0_109 = arith.constant 0 : index
    %c0_110 = arith.constant 0 : index
    %75 = vector.load %arg5[%c0_109, %c0_110] : memref<576x128xf32, #tpu.memory_space<vmem>>, vector<64x128xf32>
    %cst_111 = arith.constant dense<0.000000e+00> : vector<128x128xf32>
    %76 = tpu.matmul %74, %75, %cst_111 {dimension_numbers = #tpu.dot_dimension_numbers<[1], [0], [0], [1], [0, 0, 1, 1], [], []>} : vector<128x64xf32>, vector<64x128xf32>, vector<128x128xf32> -> vector<128x128xf32>
    %c0_112 = arith.constant 0 : index
    %c0_113 = arith.constant 0 : index
    %c1_114 = arith.constant 1 : index
    %c0_115 = arith.constant 0 : index
    %77 = vector.load %arg9[%c0_112, %c0_113, %c1_114, %c0_115] : memref<2x10x10x64xf32, #tpu.memory_space<vmem>>, vector<2x8x8x64xf32>
    %78 = vector.shape_cast %77 : vector<2x8x8x64xf32> to vector<128x64xf32>
    %c64_116 = arith.constant 64 : index
    %c0_117 = arith.constant 0 : index
    %79 = vector.load %arg5[%c64_116, %c0_117] : memref<576x128xf32, #tpu.memory_space<vmem>>, vector<64x128xf32>
    %cst_118 = arith.constant dense<0.000000e+00> : vector<128x128xf32>
    %80 = tpu.matmul %78, %79, %cst_118 {dimension_numbers = #tpu.dot_dimension_numbers<[1], [0], [0], [1], [0, 0, 1, 1], [], []>} : vector<128x64xf32>, vector<64x128xf32>, vector<128x128xf32> -> vector<128x128xf32>
    %81 = arith.addf %76, %80 : vector<128x128xf32>
    %c0_119 = arith.constant 0 : index
    %c0_120 = arith.constant 0 : index
    %c2_121 = arith.constant 2 : index
    %c0_122 = arith.constant 0 : index
    %82 = vector.load %arg9[%c0_119, %c0_120, %c2_121, %c0_122] : memref<2x10x10x64xf32, #tpu.memory_space<vmem>>, vector<2x8x8x64xf32>
    %83 = vector.shape_cast %82 : vector<2x8x8x64xf32> to vector<128x64xf32>
    %c128_123 = arith.constant 128 : index
    %c0_124 = arith.constant 0 : index
    %84 = vector.load %arg5[%c128_123, %c0_124] : memref<576x128xf32, #tpu.memory_space<vmem>>, vector<64x128xf32>
    %cst_125 = arith.constant dense<0.000000e+00> : vector<128x128xf32>
    %85 = tpu.matmul %83, %84, %cst_125 {dimension_numbers = #tpu.dot_dimension_numbers<[1], [0], [0], [1], [0, 0, 1, 1], [], []>} : vector<128x64xf32>, vector<64x128xf32>, vector<128x128xf32> -> vector<128x128xf32>
    %86 = arith.addf %81, %85 : vector<128x128xf32>
    %c0_126 = arith.constant 0 : index
    %c1_127 = arith.constant 1 : index
    %c0_128 = arith.constant 0 : index
    %c0_129 = arith.constant 0 : index
    %87 = vector.load %arg9[%c0_126, %c1_127, %c0_128, %c0_129] : memref<2x10x10x64xf32, #tpu.memory_space<vmem>>, vector<2x8x8x64xf32>
    %88 = vector.shape_cast %87 : vector<2x8x8x64xf32> to vector<128x64xf32>
    %c192_130 = arith.constant 192 : index
    %c0_131 = arith.constant 0 : index
    %89 = vector.load %arg5[%c192_130, %c0_131] : memref<576x128xf32, #tpu.memory_space<vmem>>, vector<64x128xf32>
    %cst_132 = arith.constant dense<0.000000e+00> : vector<128x128xf32>
    %90 = tpu.matmul %88, %89, %cst_132 {dimension_numbers = #tpu.dot_dimension_numbers<[1], [0], [0], [1], [0, 0, 1, 1], [], []>} : vector<128x64xf32>, vector<64x128xf32>, vector<128x128xf32> -> vector<128x128xf32>
    %91 = arith.addf %86, %90 : vector<128x128xf32>
    %c0_133 = arith.constant 0 : index
    %c1_134 = arith.constant 1 : index
    %c1_135 = arith.constant 1 : index
    %c0_136 = arith.constant 0 : index
    %92 = vector.load %arg9[%c0_133, %c1_134, %c1_135, %c0_136] : memref<2x10x10x64xf32, #tpu.memory_space<vmem>>, vector<2x8x8x64xf32>
    %93 = vector.shape_cast %92 : vector<2x8x8x64xf32> to vector<128x64xf32>
    %c256_137 = arith.constant 256 : index
    %c0_138 = arith.constant 0 : index
    %94 = vector.load %arg5[%c256_137, %c0_138] : memref<576x128xf32, #tpu.memory_space<vmem>>, vector<64x128xf32>
    %cst_139 = arith.constant dense<0.000000e+00> : vector<128x128xf32>
    %95 = tpu.matmul %93, %94, %cst_139 {dimension_numbers = #tpu.dot_dimension_numbers<[1], [0], [0], [1], [0, 0, 1, 1], [], []>} : vector<128x64xf32>, vector<64x128xf32>, vector<128x128xf32> -> vector<128x128xf32>
    %96 = arith.addf %91, %95 : vector<128x128xf32>
    %c0_140 = arith.constant 0 : index
    %c1_141 = arith.constant 1 : index
    %c2_142 = arith.constant 2 : index
    %c0_143 = arith.constant 0 : index
    %97 = vector.load %arg9[%c0_140, %c1_141, %c2_142, %c0_143] : memref<2x10x10x64xf32, #tpu.memory_space<vmem>>, vector<2x8x8x64xf32>
    %98 = vector.shape_cast %97 : vector<2x8x8x64xf32> to vector<128x64xf32>
    %c320 = arith.constant 320 : index
    %c0_144 = arith.constant 0 : index
    %99 = vector.load %arg5[%c320, %c0_144] : memref<576x128xf32, #tpu.memory_space<vmem>>, vector<64x128xf32>
    %cst_145 = arith.constant dense<0.000000e+00> : vector<128x128xf32>
    %100 = tpu.matmul %98, %99, %cst_145 {dimension_numbers = #tpu.dot_dimension_numbers<[1], [0], [0], [1], [0, 0, 1, 1], [], []>} : vector<128x64xf32>, vector<64x128xf32>, vector<128x128xf32> -> vector<128x128xf32>
    %101 = arith.addf %96, %100 : vector<128x128xf32>
    %c0_146 = arith.constant 0 : index
    %c2_147 = arith.constant 2 : index
    %c0_148 = arith.constant 0 : index
    %c0_149 = arith.constant 0 : index
    %102 = vector.load %arg9[%c0_146, %c2_147, %c0_148, %c0_149] : memref<2x10x10x64xf32, #tpu.memory_space<vmem>>, vector<2x8x8x64xf32>
    %103 = vector.shape_cast %102 : vector<2x8x8x64xf32> to vector<128x64xf32>
    %c384 = arith.constant 384 : index
    %c0_150 = arith.constant 0 : index
    %104 = vector.load %arg5[%c384, %c0_150] : memref<576x128xf32, #tpu.memory_space<vmem>>, vector<64x128xf32>
    %cst_151 = arith.constant dense<0.000000e+00> : vector<128x128xf32>
    %105 = tpu.matmul %103, %104, %cst_151 {dimension_numbers = #tpu.dot_dimension_numbers<[1], [0], [0], [1], [0, 0, 1, 1], [], []>} : vector<128x64xf32>, vector<64x128xf32>, vector<128x128xf32> -> vector<128x128xf32>
    %106 = arith.addf %101, %105 : vector<128x128xf32>
    %c0_152 = arith.constant 0 : index
    %c2_153 = arith.constant 2 : index
    %c1_154 = arith.constant 1 : index
    %c0_155 = arith.constant 0 : index
    %107 = vector.load %arg9[%c0_152, %c2_153, %c1_154, %c0_155] : memref<2x10x10x64xf32, #tpu.memory_space<vmem>>, vector<2x8x8x64xf32>
    %108 = vector.shape_cast %107 : vector<2x8x8x64xf32> to vector<128x64xf32>
    %c448 = arith.constant 448 : index
    %c0_156 = arith.constant 0 : index
    %109 = vector.load %arg5[%c448, %c0_156] : memref<576x128xf32, #tpu.memory_space<vmem>>, vector<64x128xf32>
    %cst_157 = arith.constant dense<0.000000e+00> : vector<128x128xf32>
    %110 = tpu.matmul %108, %109, %cst_157 {dimension_numbers = #tpu.dot_dimension_numbers<[1], [0], [0], [1], [0, 0, 1, 1], [], []>} : vector<128x64xf32>, vector<64x128xf32>, vector<128x128xf32> -> vector<128x128xf32>
    %111 = arith.addf %106, %110 : vector<128x128xf32>
    %c0_158 = arith.constant 0 : index
    %c2_159 = arith.constant 2 : index
    %c2_160 = arith.constant 2 : index
    %c0_161 = arith.constant 0 : index
    %112 = vector.load %arg9[%c0_158, %c2_159, %c2_160, %c0_161] : memref<2x10x10x64xf32, #tpu.memory_space<vmem>>, vector<2x8x8x64xf32>
    %113 = vector.shape_cast %112 : vector<2x8x8x64xf32> to vector<128x64xf32>
    %c512 = arith.constant 512 : index
    %c0_162 = arith.constant 0 : index
    %114 = vector.load %arg5[%c512, %c0_162] : memref<576x128xf32, #tpu.memory_space<vmem>>, vector<64x128xf32>
    %cst_163 = arith.constant dense<0.000000e+00> : vector<128x128xf32>
    %115 = tpu.matmul %113, %114, %cst_163 {dimension_numbers = #tpu.dot_dimension_numbers<[1], [0], [0], [1], [0, 0, 1, 1], [], []>} : vector<128x64xf32>, vector<64x128xf32>, vector<128x128xf32> -> vector<128x128xf32>
    %116 = arith.addf %111, %115 : vector<128x128xf32>
    %c0_164 = arith.constant 0 : index
    %c0_165 = arith.constant 0 : index
    %117 = vector.load %arg6[%c0_164, %c0_165] : memref<1x128xf32, #tpu.memory_space<vmem>>, vector<1x128xf32>
    %118 = vector.broadcast %117 : vector<1x128xf32> to vector<128x128xf32>
    %119 = arith.addf %116, %118 : vector<128x128xf32>
    %cst_166 = arith.constant 0.000000e+00 : f32
    %120 = vector.broadcast %cst_166 : f32 to vector<128x128xf32>
    %121 = arith.maximumf %119, %120 : vector<128x128xf32>
    %c0_167 = arith.constant 0 : index
    %c0_168 = arith.constant 0 : index
    %122 = vector.load %arg7[%c0_167, %c0_168] : memref<128x128xf32, #tpu.memory_space<vmem>>, vector<128x128xf32>
    tpu.vector_store %arg7[%c0_167, %c0_168], %121 {strides = array<i32>} : memref<128x128xf32, #tpu.memory_space<vmem>>, vector<128x128xf32>,
    return
  }
}

</mosaic_0001>

<llo_original>
// kernel: match3_features_extractor.1
$region0: #{match3_features_extractor.1}
  #allocation0 [shape = 'u32[]', space=smem, size = 0x4, offset = 0x4, fixed_abs, tag = 'smem constant byte address 0x4 - core index']
  #allocation1 [shape = 'u32[144,128]{1,0:T(1,128)}', space=vmem, size = 0x12000, scoped, tag = 'internal scratch']
  #allocation2 [shape = 'f32[2,10,10,32]{3,2,1,0:T(8,128)}', space=vmem, size = 0x28000, scoped, tag = 'scratch operand']
  #allocation3 [shape = 'f32[2,10,10,64]{3,2,1,0:T(8,128)}', space=vmem, size = 0x28000, scoped, tag = 'scratch operand']
  %s0 = inlined_call_operand.vmem [shape: f32[128,9], index: 0, kind: input, shape index: {}]
  %s1 = inlined_call_operand.vmem [shape: f32[9,32], index: 1, kind: input, shape index: {}]
  %s2 = inlined_call_operand.vmem [shape: f32[1,32], index: 2, kind: input, shape index: {}]
  %s3 = inlined_call_operand.hbm [shape: f32[288,64], index: 3, kind: input, shape index: {}]
  %s4 = inlined_call_operand.vmem [shape: f32[1,64], index: 4, kind: input, shape index: {}]
  %s5 = inlined_call_operand.vmem [shape: f32[576,128], index: 5, kind: input, shape index: {}]
  %s6 = inlined_call_operand.vmem [shape: f32[1,128], index: 6, kind: input, shape index: {}]
  %s7 = inlined_call_operand.hbm [shape: f32[128,128], index: 7, kind: output, shape index: {}]
  %s8 = sld [smem:[#allocation0]]
  $region42: #{match3_features_extractor.1} parent=0
    _
  %s10 = ssub.s32 1, %s8
  %s11 = scalar_select 0, %s10, %s8
  $region1: #{match3_features_extractor.1} parent=0
    #allocation4 [shape = 'u8[147456]{0}', space=vmem, size = 0x24000, scoped, tag = 'input window, operand 3, single buffered']
    #allocation5 [shape = 's32[1]{0}', space=sflag, size = 0x4, scoped, tag = 'scoped memory for match3_features_extractor.1']
    #allocation6 [shape = 's32[1]{0}', space=sflag, size = 0x4, scoped, tag = 'scoped memory for match3_features_extractor.1']
    #allocation7 [shape = 'u8[65536]{0}', space=vmem, size = 0x10000, scoped, tag = 'output window, operand 0, single buffered']
    %12 = vsyncpa [#allocation5], 0
    %13 = vsyncpa [#allocation6], 0
    // Predicated region
    $region2: #{match3_features_extractor.1} parent=1 // pred_check
      _
    $region3: #{match3_features_extractor.1} parent=1 // pred_check_branch
      %15 = sbr.rel (0) target = $region5
    $region4: #{match3_features_extractor.1} parent=1 // pred_region
      _
    $region5: #{match3_features_extractor.1} parent=1 // pred_fallthru
      _
    // Predicated region
    $region6: #{match3_features_extractor.1} parent=1 // pred_check
      _
    $region7: #{match3_features_extractor.1} parent=1 // pred_check_branch
      %17 = sbr.rel (0) target = $region9
    $region8: #{match3_features_extractor.1} parent=1 // pred_region
      _
    $region9: #{match3_features_extractor.1} parent=1 // pred_fallthru
      _
    // Predicated region
    $region10: #{match3_features_extractor.1} parent=1 // pred_check
      _
    $region11: #{match3_features_extractor.1} parent=1 // pred_check_branch
      %19 = sbr.rel (0) target = $region13
    $region12: #{match3_features_extractor.1} parent=1 // pred_region
      _
    $region13: #{match3_features_extractor.1} parent=1 // pred_fallthru
      _
    // Predicated region
    $region14: #{match3_features_extractor.1} parent=1 // pred_check
      _
    $region15: #{match3_features_extractor.1} parent=1 // pred_check_branch
      %21 = sbr.rel (0) target = $region17
    $region16: #{match3_features_extractor.1} parent=1 // pred_region
      %s23 = ssub.s32 4608, 4608
      %24 = vsyncadd [#allocation5], %s23
      %s25 = sshll.u32 [#allocation4], 4
      %s26 = int_to_ptr.vmem [resolvable:$true] %s25
      %31 = dma.hbm_to_vmem [thread:$0]  %s3, 4608, %s26, [#allocation5], 128, 128, 8
    $region17: #{match3_features_extractor.1} parent=1 // pred_fallthru
      _
    // Predicated region
    $region18: #{match3_features_extractor.1} parent=1 // pred_check
      _
    $region19: #{match3_features_extractor.1} parent=1 // pred_check_branch
      %33 = sbr.rel (0) target = $region21
    $region20: #{match3_features_extractor.1} parent=1 // pred_region
      _
    $region21: #{match3_features_extractor.1} parent=1 // pred_fallthru
      _
    // Predicated region
    $region22: #{match3_features_extractor.1} parent=1 // pred_check
      _
    $region23: #{match3_features_extractor.1} parent=1 // pred_check_branch
      %35 = sbr.rel (0) target = $region25
    $region24: #{match3_features_extractor.1} parent=1 // pred_region
      _
    $region25: #{match3_features_extractor.1} parent=1 // pred_fallthru
      _
    // Predicated region
    $region26: #{match3_features_extractor.1} parent=1 // pred_check
      _
    $region27: #{match3_features_extractor.1} parent=1 // pred_check_branch
      %37 = sbr.rel (0) target = $region29
    $region28: #{match3_features_extractor.1} parent=1 // pred_region
      _
    $region29: #{match3_features_extractor.1} parent=1 // pred_fallthru
      _
    // Predicated region
    $region30: #{match3_features_extractor.1} parent=1 // pred_check
      _
    $region31: #{match3_features_extractor.1} parent=1 // pred_check_branch
      %39 = sbr.rel (0) target = $region33
    $region32: #{match3_features_extractor.1} parent=1 // pred_region
      %40 = dma.done [#allocation5], 4608
    $region33: #{match3_features_extractor.1} parent=1 // pred_fallthru
      _
    %vm41 = vcmask 261120
    %42 = vst.msk [vmem:[#allocation2] sm:$0xff] %vm41, 0.0
    %vm43 = vcmask 254976
    %44 = vst.msk [vmem:[#allocation2 + $0x8] sm:$0x3] %vm43, 0.0
    %45 = vst.msk [vmem:[#allocation2 + $0xa0] sm:$0xff] %vm41, 0.0
    %46 = vst.msk [vmem:[#allocation2 + $0xa8] sm:$0x3] %vm43, 0.0
    %s47 = scalar_lea.vmem [#allocation2], 144
    %48 = vst.msk [vmem:[%s47] sm:$0xff] %vm41, 0.0
    %49 = vst.msk [vmem:[%s47 + $0x8] sm:$0x3] %vm43, 0.0
    %50 = vst.msk [vmem:[%s47 + $0xa0] sm:$0xff] %vm41, 0.0
    %51 = vst.msk [vmem:[%s47 + $0xa8] sm:$0x3] %vm43, 0.0
    %s52 = scalar_lea.vmem [#allocation2], 16
    %vm53 = vcmask 253952
    %54 = vst.msk [vmem:[%s52] sm:$0x1] %vm53, 0.0
    %55 = vst.msk [vmem:[%s52 + $0x10] sm:$0x1] %vm53, 0.0
    %56 = vst.msk [vmem:[%s52 + $0x20] sm:$0x1] %vm53, 0.0
    %57 = vst.msk [vmem:[%s52 + $0x30] sm:$0x1] %vm53, 0.0
    %58 = vst.msk [vmem:[%s52 + $0x40] sm:$0x1] %vm53, 0.0
    %59 = vst.msk [vmem:[%s52 + $0x50] sm:$0x1] %vm53, 0.0
    %60 = vst.msk [vmem:[%s52 + $0x60] sm:$0x1] %vm53, 0.0
    %61 = vst.msk [vmem:[%s52 + $0x70] sm:$0x1] %vm53, 0.0
    %62 = vst.msk [vmem:[%s52 + $0xa0] sm:$0x1] %vm53, 0.0
    %63 = vst.msk [vmem:[%s52 + $0xb0] sm:$0x1] %vm53, 0.0
    %64 = vst.msk [vmem:[%s52 + $0xc0] sm:$0x1] %vm53, 0.0
    %65 = vst.msk [vmem:[%s52 + $0xd0] sm:$0x1] %vm53, 0.0
    %66 = vst.msk [vmem:[%s52 + $0xe0] sm:$0x1] %vm53, 0.0
    %67 = vst.msk [vmem:[%s52 + $0xf0] sm:$0x1] %vm53, 0.0
    %68 = vst.msk [vmem:[%s52 + $0x100] sm:$0x1] %vm53, 0.0
    %69 = vst.msk [vmem:[%s52 + $0x110] sm:$0x1] %vm53, 0.0
    %70 = vst.msk [vmem:[%s52 + $0x9] sm:$0x1] %vm53, 0.0
    %71 = vst.msk [vmem:[%s52 + $0x19] sm:$0x1] %vm53, 0.0
    %72 = vst.msk [vmem:[%s52 + $0x29] sm:$0x1] %vm53, 0.0
    %73 = vst.msk [vmem:[%s52 + $0x39] sm:$0x1] %vm53, 0.0
    %74 = vst.msk [vmem:[%s52 + $0x49] sm:$0x1] %vm53, 0.0
    %75 = vst.msk [vmem:[%s52 + $0x59] sm:$0x1] %vm53, 0.0
    %76 = vst.msk [vmem:[%s52 + $0x69] sm:$0x1] %vm53, 0.0
    %77 = vst.msk [vmem:[%s52 + $0x79] sm:$0x1] %vm53, 0.0
    %78 = vst.msk [vmem:[%s52 + $0xa9] sm:$0x1] %vm53, 0.0
    %79 = vst.msk [vmem:[%s52 + $0xb9] sm:$0x1] %vm53, 0.0
    %80 = vst.msk [vmem:[%s52 + $0xc9] sm:$0x1] %vm53, 0.0
    %81 = vst.msk [vmem:[%s52 + $0xd9] sm:$0x1] %vm53, 0.0
    %82 = vst.msk [vmem:[%s52 + $0xe9] sm:$0x1] %vm53, 0.0
    %83 = vst.msk [vmem:[%s52 + $0xf9] sm:$0x1] %vm53, 0.0
    %84 = vst.msk [vmem:[%s52 + $0x109] sm:$0x1] %vm53, 0.0
    %85 = vst.msk [vmem:[%s52 + $0x119] sm:$0x1] %vm53, 0.0
    %vm86 = vcmask 523264
    %87 = vst.msk [vmem:[#allocation3] sm:$0xff] %vm86, 0.0
    %vm88 = vcmask 517120
    %89 = vst.msk [vmem:[#allocation3 + $0x8] sm:$0x3] %vm88, 0.0
    %90 = vst.msk [vmem:[#allocation3 + $0xa0] sm:$0xff] %vm86, 0.0
    %91 = vst.msk [vmem:[#allocation3 + $0xa8] sm:$0x3] %vm88, 0.0
    %s92 = scalar_lea.vmem [#allocation3], 144
    %93 = vst.msk [vmem:[%s92] sm:$0xff] %vm86, 0.0
    %94 = vst.msk [vmem:[%s92 + $0x8] sm:$0x3] %vm88, 0.0
    %95 = vst.msk [vmem:[%s92 + $0xa0] sm:$0xff] %vm86, 0.0
    %96 = vst.msk [vmem:[%s92 + $0xa8] sm:$0x3] %vm88, 0.0
    %s97 = scalar_lea.vmem [#allocation3], 16
    %vm98 = vcmask 516096
    %99 = vst.msk [vmem:[%s97] sm:$0x1] %vm98, 0.0
    %100 = vst.msk [vmem:[%s97 + $0x10] sm:$0x1] %vm98, 0.0
    %101 = vst.msk [vmem:[%s97 + $0x20] sm:$0x1] %vm98, 0.0
    %102 = vst.msk [vmem:[%s97 + $0x30] sm:$0x1] %vm98, 0.0
    %103 = vst.msk [vmem:[%s97 + $0x40] sm:$0x1] %vm98, 0.0
    %104 = vst.msk [vmem:[%s97 + $0x50] sm:$0x1] %vm98, 0.0
    %105 = vst.msk [vmem:[%s97 + $0x60] sm:$0x1] %vm98, 0.0
    %106 = vst.msk [vmem:[%s97 + $0x70] sm:$0x1] %vm98, 0.0
    %107 = vst.msk [vmem:[%s97 + $0xa0] sm:$0x1] %vm98, 0.0
    %108 = vst.msk [vmem:[%s97 + $0xb0] sm:$0x1] %vm98, 0.0
    %109 = vst.msk [vmem:[%s97 + $0xc0] sm:$0x1] %vm98, 0.0
    %110 = vst.msk [vmem:[%s97 + $0xd0] sm:$0x1] %vm98, 0.0
    %111 = vst.msk [vmem:[%s97 + $0xe0] sm:$0x1] %vm98, 0.0
    %112 = vst.msk [vmem:[%s97 + $0xf0] sm:$0x1] %vm98, 0.0
    %113 = vst.msk [vmem:[%s97 + $0x100] sm:$0x1] %vm98, 0.0
    %114 = vst.msk [vmem:[%s97 + $0x110] sm:$0x1] %vm98, 0.0
    %115 = vst.msk [vmem:[%s97 + $0x9] sm:$0x1] %vm98, 0.0
    %116 = vst.msk [vmem:[%s97 + $0x19] sm:$0x1] %vm98, 0.0
    %117 = vst.msk [vmem:[%s97 + $0x29] sm:$0x1] %vm98, 0.0
    %118 = vst.msk [vmem:[%s97 + $0x39] sm:$0x1] %vm98, 0.0
    %119 = vst.msk [vmem:[%s97 + $0x49] sm:$0x1] %vm98, 0.0
    %120 = vst.msk [vmem:[%s97 + $0x59] sm:$0x1] %vm98, 0.0
    %121 = vst.msk [vmem:[%s97 + $0x69] sm:$0x1] %vm98, 0.0
    %122 = vst.msk [vmem:[%s97 + $0x79] sm:$0x1] %vm98, 0.0
    %123 = vst.msk [vmem:[%s97 + $0xa9] sm:$0x1] %vm98, 0.0
    %124 = vst.msk [vmem:[%s97 + $0xb9] sm:$0x1] %vm98, 0.0
    %125 = vst.msk [vmem:[%s97 + $0xc9] sm:$0x1] %vm98, 0.0
    %126 = vst.msk [vmem:[%s97 + $0xd9] sm:$0x1] %vm98, 0.0
    %127 = vst.msk [vmem:[%s97 + $0xe9] sm:$0x1] %vm98, 0.0
    %128 = vst.msk [vmem:[%s97 + $0xf9] sm:$0x1] %vm98, 0.0
    %129 = vst.msk [vmem:[%s97 + $0x109] sm:$0x1] %vm98, 0.0
    %130 = vst.msk [vmem:[%s97 + $0x119] sm:$0x1] %vm98, 0.0
    %v131 = vld [vmem:[%s0] sm:$0xff]
    %v132 = vld [vmem:[%s0 + $0x8] sm:$0xff]
    %v133 = vld [vmem:[%s0 + $0x10] sm:$0xff]
    %v134 = vld [vmem:[%s0 + $0x18] sm:$0xff]
    %v135 = vld [vmem:[%s0 + $0x20] sm:$0xff]
    %v136 = vld [vmem:[%s0 + $0x28] sm:$0xff]
    %v137 = vld [vmem:[%s0 + $0x30] sm:$0xff]
    %v138 = vld [vmem:[%s0 + $0x38] sm:$0xff]
    %v139 = vld [vmem:[%s0 + $0x40] sm:$0xff]
    %v140 = vld [vmem:[%s0 + $0x48] sm:$0xff]
    %v141 = vld [vmem:[%s0 + $0x50] sm:$0xff]
    %v142 = vld [vmem:[%s0 + $0x58] sm:$0xff]
    %v143 = vld [vmem:[%s0 + $0x60] sm:$0xff]
    %v144 = vld [vmem:[%s0 + $0x68] sm:$0xff]
    %v145 = vld [vmem:[%s0 + $0x70] sm:$0xff]
    %v146 = vld [vmem:[%s0 + $0x78] sm:$0xff]
    %v147 = vld [vmem:[%s1] sm:$0xff]
    %v148 = vld [vmem:[%s1 + $0x8] sm:$0x1]
    %v149 = vld [vmem:[%s2] sm:$0x1]
    %v151 = vlaneseq
    %v152 = vshrl.u32 %v151, 7
    %v153 = vsub.s32 0, %v152
    %v154 = vrot.slane %v149, %v153
    %vm156 = vcmask 72704
    %v158 = vsel %vm156, %v131, 0
    %v161 = vsel %vm156, %v132, 0
    %v164 = vsel %vm156, %v133, 0
    %v167 = vsel %vm156, %v134, 0
    %v170 = vsel %vm156, %v135, 0
    %v173 = vsel %vm156, %v136, 0
    %v176 = vsel %vm156, %v137, 0
    %v179 = vsel %vm156, %v138, 0
    %v182 = vsel %vm156, %v139, 0
    %v185 = vsel %vm156, %v140, 0
    %v188 = vsel %vm156, %v141, 0
    %v191 = vsel %vm156, %v142, 0
    %v194 = vsel %vm156, %v143, 0
    %v197 = vsel %vm156, %v144, 0
    %v200 = vsel %vm156, %v145, 0
    %v203 = vsel %vm156, %v146, 0
    %vm205 = vcmask 1040384
    %v207 = vsel %vm205, %v148, 0
    %209 = vmatprep.subr.mxu0 0.0
    %210 = vmatpush1.msra.mxu0 %v147
    %211 = vmatprep.subr.mxu0 0.0
    %212 = vmatpush1.msra.mxu0 %v207
    %213 = vmatprep.subr.mxu0 0.0
    %214 = vmatpush1.msra.mxu0 0.0
    %215 = vmatprep.subr.mxu0 0.0
    %216 = vmatpush1.msra.mxu0 0.0
    %217 = vmatprep.subr.mxu0 0.0
    %218 = vmatpush1.msra.mxu0 0.0
    %219 = vmatprep.subr.mxu0 0.0
    %220 = vmatpush1.msra.mxu0 0.0
    %221 = vmatprep.subr.mxu0 0.0
    %222 = vmatpush1.msra.mxu0 0.0
    %223 = vmatprep.subr.mxu0 0.0
    %224 = vmatpush1.msra.mxu0 0.0
    %225 = vmatprep.subr.mxu0 0.0
    %226 = vmatpush1.msra.mxu0 0.0
    %227 = vmatprep.subr.mxu0 0.0
    %228 = vmatpush1.msra.mxu0 0.0
    %229 = vmatprep.subr.mxu0 0.0
    %230 = vmatpush1.msra.mxu0 0.0
    %231 = vmatprep.subr.mxu0 0.0
    %232 = vmatpush1.msra.mxu0 0.0
    %233 = vmatprep.subr.mxu0 0.0
    %234 = vmatpush1.msra.mxu0 0.0
    %235 = vmatprep.subr.mxu0 0.0
    %236 = vmatpush1.msra.mxu0 0.0
    %237 = vmatprep.subr.mxu0 0.0
    %238 = vmatpush1.msra.mxu0 0.0
    %239 = vmatprep.subr.mxu0 0.0
    %240 = vmatpush1.msra.mxu0 0.0
    %241 = vmatprep.subr.mxu0 0.0
    %242 = vmatpush1.msra.mxu0 0.0
    %243 = vmatprep.subr.mxu0 0.0
    %244 = vmatpush1.msra.mxu0 0.0
    %245 = vmatprep.subr.mxu0 0.0
    %246 = vmatpush1.msra.mxu0 0.0
    %247 = vmatprep.subr.mxu0 0.0
    %248 = vmatpush1.msra.mxu0 0.0
    %249 = vmatprep.subr.mxu0 0.0
    %250 = vmatpush1.msra.mxu0 0.0
    %251 = vmatprep.subr.mxu0 0.0
    %252 = vmatpush1.msra.mxu0 0.0
    %253 = vmatprep.subr.mxu0 0.0
    %254 = vmatpush1.msra.mxu0 0.0
    %255 = vmatprep.subr.mxu0 0.0
    %256 = vmatpush1.msra.mxu0 0.0
    %257 = vmatprep.subr.mxu0 0.0
    %258 = vmatpush1.msra.mxu0 0.0
    %259 = vmatprep.subr.mxu0 0.0
    %260 = vmatpush1.msra.mxu0 0.0
    %261 = vmatprep.subr.mxu0 0.0
    %262 = vmatpush1.msra.mxu0 0.0
    %263 = vmatprep.subr.mxu0 0.0
    %264 = vmatpush1.msra.mxu0 0.0
    %265 = vmatprep.subr.mxu0 0.0
    %266 = vmatpush1.msra.mxu0 0.0
    %267 = vmatprep.subr.mxu0 0.0
    %268 = vmatpush1.msra.mxu0 0.0
    %269 = vmatprep.subr.mxu0 0.0
    %270 = vmatpush1.msra.mxu0 0.0
    %271 = vmatprep.subr.mxu0 0.0
    %272 = vmatpush1.msra.mxu0 0.0
    %273 = vmatprep.mubr.f32.mxu0 0.0
    %274 = vmatmul.mubr.f32.gmra.mrb[0].mxu0 %v158
    %v275 = vpop.f32.mrb[0].mxu0
    %v276 = vadd.f32 %v154, %v275
    %v277 = vpop.f32.mrb[0].mxu0
    %278 = vmatprep.mubr.f32.mxu0 0.0
    %279 = vmatmul.mubr.f32.gmra.mrb[0].mxu0 %v161
    %v280 = vpop.f32.mrb[0].mxu0
    %v281 = vadd.f32 %v154, %v280
    %v282 = vpop.f32.mrb[0].mxu0
    %283 = vmatprep.mubr.f32.mxu0 0.0
    %284 = vmatmul.mubr.f32.gmra.mrb[0].mxu0 %v164
    %v285 = vpop.f32.mrb[0].mxu0
    %v286 = vadd.f32 %v154, %v285
    %v287 = vpop.f32.mrb[0].mxu0
    %288 = vmatprep.mubr.f32.mxu0 0.0
    %289 = vmatmul.mubr.f32.gmra.mrb[0].mxu0 %v167
    %v290 = vpop.f32.mrb[0].mxu0
    %v291 = vadd.f32 %v154, %v290
    %v292 = vpop.f32.mrb[0].mxu0
    %293 = vmatprep.mubr.f32.mxu0 0.0
    %294 = vmatmul.mubr.f32.gmra.mrb[0].mxu0 %v170
    %v295 = vpop.f32.mrb[0].mxu0
    %v296 = vadd.f32 %v154, %v295
    %v297 = vpop.f32.mrb[0].mxu0
    %298 = vmatprep.mubr.f32.mxu0 0.0
    %299 = vmatmul.mubr.f32.gmra.mrb[0].mxu0 %v173
    %v300 = vpop.f32.mrb[0].mxu0
    %v301 = vadd.f32 %v154, %v300
    %v302 = vpop.f32.mrb[0].mxu0
    %303 = vmatprep.mubr.f32.mxu0 0.0
    %304 = vmatmul.mubr.f32.gmra.mrb[0].mxu0 %v176
    %v305 = vpop.f32.mrb[0].mxu0
    %v306 = vadd.f32 %v154, %v305
    %v307 = vpop.f32.mrb[0].mxu0
    %308 = vmatprep.mubr.f32.mxu0 0.0
    %309 = vmatmul.mubr.f32.gmra.mrb[0].mxu0 %v179
    %v310 = vpop.f32.mrb[0].mxu0
    %v311 = vadd.f32 %v154, %v310
    %v312 = vpop.f32.mrb[0].mxu0
    %313 = vmatprep.mubr.f32.mxu0 0.0
    %314 = vmatmul.mubr.f32.gmra.mrb[0].mxu0 %v182
    %v315 = vpop.f32.mrb[0].mxu0
    %v316 = vadd.f32 %v154, %v315
    %v317 = vpop.f32.mrb[0].mxu0
    %318 = vmatprep.mubr.f32.mxu0 0.0
    %319 = vmatmul.mubr.f32.gmra.mrb[0].mxu0 %v185
    %v320 = vpop.f32.mrb[0].mxu0
    %v321 = vadd.f32 %v154, %v320
    %v322 = vpop.f32.mrb[0].mxu0
    %323 = vmatprep.mubr.f32.mxu0 0.0
    %324 = vmatmul.mubr.f32.gmra.mrb[0].mxu0 %v188
    %v325 = vpop.f32.mrb[0].mxu0
    %v326 = vadd.f32 %v154, %v325
    %v327 = vpop.f32.mrb[0].mxu0
    %328 = vmatprep.mubr.f32.mxu0 0.0
    %329 = vmatmul.mubr.f32.gmra.mrb[0].mxu0 %v191
    %v330 = vpop.f32.mrb[0].mxu0
    %v331 = vadd.f32 %v154, %v330
    %v332 = vpop.f32.mrb[0].mxu0
    %333 = vmatprep.mubr.f32.mxu0 0.0
    %334 = vmatmul.mubr.f32.gmra.mrb[0].mxu0 %v194
    %v335 = vpop.f32.mrb[0].mxu0
    %v336 = vadd.f32 %v154, %v335
    %v337 = vpop.f32.mrb[0].mxu0
    %338 = vmatprep.mubr.f32.mxu0 0.0
    %339 = vmatmul.mubr.f32.gmra.mrb[0].mxu0 %v197
    %v340 = vpop.f32.mrb[0].mxu0
    %v341 = vadd.f32 %v154, %v340
    %v342 = vpop.f32.mrb[0].mxu0
    %343 = vmatprep.mubr.f32.mxu0 0.0
    %344 = vmatmul.mubr.f32.gmra.mrb[0].mxu0 %v200
    %v345 = vpop.f32.mrb[0].mxu0
    %v346 = vadd.f32 %v154, %v345
    %v347 = vpop.f32.mrb[0].mxu0
    %348 = vmatprep.mubr.f32.mxu0 0.0
    %349 = vmatmul.mubr.f32.gmra.mrb[0].mxu0 %v203
    %v350 = vpop.f32.mrb[0].mxu0
    %v351 = vadd.f32 %v154, %v350
    %v352 = vpop.f32.mrb[0].mxu0
    %353 = vdwg.mxu0
    %v354 = vmax.f32 %v276, 0.0
    %v355 = vmax.f32 %v281, 0.0
    %v356 = vmax.f32 %v286, 0.0
    %v357 = vmax.f32 %v291, 0.0
    %v358 = vmax.f32 %v296, 0.0
    %v359 = vmax.f32 %v301, 0.0
    %v360 = vmax.f32 %v306, 0.0
    %v361 = vmax.f32 %v311, 0.0
    %v362 = vmax.f32 %v316, 0.0
    %v363 = vmax.f32 %v321, 0.0
    %v364 = vmax.f32 %v326, 0.0
    %v365 = vmax.f32 %v331, 0.0
    %v366 = vmax.f32 %v336, 0.0
    %v367 = vmax.f32 %v341, 0.0
    %v368 = vmax.f32 %v346, 0.0
    %v369 = vmax.f32 %v351, 0.0
    %370 = vst.msk [vmem:[%s52 + $0x1] sm:$0xff] %vm41, %v354
    %371 = vst.msk [vmem:[%s52 + $0x11] sm:$0xff] %vm41, %v355
    %372 = vst.msk [vmem:[%s52 + $0x21] sm:$0xff] %vm41, %v356
    %373 = vst.msk [vmem:[%s52 + $0x31] sm:$0xff] %vm41, %v357
    %374 = vst.msk [vmem:[%s52 + $0x41] sm:$0xff] %vm41, %v358
    %375 = vst.msk [vmem:[%s52 + $0x51] sm:$0xff] %vm41, %v359
    %376 = vst.msk [vmem:[%s52 + $0x61] sm:$0xff] %vm41, %v360
    %377 = vst.msk [vmem:[%s52 + $0x71] sm:$0xff] %vm41, %v361
    %378 = vst.msk [vmem:[%s52 + $0xa1] sm:$0xff] %vm41, %v362
    %379 = vst.msk [vmem:[%s52 + $0xb1] sm:$0xff] %vm41, %v363
    %380 = vst.msk [vmem:[%s52 + $0xc1] sm:$0xff] %vm41, %v364
    %381 = vst.msk [vmem:[%s52 + $0xd1] sm:$0xff] %vm41, %v365
    %382 = vst.msk [vmem:[%s52 + $0xe1] sm:$0xff] %vm41, %v366
    %383 = vst.msk [vmem:[%s52 + $0xf1] sm:$0xff] %vm41, %v367
    %384 = vst.msk [vmem:[%s52 + $0x101] sm:$0xff] %vm41, %v368
    %385 = vst.msk [vmem:[%s52 + $0x111] sm:$0xff] %vm41, %v369
    %v386 = vld [vmem:[#allocation2] sm:$0xff]
    %v387 = vld [vmem:[#allocation2 + $0x10] sm:$0xff]
    %v388 = vld [vmem:[#allocation2 + $0x20] sm:$0xff]
    %v389 = vld [vmem:[#allocation2 + $0x30] sm:$0xff]
    %v390 = vld [vmem:[#allocation2 + $0x40] sm:$0xff]
    %v391 = vld [vmem:[#allocation2 + $0x50] sm:$0xff]
    %v392 = vld [vmem:[#allocation2 + $0x60] sm:$0xff]
    %v393 = vld [vmem:[#allocation2 + $0x70] sm:$0xff]
    %v394 = vld [vmem:[#allocation2 + $0xa0] sm:$0xff]
    %v395 = vld [vmem:[#allocation2 + $0xb0] sm:$0xff]
    %v396 = vld [vmem:[#allocation2 + $0xc0] sm:$0xff]
    %v397 = vld [vmem:[#allocation2 + $0xd0] sm:$0xff]
    %v398 = vld [vmem:[#allocation2 + $0xe0] sm:$0xff]
    %v399 = vld [vmem:[#allocation2 + $0xf0] sm:$0xff]
    %v400 = vld [vmem:[#allocation2 + $0x100] sm:$0xff]
    %v401 = vld [vmem:[#allocation2 + $0x110] sm:$0xff]
    %v402 = vld [vmem:[#allocation4] sm:$0xff]
    %v403 = vld [vmem:[#allocation4 + $0x8] sm:$0xff]
    %v404 = vld [vmem:[#allocation4 + $0x10] sm:$0xff]
    %v405 = vld [vmem:[#allocation4 + $0x18] sm:$0xff]
    %v406 = vld [vmem:[#allocation2 + $0x1] sm:$0xff]
    %v407 = vld [vmem:[#allocation2 + $0x11] sm:$0xff]
    %v408 = vld [vmem:[#allocation2 + $0x21] sm:$0xff]
    %v409 = vld [vmem:[#allocation2 + $0x31] sm:$0xff]
    %v410 = vld [vmem:[#allocation2 + $0x41] sm:$0xff]
    %v411 = vld [vmem:[#allocation2 + $0x51] sm:$0xff]
    %v412 = vld [vmem:[#allocation2 + $0x61] sm:$0xff]
    %v413 = vld [vmem:[#allocation2 + $0x71] sm:$0xff]
    %v414 = vld [vmem:[#allocation2 + $0xa1] sm:$0xff]
    %v415 = vld [vmem:[#allocation2 + $0xb1] sm:$0xff]
    %v416 = vld [vmem:[#allocation2 + $0xc1] sm:$0xff]
    %v417 = vld [vmem:[#allocation2 + $0xd1] sm:$0xff]
    %v418 = vld [vmem:[#allocation2 + $0xe1] sm:$0xff]
    %v419 = vld [vmem:[#allocation2 + $0xf1] sm:$0xff]
    %v420 = vld [vmem:[#allocation2 + $0x101] sm:$0xff]
    %v421 = vld [vmem:[#allocation2 + $0x111] sm:$0xff]
    %v422 = vld [vmem:[#allocation4 + $0x20] sm:$0xff]
    %v423 = vld [vmem:[#allocation4 + $0x28] sm:$0xff]
    %v424 = vld [vmem:[#allocation4 + $0x30] sm:$0xff]
    %v425 = vld [vmem:[#allocation4 + $0x38] sm:$0xff]
    %v427 = vsel %vm41, %v406, 0
    %v430 = vsel %vm41, %v407, 0
    %v433 = vsel %vm41, %v408, 0
    %v436 = vsel %vm41, %v409, 0
    %v439 = vsel %vm41, %v410, 0
    %v442 = vsel %vm41, %v411, 0
    %v445 = vsel %vm41, %v412, 0
    %v448 = vsel %vm41, %v413, 0
    %v451 = vsel %vm41, %v414, 0
    %v454 = vsel %vm41, %v415, 0
    %v457 = vsel %vm41, %v416, 0
    %v460 = vsel %vm41, %v417, 0
    %v463 = vsel %vm41, %v418, 0
    %v466 = vsel %vm41, %v419, 0
    %v469 = vsel %vm41, %v420, 0
    %v472 = vsel %vm41, %v421, 0
    %474 = vmatprep.subr.mxu0 0.0
    %475 = vmatpush1.msra.mxu0 %v422
    %476 = vmatprep.subr.mxu0 0.0
    %477 = vmatpush1.msra.mxu0 %v423
    %478 = vmatprep.subr.mxu0 0.0
    %479 = vmatpush1.msra.mxu0 %v424
    %480 = vmatprep.subr.mxu0 0.0
    %481 = vmatpush1.msra.mxu0 %v425
    %482 = vmatprep.subr.mxu0 0.0
    %483 = vmatpush1.msra.mxu0 0.0
    %484 = vmatprep.subr.mxu0 0.0
    %485 = vmatpush1.msra.mxu0 0.0
    %486 = vmatprep.subr.mxu0 0.0
    %487 = vmatpush1.msra.mxu0 0.0
    %488 = vmatprep.subr.mxu0 0.0
    %489 = vmatpush1.msra.mxu0 0.0
    %490 = vmatprep.subr.mxu0 0.0
    %491 = vmatpush1.msra.mxu0 0.0
    %492 = vmatprep.subr.mxu0 0.0
    %493 = vmatpush1.msra.mxu0 0.0
    %494 = vmatprep.subr.mxu0 0.0
    %495 = vmatpush1.msra.mxu0 0.0
    %496 = vmatprep.subr.mxu0 0.0
    %497 = vmatpush1.msra.mxu0 0.0
    %498 = vmatprep.subr.mxu0 0.0
    %499 = vmatpush1.msra.mxu0 0.0
    %500 = vmatprep.subr.mxu0 0.0
    %501 = vmatpush1.msra.mxu0 0.0
    %502 = vmatprep.subr.mxu0 0.0
    %503 = vmatpush1.msra.mxu0 0.0
    %504 = vmatprep.subr.mxu0 0.0
    %505 = vmatpush1.msra.mxu0 0.0
    %506 = vmatprep.subr.mxu0 0.0
    %507 = vmatpush1.msra.mxu0 0.0
    %508 = vmatprep.subr.mxu0 0.0
    %509 = vmatpush1.msra.mxu0 0.0
    %510 = vmatprep.subr.mxu0 0.0
    %511 = vmatpush1.msra.mxu0 0.0
    %512 = vmatprep.subr.mxu0 0.0
    %513 = vmatpush1.msra.mxu0 0.0
    %514 = vmatprep.subr.mxu0 0.0
    %515 = vmatpush1.msra.mxu0 0.0
    %516 = vmatprep.subr.mxu0 0.0
    %517 = vmatpush1.msra.mxu0 0.0
    %518 = vmatprep.subr.mxu0 0.0
    %519 = vmatpush1.msra.mxu0 0.0
    %520 = vmatprep.subr.mxu0 0.0
    %521 = vmatpush1.msra.mxu0 0.0
    %522 = vmatprep.subr.mxu0 0.0
    %523 = vmatpush1.msra.mxu0 0.0
    %524 = vmatprep.subr.mxu0 0.0
    %525 = vmatpush1.msra.mxu0 0.0
    %526 = vmatprep.subr.mxu0 0.0
    %527 = vmatpush1.msra.mxu0 0.0
    %528 = vmatprep.subr.mxu0 0.0
    %529 = vmatpush1.msra.mxu0 0.0
    %530 = vmatprep.subr.mxu0 0.0
    %531 = vmatpush1.msra.mxu0 0.0
    %532 = vmatprep.subr.mxu0 0.0
    %533 = vmatpush1.msra.mxu0 0.0
    %534 = vmatprep.subr.mxu0 0.0
    %535 = vmatpush1.msra.mxu0 0.0
    %536 = vmatprep.subr.mxu0 0.0
    %537 = vmatpush1.msra.mxu0 0.0
    %538 = vmatprep.mubr.f32.mxu0 0.0
    %539 = vmatmul.mubr.f32.gmra.mrb[0].mxu0 %v427
    %v540 = vpop.f32.mrb[0].mxu0
    %v541 = vadd.f32 0.0, %v540
    %v542 = vpop.f32.mrb[0].mxu0
    %543 = vmatprep.mubr.f32.mxu0 0.0
    %544 = vmatmul.mubr.f32.gmra.mrb[0].mxu0 %v430
    %v545 = vpop.f32.mrb[0].mxu0
    %v546 = vadd.f32 0.0, %v545
    %v547 = vpop.f32.mrb[0].mxu0
    %548 = vmatprep.mubr.f32.mxu0 0.0
    %549 = vmatmul.mubr.f32.gmra.mrb[0].mxu0 %v433
    %v550 = vpop.f32.mrb[0].mxu0
    %v551 = vadd.f32 0.0, %v550
    %v552 = vpop.f32.mrb[0].mxu0
    %553 = vmatprep.mubr.f32.mxu0 0.0
    %554 = vmatmul.mubr.f32.gmra.mrb[0].mxu0 %v436
    %v555 = vpop.f32.mrb[0].mxu0
    %v556 = vadd.f32 0.0, %v555
    %v557 = vpop.f32.mrb[0].mxu0
    %558 = vmatprep.mubr.f32.mxu0 0.0
    %559 = vmatmul.mubr.f32.gmra.mrb[0].mxu0 %v439
    %v560 = vpop.f32.mrb[0].mxu0
    %v561 = vadd.f32 0.0, %v560
    %v562 = vpop.f32.mrb[0].mxu0
    %563 = vmatprep.mubr.f32.mxu0 0.0
    %564 = vmatmul.mubr.f32.gmra.mrb[0].mxu0 %v442
    %v565 = vpop.f32.mrb[0].mxu0
    %v566 = vadd.f32 0.0, %v565
    %v567 = vpop.f32.mrb[0].mxu0
    %568 = vmatprep.mubr.f32.mxu0 0.0
    %569 = vmatmul.mubr.f32.gmra.mrb[0].mxu0 %v445
    %v570 = vpop.f32.mrb[0].mxu0
    %v571 = vadd.f32 0.0, %v570
    %v572 = vpop.f32.mrb[0].mxu0
    %573 = vmatprep.mubr.f32.mxu0 0.0
    %574 = vmatmul.mubr.f32.gmra.mrb[0].mxu0 %v448
    %v575 = vpop.f32.mrb[0].mxu0
    %v576 = vadd.f32 0.0, %v575
    %v577 = vpop.f32.mrb[0].mxu0
    %578 = vmatprep.mubr.f32.mxu0 0.0
    %579 = vmatmul.mubr.f32.gmra.mrb[0].mxu0 %v451
    %v580 = vpop.f32.mrb[0].mxu0
    %v581 = vadd.f32 0.0, %v580
    %v582 = vpop.f32.mrb[0].mxu0
    %583 = vmatprep.mubr.f32.mxu0 0.0
    %584 = vmatmul.mubr.f32.gmra.mrb[0].mxu0 %v454
    %v585 = vpop.f32.mrb[0].mxu0
    %v586 = vadd.f32 0.0, %v585
    %v587 = vpop.f32.mrb[0].mxu0
    %588 = vmatprep.mubr.f32.mxu0 0.0
    %589 = vmatmul.mubr.f32.gmra.mrb[0].mxu0 %v457
    %v590 = vpop.f32.mrb[0].mxu0
    %v591 = vadd.f32 0.0, %v590
    %v592 = vpop.f32.mrb[0].mxu0
    %593 = vmatprep.mubr.f32.mxu0 0.0
    %594 = vmatmul.mubr.f32.gmra.mrb[0].mxu0 %v460
    %v595 = vpop.f32.mrb[0].mxu0
    %v596 = vadd.f32 0.0, %v595
    %v597 = vpop.f32.mrb[0].mxu0
    %598 = vmatprep.mubr.f32.mxu0 0.0
    %599 = vmatmul.mubr.f32.gmra.mrb[0].mxu0 %v463
    %v600 = vpop.f32.mrb[0].mxu0
    %v601 = vadd.f32 0.0, %v600
    %v602 = vpop.f32.mrb[0].mxu0
    %603 = vmatprep.mubr.f32.mxu0 0.0
    %604 = vmatmul.mubr.f32.gmra.mrb[0].mxu0 %v466
    %v605 = vpop.f32.mrb[0].mxu0
    %v606 = vadd.f32 0.0, %v605
    %v607 = vpop.f32.mrb[0].mxu0
    %608 = vmatprep.mubr.f32.mxu0 0.0
    %609 = vmatmul.mubr.f32.gmra.mrb[0].mxu0 %v469
    %v610 = vpop.f32.mrb[0].mxu0
    %v611 = vadd.f32 0.0, %v610
    %v612 = vpop.f32.mrb[0].mxu0
    %613 = vmatprep.mubr.f32.mxu0 0.0
    %614 = vmatmul.mubr.f32.gmra.mrb[0].mxu0 %v472
    %v615 = vpop.f32.mrb[0].mxu0
    %v616 = vadd.f32 0.0, %v615
    %v617 = vpop.f32.mrb[0].mxu0
    %618 = vdwg.mxu0
    %v620 = vsel %vm41, %v386, 0
    %v623 = vsel %vm41, %v387, 0
    %v626 = vsel %vm41, %v388, 0
    %v629 = vsel %vm41, %v389, 0
    %v632 = vsel %vm41, %v390, 0
    %v635 = vsel %vm41, %v391, 0
    %v638 = vsel %vm41, %v392, 0
    %v641 = vsel %vm41, %v393, 0
    %v644 = vsel %vm41, %v394, 0
    %v647 = vsel %vm41, %v395, 0
    %v650 = vsel %vm41, %v396, 0
    %v653 = vsel %vm41, %v397, 0
    %v656 = vsel %vm41, %v398, 0
    %v659 = vsel %vm41, %v399, 0
    %v662 = vsel %vm41, %v400, 0
    %v665 = vsel %vm41, %v401, 0
    %667 = vmatprep.subr.mxu0 0.0
    %668 = vmatpush1.msra.mxu0 %v402
    %669 = vmatprep.subr.mxu0 0.0
    %670 = vmatpush1.msra.mxu0 %v403
    %671 = vmatprep.subr.mxu0 0.0
    %672 = vmatpush1.msra.mxu0 %v404
    %673 = vmatprep.subr.mxu0 0.0
    %674 = vmatpush1.msra.mxu0 %v405
    %675 = vmatprep.subr.mxu0 0.0
    %676 = vmatpush1.msra.mxu0 0.0
    %677 = vmatprep.subr.mxu0 0.0
    %678 = vmatpush1.msra.mxu0 0.0
    %679 = vmatprep.subr.mxu0 0.0
    %680 = vmatpush1.msra.mxu0 0.0
    %681 = vmatprep.subr.mxu0 0.0
    %682 = vmatpush1.msra.mxu0 0.0
    %683 = vmatprep.subr.mxu0 0.0
    %684 = vmatpush1.msra.mxu0 0.0
    %685 = vmatprep.subr.mxu0 0.0
    %686 = vmatpush1.msra.mxu0 0.0
    %687 = vmatprep.subr.mxu0 0.0
    %688 = vmatpush1.msra.mxu0 0.0
    %689 = vmatprep.subr.mxu0 0.0
    %690 = vmatpush1.msra.mxu0 0.0
    %691 = vmatprep.subr.mxu0 0.0
    %692 = vmatpush1.msra.mxu0 0.0
    %693 = vmatprep.subr.mxu0 0.0
    %694 = vmatpush1.msra.mxu0 0.0
    %695 = vmatprep.subr.mxu0 0.0
    %696 = vmatpush1.msra.mxu0 0.0
    %697 = vmatprep.subr.mxu0 0.0
    %698 = vmatpush1.msra.mxu0 0.0
    %699 = vmatprep.subr.mxu0 0.0
    %700 = vmatpush1.msra.mxu0 0.0
    %701 = vmatprep.subr.mxu0 0.0
    %702 = vmatpush1.msra.mxu0 0.0
    %703 = vmatprep.subr.mxu0 0.0
    %704 = vmatpush1.msra.mxu0 0.0
    %705 = vmatprep.subr.mxu0 0.0
    %706 = vmatpush1.msra.mxu0 0.0
    %707 = vmatprep.subr.mxu0 0.0
    %708 = vmatpush1.msra.mxu0 0.0
    %709 = vmatprep.subr.mxu0 0.0
    %710 = vmatpush1.msra.mxu0 0.0
    %711 = vmatprep.subr.mxu0 0.0
    %712 = vmatpush1.msra.mxu0 0.0
    %713 = vmatprep.subr.mxu0 0.0
    %714 = vmatpush1.msra.mxu0 0.0
    %715 = vmatprep.subr.mxu0 0.0
    %716 = vmatpush1.msra.mxu0 0.0
    %717 = vmatprep.subr.mxu0 0.0
    %718 = vmatpush1.msra.mxu0 0.0
    %719 = vmatprep.subr.mxu0 0.0
    %720 = vmatpush1.msra.mxu0 0.0
    %721 = vmatprep.subr.mxu0 0.0
    %722 = vmatpush1.msra.mxu0 0.0
    %723 = vmatprep.subr.mxu0 0.0
    %724 = vmatpush1.msra.mxu0 0.0
    %725 = vmatprep.subr.mxu0 0.0
    %726 = vmatpush1.msra.mxu0 0.0
    %727 = vmatprep.subr.mxu0 0.0
    %728 = vmatpush1.msra.mxu0 0.0
    %729 = vmatprep.subr.mxu0 0.0
    %730 = vmatpush1.msra.mxu0 0.0
    %731 = vmatprep.mubr.f32.mxu0 0.0
    %732 = vmatmul.mubr.f32.gmra.mrb[0].mxu0 %v620
    %v733 = vpop.f32.mrb[0].mxu0
    %v734 = vadd.f32 %v541, %v733
    %v735 = vpop.f32.mrb[0].mxu0
    %736 = vmatprep.mubr.f32.mxu0 0.0
    %737 = vmatmul.mubr.f32.gmra.mrb[0].mxu0 %v623
    %v738 = vpop.f32.mrb[0].mxu0
    %v739 = vadd.f32 %v546, %v738
    %v740 = vpop.f32.mrb[0].mxu0
    %741 = vmatprep.mubr.f32.mxu0 0.0
    %742 = vmatmul.mubr.f32.gmra.mrb[0].mxu0 %v626
    %v743 = vpop.f32.mrb[0].mxu0
    %v744 = vadd.f32 %v551, %v743
    %v745 = vpop.f32.mrb[0].mxu0
    %746 = vmatprep.mubr.f32.mxu0 0.0
    %747 = vmatmul.mubr.f32.gmra.mrb[0].mxu0 %v629
    %v748 = vpop.f32.mrb[0].mxu0
    %v749 = vadd.f32 %v556, %v748
    %v750 = vpop.f32.mrb[0].mxu0
    %751 = vmatprep.mubr.f32.mxu0 0.0
    %752 = vmatmul.mubr.f32.gmra.mrb[0].mxu0 %v632
    %v753 = vpop.f32.mrb[0].mxu0
    %v754 = vadd.f32 %v561, %v753
    %v755 = vpop.f32.mrb[0].mxu0
    %756 = vmatprep.mubr.f32.mxu0 0.0
    %757 = vmatmul.mubr.f32.gmra.mrb[0].mxu0 %v635
    %v758 = vpop.f32.mrb[0].mxu0
    %v759 = vadd.f32 %v566, %v758
    %v760 = vpop.f32.mrb[0].mxu0
    %761 = vmatprep.mubr.f32.mxu0 0.0
    %762 = vmatmul.mubr.f32.gmra.mrb[0].mxu0 %v638
    %v763 = vpop.f32.mrb[0].mxu0
    %v764 = vadd.f32 %v571, %v763
    %v765 = vpop.f32.mrb[0].mxu0
    %766 = vmatprep.mubr.f32.mxu0 0.0
    %767 = vmatmul.mubr.f32.gmra.mrb[0].mxu0 %v641
    %v768 = vpop.f32.mrb[0].mxu0
    %v769 = vadd.f32 %v576, %v768
    %v770 = vpop.f32.mrb[0].mxu0
    %771 = vmatprep.mubr.f32.mxu0 0.0
    %772 = vmatmul.mubr.f32.gmra.mrb[0].mxu0 %v644
    %v773 = vpop.f32.mrb[0].mxu0
    %v774 = vadd.f32 %v581, %v773
    %v775 = vpop.f32.mrb[0].mxu0
    %776 = vmatprep.mubr.f32.mxu0 0.0
    %777 = vmatmul.mubr.f32.gmra.mrb[0].mxu0 %v647
    %v778 = vpop.f32.mrb[0].mxu0
    %v779 = vadd.f32 %v586, %v778
    %v780 = vpop.f32.mrb[0].mxu0
    %781 = vmatprep.mubr.f32.mxu0 0.0
    %782 = vmatmul.mubr.f32.gmra.mrb[0].mxu0 %v650
    %v783 = vpop.f32.mrb[0].mxu0
    %v784 = vadd.f32 %v591, %v783
    %v785 = vpop.f32.mrb[0].mxu0
    %786 = vmatprep.mubr.f32.mxu0 0.0
    %787 = vmatmul.mubr.f32.gmra.mrb[0].mxu0 %v653
    %v788 = vpop.f32.mrb[0].mxu0
    %v789 = vadd.f32 %v596, %v788
    %v790 = vpop.f32.mrb[0].mxu0
    %791 = vmatprep.mubr.f32.mxu0 0.0
    %792 = vmatmul.mubr.f32.gmra.mrb[0].mxu0 %v656
    %v793 = vpop.f32.mrb[0].mxu0
    %v794 = vadd.f32 %v601, %v793
    %v795 = vpop.f32.mrb[0].mxu0
    %796 = vmatprep.mubr.f32.mxu0 0.0
    %797 = vmatmul.mubr.f32.gmra.mrb[0].mxu0 %v659
    %v798 = vpop.f32.mrb[0].mxu0
    %v799 = vadd.f32 %v606, %v798
    %v800 = vpop.f32.mrb[0].mxu0
    %801 = vmatprep.mubr.f32.mxu0 0.0
    %802 = vmatmul.mubr.f32.gmra.mrb[0].mxu0 %v662
    %v803 = vpop.f32.mrb[0].mxu0
    %v804 = vadd.f32 %v611, %v803
    %v805 = vpop.f32.mrb[0].mxu0
    %806 = vmatprep.mubr.f32.mxu0 0.0
    %807 = vmatmul.mubr.f32.gmra.mrb[0].mxu0 %v665
    %v808 = vpop.f32.mrb[0].mxu0
    %v809 = vadd.f32 %v616, %v808
    %v810 = vpop.f32.mrb[0].mxu0
    %811 = vdwg.mxu0
    %v812 = vld [vmem:[#allocation2 + $0x2] sm:$0xff]
    %v813 = vld [vmem:[#allocation2 + $0x12] sm:$0xff]
    %v814 = vld [vmem:[#allocation2 + $0x22] sm:$0xff]
    %v815 = vld [vmem:[#allocation2 + $0x32] sm:$0xff]
    %v816 = vld [vmem:[#allocation2 + $0x42] sm:$0xff]
    %v817 = vld [vmem:[#allocation2 + $0x52] sm:$0xff]
    %v818 = vld [vmem:[#allocation2 + $0x62] sm:$0xff]
    %v819 = vld [vmem:[#allocation2 + $0x72] sm:$0xff]
    %v820 = vld [vmem:[#allocation2 + $0xa2] sm:$0xff]
    %v821 = vld [vmem:[#allocation2 + $0xb2] sm:$0xff]
    %v822 = vld [vmem:[#allocation2 + $0xc2] sm:$0xff]
    %v823 = vld [vmem:[#allocation2 + $0xd2] sm:$0xff]
    %v824 = vld [vmem:[#allocation2 + $0xe2] sm:$0xff]
    %v825 = vld [vmem:[#allocation2 + $0xf2] sm:$0xff]
    %v826 = vld [vmem:[#allocation2 + $0x102] sm:$0xff]
    %v827 = vld [vmem:[#allocation2 + $0x112] sm:$0xff]
    %v828 = vld [vmem:[#allocation4 + $0x40] sm:$0xff]
    %v829 = vld [vmem:[#allocation4 + $0x48] sm:$0xff]
    %v830 = vld [vmem:[#allocation4 + $0x50] sm:$0xff]
    %v831 = vld [vmem:[#allocation4 + $0x58] sm:$0xff]
    %v833 = vsel %vm41, %v812, 0
    %v836 = vsel %vm41, %v813, 0
    %v839 = vsel %vm41, %v814, 0
    %v842 = vsel %vm41, %v815, 0
    %v845 = vsel %vm41, %v816, 0
    %v848 = vsel %vm41, %v817, 0
    %v851 = vsel %vm41, %v818, 0
    %v854 = vsel %vm41, %v819, 0
    %v857 = vsel %vm41, %v820, 0
    %v860 = vsel %vm41, %v821, 0
    %v863 = vsel %vm41, %v822, 0
    %v866 = vsel %vm41, %v823, 0
    %v869 = vsel %vm41, %v824, 0
    %v872 = vsel %vm41, %v825, 0
    %v875 = vsel %vm41, %v826, 0
    %v878 = vsel %vm41, %v827, 0
    %880 = vmatprep.subr.mxu0 0.0
    %881 = vmatpush1.msra.mxu0 %v828
    %882 = vmatprep.subr.mxu0 0.0
    %883 = vmatpush1.msra.mxu0 %v829
    %884 = vmatprep.subr.mxu0 0.0
    %885 = vmatpush1.msra.mxu0 %v830
    %886 = vmatprep.subr.mxu0 0.0
    %887 = vmatpush1.msra.mxu0 %v831
    %888 = vmatprep.subr.mxu0 0.0
    %889 = vmatpush1.msra.mxu0 0.0
    %890 = vmatprep.subr.mxu0 0.0
    %891 = vmatpush1.msra.mxu0 0.0
    %892 = vmatprep.subr.mxu0 0.0
    %893 = vmatpush1.msra.mxu0 0.0
    %894 = vmatprep.subr.mxu0 0.0
    %895 = vmatpush1.msra.mxu0 0.0
    %896 = vmatprep.subr.mxu0 0.0
    %897 = vmatpush1.msra.mxu0 0.0
    %898 = vmatprep.subr.mxu0 0.0
    %899 = vmatpush1.msra.mxu0 0.0
    %900 = vmatprep.subr.mxu0 0.0
    %901 = vmatpush1.msra.mxu0 0.0
    %902 = vmatprep.subr.mxu0 0.0
    %903 = vmatpush1.msra.mxu0 0.0
    %904 = vmatprep.subr.mxu0 0.0
    %905 = vmatpush1.msra.mxu0 0.0
    %906 = vmatprep.subr.mxu0 0.0
    %907 = vmatpush1.msra.mxu0 0.0
    %908 = vmatprep.subr.mxu0 0.0
    %909 = vmatpush1.msra.mxu0 0.0
    %910 = vmatprep.subr.mxu0 0.0
    %911 = vmatpush1.msra.mxu0 0.0
    %912 = vmatprep.subr.mxu0 0.0
    %913 = vmatpush1.msra.mxu0 0.0
    %914 = vmatprep.subr.mxu0 0.0
    %915 = vmatpush1.msra.mxu0 0.0
    %916 = vmatprep.subr.mxu0 0.0
    %917 = vmatpush1.msra.mxu0 0.0
    %918 = vmatprep.subr.mxu0 0.0
    %919 = vmatpush1.msra.mxu0 0.0
    %920 = vmatprep.subr.mxu0 0.0
    %921 = vmatpush1.msra.mxu0 0.0
    %922 = vmatprep.subr.mxu0 0.0
    %923 = vmatpush1.msra.mxu0 0.0
    %924 = vmatprep.subr.mxu0 0.0
    %925 = vmatpush1.msra.mxu0 0.0
    %926 = vmatprep.subr.mxu0 0.0
    %927 = vmatpush1.msra.mxu0 0.0
    %928 = vmatprep.subr.mxu0 0.0
    %929 = vmatpush1.msra.mxu0 0.0
    %930 = vmatprep.subr.mxu0 0.0
    %931 = vmatpush1.msra.mxu0 0.0
    %932 = vmatprep.subr.mxu0 0.0
    %933 = vmatpush1.msra.mxu0 0.0
    %934 = vmatprep.subr.mxu0 0.0
    %935 = vmatpush1.msra.mxu0 0.0
    %936 = vmatprep.subr.mxu0 0.0
    %937 = vmatpush1.msra.mxu0 0.0
    %938 = vmatprep.subr.mxu0 0.0
    %939 = vmatpush1.msra.mxu0 0.0
    %940 = vmatprep.subr.mxu0 0.0
    %941 = vmatpush1.msra.mxu0 0.0
    %942 = vmatprep.subr.mxu0 0.0
    %943 = vmatpush1.msra.mxu0 0.0
    %944 = vmatprep.mubr.f32.mxu0 0.0
    %945 = vmatmul.mubr.f32.gmra.mrb[0].mxu0 %v833
    %v946 = vpop.f32.mrb[0].mxu0
    %v947 = vadd.f32 0.0, %v946
    %v948 = vpop.f32.mrb[0].mxu0
    %949 = vmatprep.mubr.f32.mxu0 0.0
    %950 = vmatmul.mubr.f32.gmra.mrb[0].mxu0 %v836
    %v951 = vpop.f32.mrb[0].mxu0
    %v952 = vadd.f32 0.0, %v951
    %v953 = vpop.f32.mrb[0].mxu0
    %954 = vmatprep.mubr.f32.mxu0 0.0
    %955 = vmatmul.mubr.f32.gmra.mrb[0].mxu0 %v839
    %v956 = vpop.f32.mrb[0].mxu0
    %v957 = vadd.f32 0.0, %v956
    %v958 = vpop.f32.mrb[0].mxu0
    %959 = vmatprep.mubr.f32.mxu0 0.0
    %960 = vmatmul.mubr.f32.gmra.mrb[0].mxu0 %v842
    %v961 = vpop.f32.mrb[0].mxu0
    %v962 = vadd.f32 0.0, %v961
    %v963 = vpop.f32.mrb[0].mxu0
    %964 = vmatprep.mubr.f32.mxu0 0.0
    %965 = vmatmul.mubr.f32.gmra.mrb[0].mxu0 %v845
    %v966 = vpop.f32.mrb[0].mxu0
    %v967 = vadd.f32 0.0, %v966
    %v968 = vpop.f32.mrb[0].mxu0
    %969 = vmatprep.mubr.f32.mxu0 0.0
    %970 = vmatmul.mubr.f32.gmra.mrb[0].mxu0 %v848
    %v971 = vpop.f32.mrb[0].mxu0
    %v972 = vadd.f32 0.0, %v971
    %v973 = vpop.f32.mrb[0].mxu0
    %974 = vmatprep.mubr.f32.mxu0 0.0
    %975 = vmatmul.mubr.f32.gmra.mrb[0].mxu0 %v851
    %v976 = vpop.f32.mrb[0].mxu0
    %v977 = vadd.f32 0.0, %v976
    %v978 = vpop.f32.mrb[0].mxu0
    %979 = vmatprep.mubr.f32.mxu0 0.0
    %980 = vmatmul.mubr.f32.gmra.mrb[0].mxu0 %v854
    %v981 = vpop.f32.mrb[0].mxu0
    %v982 = vadd.f32 0.0, %v981
    %v983 = vpop.f32.mrb[0].mxu0
    %984 = vmatprep.mubr.f32.mxu0 0.0
    %985 = vmatmul.mubr.f32.gmra.mrb[0].mxu0 %v857
    %v986 = vpop.f32.mrb[0].mxu0
    %v987 = vadd.f32 0.0, %v986
    %v988 = vpop.f32.mrb[0].mxu0
    %989 = vmatprep.mubr.f32.mxu0 0.0
    %990 = vmatmul.mubr.f32.gmra.mrb[0].mxu0 %v860
    %v991 = vpop.f32.mrb[0].mxu0
    %v992 = vadd.f32 0.0, %v991
    %v993 = vpop.f32.mrb[0].mxu0
    %994 = vmatprep.mubr.f32.mxu0 0.0
    %995 = vmatmul.mubr.f32.gmra.mrb[0].mxu0 %v863
    %v996 = vpop.f32.mrb[0].mxu0
    %v997 = vadd.f32 0.0, %v996
    %v998 = vpop.f32.mrb[0].mxu0
    %999 = vmatprep.mubr.f32.mxu0 0.0
    %1000 = vmatmul.mubr.f32.gmra.mrb[0].mxu0 %v866
    %v1001 = vpop.f32.mrb[0].mxu0
    %v1002 = vadd.f32 0.0, %v1001
    %v1003 = vpop.f32.mrb[0].mxu0
    %1004 = vmatprep.mubr.f32.mxu0 0.0
    %1005 = vmatmul.mubr.f32.gmra.mrb[0].mxu0 %v869
    %v1006 = vpop.f32.mrb[0].mxu0
    %v1007 = vadd.f32 0.0, %v1006
    %v1008 = vpop.f32.mrb[0].mxu0
    %1009 = vmatprep.mubr.f32.mxu0 0.0
    %1010 = vmatmul.mubr.f32.gmra.mrb[0].mxu0 %v872
    %v1011 = vpop.f32.mrb[0].mxu0
    %v1012 = vadd.f32 0.0, %v1011
    %v1013 = vpop.f32.mrb[0].mxu0
    %1014 = vmatprep.mubr.f32.mxu0 0.0
    %1015 = vmatmul.mubr.f32.gmra.mrb[0].mxu0 %v875
    %v1016 = vpop.f32.mrb[0].mxu0
    %v1017 = vadd.f32 0.0, %v1016
    %v1018 = vpop.f32.mrb[0].mxu0
    %1019 = vmatprep.mubr.f32.mxu0 0.0
    %1020 = vmatmul.mubr.f32.gmra.mrb[0].mxu0 %v878
    %v1021 = vpop.f32.mrb[0].mxu0
    %v1022 = vadd.f32 0.0, %v1021
    %v1023 = vpop.f32.mrb[0].mxu0
    %1024 = vdwg.mxu0
    %v1025 = vadd.f32 %v734, %v947
    %v1026 = vadd.f32 %v739, %v952
    %v1027 = vadd.f32 %v744, %v957
    %v1028 = vadd.f32 %v749, %v962
    %v1029 = vadd.f32 %v754, %v967
    %v1030 = vadd.f32 %v759, %v972
    %v1031 = vadd.f32 %v764, %v977
    %v1032 = vadd.f32 %v769, %v982
    %v1033 = vadd.f32 %v774, %v987
    %v1034 = vadd.f32 %v779, %v992
    %v1035 = vadd.f32 %v784, %v997
    %v1036 = vadd.f32 %v789, %v1002
    %v1037 = vadd.f32 %v794, %v1007
    %v1038 = vadd.f32 %v799, %v1012
    %v1039 = vadd.f32 %v804, %v1017
    %v1040 = vadd.f32 %v809, %v1022
    %v1041 = vld [vmem:[%s52] sm:$0xff]
    %v1042 = vld [vmem:[%s52 + $0x10] sm:$0xff]
    %v1043 = vld [vmem:[%s52 + $0x20] sm:$0xff]
    %v1044 = vld [vmem:[%s52 + $0x30] sm:$0xff]
    %v1045 = vld [vmem:[%s52 + $0x40] sm:$0xff]
    %v1046 = vld [vmem:[%s52 + $0x50] sm:$0xff]
    %v1047 = vld [vmem:[%s52 + $0x60] sm:$0xff]
    %v1048 = vld [vmem:[%s52 + $0x70] sm:$0xff]
    %v1049 = vld [vmem:[%s52 + $0xa0] sm:$0xff]
    %v1050 = vld [vmem:[%s52 + $0xb0] sm:$0xff]
    %v1051 = vld [vmem:[%s52 + $0xc0] sm:$0xff]
    %v1052 = vld [vmem:[%s52 + $0xd0] sm:$0xff]
    %v1053 = vld [vmem:[%s52 + $0xe0] sm:$0xff]
    %v1054 = vld [vmem:[%s52 + $0xf0] sm:$0xff]
    %v1055 = vld [vmem:[%s52 + $0x100] sm:$0xff]
    %v1056 = vld [vmem:[%s52 + $0x110] sm:$0xff]
    %v1057 = vld [vmem:[#allocation4 + $0x60] sm:$0xff]
    %v1058 = vld [vmem:[#allocation4 + $0x68] sm:$0xff]
    %v1059 = vld [vmem:[#allocation4 + $0x70] sm:$0xff]
    %v1060 = vld [vmem:[#allocation4 + $0x78] sm:$0xff]
    %v1062 = vsel %vm41, %v1041, 0
    %v1065 = vsel %vm41, %v1042, 0
    %v1068 = vsel %vm41, %v1043, 0
    %v1071 = vsel %vm41, %v1044, 0
    %v1074 = vsel %vm41, %v1045, 0
    %v1077 = vsel %vm41, %v1046, 0
    %v1080 = vsel %vm41, %v1047, 0
    %v1083 = vsel %vm41, %v1048, 0
    %v1086 = vsel %vm41, %v1049, 0
    %v1089 = vsel %vm41, %v1050, 0
    %v1092 = vsel %vm41, %v1051, 0
    %v1095 = vsel %vm41, %v1052, 0
    %v1098 = vsel %vm41, %v1053, 0
    %v1101 = vsel %vm41, %v1054, 0
    %v1104 = vsel %vm41, %v1055, 0
    %v1107 = vsel %vm41, %v1056, 0
    %1109 = vmatprep.subr.mxu0 0.0
    %1110 = vmatpush1.msra.mxu0 %v1057
    %1111 = vmatprep.subr.mxu0 0.0
    %1112 = vmatpush1.msra.mxu0 %v1058
    %1113 = vmatprep.subr.mxu0 0.0
    %1114 = vmatpush1.msra.mxu0 %v1059
    %1115 = vmatprep.subr.mxu0 0.0
    %1116 = vmatpush1.msra.mxu0 %v1060
    %1117 = vmatprep.subr.mxu0 0.0
    %1118 = vmatpush1.msra.mxu0 0.0
    %1119 = vmatprep.subr.mxu0 0.0
    %1120 = vmatpush1.msra.mxu0 0.0
    %1121 = vmatprep.subr.mxu0 0.0
    %1122 = vmatpush1.msra.mxu0 0.0
    %1123 = vmatprep.subr.mxu0 0.0
    %1124 = vmatpush1.msra.mxu0 0.0
    %1125 = vmatprep.subr.mxu0 0.0
    %1126 = vmatpush1.msra.mxu0 0.0
    %1127 = vmatprep.subr.mxu0 0.0
    %1128 = vmatpush1.msra.mxu0 0.0
    %1129 = vmatprep.subr.mxu0 0.0
    %1130 = vmatpush1.msra.mxu0 0.0
    %1131 = vmatprep.subr.mxu0 0.0
    %1132 = vmatpush1.msra.mxu0 0.0
    %1133 = vmatprep.subr.mxu0 0.0
    %1134 = vmatpush1.msra.mxu0 0.0
    %1135 = vmatprep.subr.mxu0 0.0
    %1136 = vmatpush1.msra.mxu0 0.0
    %1137 = vmatprep.subr.mxu0 0.0
    %1138 = vmatpush1.msra.mxu0 0.0
    %1139 = vmatprep.subr.mxu0 0.0
    %1140 = vmatpush1.msra.mxu0 0.0
    %1141 = vmatprep.subr.mxu0 0.0
    %1142 = vmatpush1.msra.mxu0 0.0
    %1143 = vmatprep.subr.mxu0 0.0
    %1144 = vmatpush1.msra.mxu0 0.0
    %1145 = vmatprep.subr.mxu0 0.0
    %1146 = vmatpush1.msra.mxu0 0.0
    %1147 = vmatprep.subr.mxu0 0.0
    %1148 = vmatpush1.msra.mxu0 0.0
    %1149 = vmatprep.subr.mxu0 0.0
    %1150 = vmatpush1.msra.mxu0 0.0
    %1151 = vmatprep.subr.mxu0 0.0
    %1152 = vmatpush1.msra.mxu0 0.0
    %1153 = vmatprep.subr.mxu0 0.0
    %1154 = vmatpush1.msra.mxu0 0.0
    %1155 = vmatprep.subr.mxu0 0.0
    %1156 = vmatpush1.msra.mxu0 0.0
    %1157 = vmatprep.subr.mxu0 0.0
    %1158 = vmatpush1.msra.mxu0 0.0
    %1159 = vmatprep.subr.mxu0 0.0
    %1160 = vmatpush1.msra.mxu0 0.0
    %1161 = vmatprep.subr.mxu0 0.0
    %1162 = vmatpush1.msra.mxu0 0.0
    %1163 = vmatprep.subr.mxu0 0.0
    %1164 = vmatpush1.msra.mxu0 0.0
    %1165 = vmatprep.subr.mxu0 0.0
    %1166 = vmatpush1.msra.mxu0 0.0
    %1167 = vmatprep.subr.mxu0 0.0
    %1168 = vmatpush1.msra.mxu0 0.0
    %1169 = vmatprep.subr.mxu0 0.0
    %1170 = vmatpush1.msra.mxu0 0.0
    %1171 = vmatprep.subr.mxu0 0.0
    %1172 = vmatpush1.msra.mxu0 0.0
    %1173 = vmatprep.mubr.f32.mxu0 0.0
    %1174 = vmatmul.mubr.f32.gmra.mrb[0].mxu0 %v1062
    %v1175 = vpop.f32.mrb[0].mxu0
    %v1176 = vadd.f32 0.0, %v1175
    %v1177 = vpop.f32.mrb[0].mxu0
    %1178 = vmatprep.mubr.f32.mxu0 0.0
    %1179 = vmatmul.mubr.f32.gmra.mrb[0].mxu0 %v1065
    %v1180 = vpop.f32.mrb[0].mxu0
    %v1181 = vadd.f32 0.0, %v1180
    %v1182 = vpop.f32.mrb[0].mxu0
    %1183 = vmatprep.mubr.f32.mxu0 0.0
    %1184 = vmatmul.mubr.f32.gmra.mrb[0].mxu0 %v1068
    %v1185 = vpop.f32.mrb[0].mxu0
    %v1186 = vadd.f32 0.0, %v1185
    %v1187 = vpop.f32.mrb[0].mxu0
    %1188 = vmatprep.mubr.f32.mxu0 0.0
    %1189 = vmatmul.mubr.f32.gmra.mrb[0].mxu0 %v1071
    %v1190 = vpop.f32.mrb[0].mxu0
    %v1191 = vadd.f32 0.0, %v1190
    %v1192 = vpop.f32.mrb[0].mxu0
    %1193 = vmatprep.mubr.f32.mxu0 0.0
    %1194 = vmatmul.mubr.f32.gmra.mrb[0].mxu0 %v1074
    %v1195 = vpop.f32.mrb[0].mxu0
    %v1196 = vadd.f32 0.0, %v1195
    %v1197 = vpop.f32.mrb[0].mxu0
    %1198 = vmatprep.mubr.f32.mxu0 0.0
    %1199 = vmatmul.mubr.f32.gmra.mrb[0].mxu0 %v1077
    %v1200 = vpop.f32.mrb[0].mxu0
    %v1201 = vadd.f32 0.0, %v1200
    %v1202 = vpop.f32.mrb[0].mxu0
    %1203 = vmatprep.mubr.f32.mxu0 0.0
    %1204 = vmatmul.mubr.f32.gmra.mrb[0].mxu0 %v1080
    %v1205 = vpop.f32.mrb[0].mxu0
    %v1206 = vadd.f32 0.0, %v1205
    %v1207 = vpop.f32.mrb[0].mxu0
    %1208 = vmatprep.mubr.f32.mxu0 0.0
    %1209 = vmatmul.mubr.f32.gmra.mrb[0].mxu0 %v1083
    %v1210 = vpop.f32.mrb[0].mxu0
    %v1211 = vadd.f32 0.0, %v1210
    %v1212 = vpop.f32.mrb[0].mxu0
    %1213 = vmatprep.mubr.f32.mxu0 0.0
    %1214 = vmatmul.mubr.f32.gmra.mrb[0].mxu0 %v1086
    %v1215 = vpop.f32.mrb[0].mxu0
    %v1216 = vadd.f32 0.0, %v1215
    %v1217 = vpop.f32.mrb[0].mxu0
    %1218 = vmatprep.mubr.f32.mxu0 0.0
    %1219 = vmatmul.mubr.f32.gmra.mrb[0].mxu0 %v1089
    %v1220 = vpop.f32.mrb[0].mxu0
    %v1221 = vadd.f32 0.0, %v1220
    %v1222 = vpop.f32.mrb[0].mxu0
    %1223 = vmatprep.mubr.f32.mxu0 0.0
    %1224 = vmatmul.mubr.f32.gmra.mrb[0].mxu0 %v1092
    %v1225 = vpop.f32.mrb[0].mxu0
    %v1226 = vadd.f32 0.0, %v1225
    %v1227 = vpop.f32.mrb[0].mxu0
    %1228 = vmatprep.mubr.f32.mxu0 0.0
    %1229 = vmatmul.mubr.f32.gmra.mrb[0].mxu0 %v1095
    %v1230 = vpop.f32.mrb[0].mxu0
    %v1231 = vadd.f32 0.0, %v1230
    %v1232 = vpop.f32.mrb[0].mxu0
    %1233 = vmatprep.mubr.f32.mxu0 0.0
    %1234 = vmatmul.mubr.f32.gmra.mrb[0].mxu0 %v1098
    %v1235 = vpop.f32.mrb[0].mxu0
    %v1236 = vadd.f32 0.0, %v1235
    %v1237 = vpop.f32.mrb[0].mxu0
    %1238 = vmatprep.mubr.f32.mxu0 0.0
    %1239 = vmatmul.mubr.f32.gmra.mrb[0].mxu0 %v1101
    %v1240 = vpop.f32.mrb[0].mxu0
    %v1241 = vadd.f32 0.0, %v1240
    %v1242 = vpop.f32.mrb[0].mxu0
    %1243 = vmatprep.mubr.f32.mxu0 0.0
    %1244 = vmatmul.mubr.f32.gmra.mrb[0].mxu0 %v1104
    %v1245 = vpop.f32.mrb[0].mxu0
    %v1246 = vadd.f32 0.0, %v1245
    %v1247 = vpop.f32.mrb[0].mxu0
    %1248 = vmatprep.mubr.f32.mxu0 0.0
    %1249 = vmatmul.mubr.f32.gmra.mrb[0].mxu0 %v1107
    %v1250 = vpop.f32.mrb[0].mxu0
    %v1251 = vadd.f32 0.0, %v1250
    %v1252 = vpop.f32.mrb[0].mxu0
    %1253 = vdwg.mxu0
    %v1254 = vadd.f32 %v1025, %v1176
    %v1255 = vadd.f32 %v1026, %v1181
    %v1256 = vadd.f32 %v1027, %v1186
    %v1257 = vadd.f32 %v1028, %v1191
    %v1258 = vadd.f32 %v1029, %v1196
    %v1259 = vadd.f32 %v1030, %v1201
    %v1260 = vadd.f32 %v1031, %v1206
    %v1261 = vadd.f32 %v1032, %v1211
    %v1262 = vadd.f32 %v1033, %v1216
    %v1263 = vadd.f32 %v1034, %v1221
    %v1264 = vadd.f32 %v1035, %v1226
    %v1265 = vadd.f32 %v1036, %v1231
    %v1266 = vadd.f32 %v1037, %v1236
    %v1267 = vadd.f32 %v1038, %v1241
    %v1268 = vadd.f32 %v1039, %v1246
    %v1269 = vadd.f32 %v1040, %v1251
    %v1270 = vld [vmem:[%s52 + $0x1] sm:$0xff]
    %v1271 = vld [vmem:[%s52 + $0x11] sm:$0xff]
    %v1272 = vld [vmem:[%s52 + $0x21] sm:$0xff]
    %v1273 = vld [vmem:[%s52 + $0x31] sm:$0xff]
    %v1274 = vld [vmem:[%s52 + $0x41] sm:$0xff]
    %v1275 = vld [vmem:[%s52 + $0x51] sm:$0xff]
    %v1276 = vld [vmem:[%s52 + $0x61] sm:$0xff]
    %v1277 = vld [vmem:[%s52 + $0x71] sm:$0xff]
    %v1278 = vld [vmem:[%s52 + $0xa1] sm:$0xff]
    %v1279 = vld [vmem:[%s52 + $0xb1] sm:$0xff]
    %v1280 = vld [vmem:[%s52 + $0xc1] sm:$0xff]
    %v1281 = vld [vmem:[%s52 + $0xd1] sm:$0xff]
    %v1282 = vld [vmem:[%s52 + $0xe1] sm:$0xff]
    %v1283 = vld [vmem:[%s52 + $0xf1] sm:$0xff]
    %v1284 = vld [vmem:[%s52 + $0x101] sm:$0xff]
    %v1285 = vld [vmem:[%s52 + $0x111] sm:$0xff]
    %v1286 = vld [vmem:[#allocation4 + $0x80] sm:$0xff]
    %v1287 = vld [vmem:[#allocation4 + $0x88] sm:$0xff]
    %v1288 = vld [vmem:[#allocation4 + $0x90] sm:$0xff]
    %v1289 = vld [vmem:[#allocation4 + $0x98] sm:$0xff]
    %v1291 = vsel %vm41, %v1270, 0
    %v1294 = vsel %vm41, %v1271, 0
    %v1297 = vsel %vm41, %v1272, 0
    %v1300 = vsel %vm41, %v1273, 0
    %v1303 = vsel %vm41, %v1274, 0
    %v1306 = vsel %vm41, %v1275, 0
    %v1309 = vsel %vm41, %v1276, 0
    %v1312 = vsel %vm41, %v1277, 0
    %v1315 = vsel %vm41, %v1278, 0
    %v1318 = vsel %vm41, %v1279, 0
    %v1321 = vsel %vm41, %v1280, 0
    %v1324 = vsel %vm41, %v1281, 0
    %v1327 = vsel %vm41, %v1282, 0
    %v1330 = vsel %vm41, %v1283, 0
    %v1333 = vsel %vm41, %v1284, 0
    %v1336 = vsel %vm41, %v1285, 0
    %1338 = vmatprep.subr.mxu0 0.0
    %1339 = vmatpush1.msra.mxu0 %v1286
    %1340 = vmatprep.subr.mxu0 0.0
    %1341 = vmatpush1.msra.mxu0 %v1287
    %1342 = vmatprep.subr.mxu0 0.0
    %1343 = vmatpush1.msra.mxu0 %v1288
    %1344 = vmatprep.subr.mxu0 0.0
    %1345 = vmatpush1.msra.mxu0 %v1289
    %1346 = vmatprep.subr.mxu0 0.0
    %1347 = vmatpush1.msra.mxu0 0.0
    %1348 = vmatprep.subr.mxu0 0.0
    %1349 = vmatpush1.msra.mxu0 0.0
    %1350 = vmatprep.subr.mxu0 0.0
    %1351 = vmatpush1.msra.mxu0 0.0
    %1352 = vmatprep.subr.mxu0 0.0
    %1353 = vmatpush1.msra.mxu0 0.0
    %1354 = vmatprep.subr.mxu0 0.0
    %1355 = vmatpush1.msra.mxu0 0.0
    %1356 = vmatprep.subr.mxu0 0.0
    %1357 = vmatpush1.msra.mxu0 0.0
    %1358 = vmatprep.subr.mxu0 0.0
    %1359 = vmatpush1.msra.mxu0 0.0
    %1360 = vmatprep.subr.mxu0 0.0
    %1361 = vmatpush1.msra.mxu0 0.0
    %1362 = vmatprep.subr.mxu0 0.0
    %1363 = vmatpush1.msra.mxu0 0.0
    %1364 = vmatprep.subr.mxu0 0.0
    %1365 = vmatpush1.msra.mxu0 0.0
    %1366 = vmatprep.subr.mxu0 0.0
    %1367 = vmatpush1.msra.mxu0 0.0
    %1368 = vmatprep.subr.mxu0 0.0
    %1369 = vmatpush1.msra.mxu0 0.0
    %1370 = vmatprep.subr.mxu0 0.0
    %1371 = vmatpush1.msra.mxu0 0.0
    %1372 = vmatprep.subr.mxu0 0.0
    %1373 = vmatpush1.msra.mxu0 0.0
    %1374 = vmatprep.subr.mxu0 0.0
    %1375 = vmatpush1.msra.mxu0 0.0
    %1376 = vmatprep.subr.mxu0 0.0
    %1377 = vmatpush1.msra.mxu0 0.0
    %1378 = vmatprep.subr.mxu0 0.0
    %1379 = vmatpush1.msra.mxu0 0.0
    %1380 = vmatprep.subr.mxu0 0.0
    %1381 = vmatpush1.msra.mxu0 0.0
    %1382 = vmatprep.subr.mxu0 0.0
    %1383 = vmatpush1.msra.mxu0 0.0
    %1384 = vmatprep.subr.mxu0 0.0
    %1385 = vmatpush1.msra.mxu0 0.0
    %1386 = vmatprep.subr.mxu0 0.0
    %1387 = vmatpush1.msra.mxu0 0.0
    %1388 = vmatprep.subr.mxu0 0.0
    %1389 = vmatpush1.msra.mxu0 0.0
    %1390 = vmatprep.subr.mxu0 0.0
    %1391 = vmatpush1.msra.mxu0 0.0
    %1392 = vmatprep.subr.mxu0 0.0
    %1393 = vmatpush1.msra.mxu0 0.0
    %1394 = vmatprep.subr.mxu0 0.0
    %1395 = vmatpush1.msra.mxu0 0.0
    %1396 = vmatprep.subr.mxu0 0.0
    %1397 = vmatpush1.msra.mxu0 0.0
    %1398 = vmatprep.subr.mxu0 0.0
    %1399 = vmatpush1.msra.mxu0 0.0
    %1400 = vmatprep.subr.mxu0 0.0
    %1401 = vmatpush1.msra.mxu0 0.0
    %1402 = vmatprep.mubr.f32.mxu0 0.0
    %1403 = vmatmul.mubr.f32.gmra.mrb[0].mxu0 %v1291
    %v1404 = vpop.f32.mrb[0].mxu0
    %v1405 = vadd.f32 0.0, %v1404
    %v1406 = vpop.f32.mrb[0].mxu0
    %1407 = vmatprep.mubr.f32.mxu0 0.0
    %1408 = vmatmul.mubr.f32.gmra.mrb[0].mxu0 %v1294
    %v1409 = vpop.f32.mrb[0].mxu0
    %v1410 = vadd.f32 0.0, %v1409
    %v1411 = vpop.f32.mrb[0].mxu0
    %1412 = vmatprep.mubr.f32.mxu0 0.0
    %1413 = vmatmul.mubr.f32.gmra.mrb[0].mxu0 %v1297
    %v1414 = vpop.f32.mrb[0].mxu0
    %v1415 = vadd.f32 0.0, %v1414
    %v1416 = vpop.f32.mrb[0].mxu0
    %1417 = vmatprep.mubr.f32.mxu0 0.0
    %1418 = vmatmul.mubr.f32.gmra.mrb[0].mxu0 %v1300
    %v1419 = vpop.f32.mrb[0].mxu0
    %v1420 = vadd.f32 0.0, %v1419
    %v1421 = vpop.f32.mrb[0].mxu0
    %1422 = vmatprep.mubr.f32.mxu0 0.0
    %1423 = vmatmul.mubr.f32.gmra.mrb[0].mxu0 %v1303
    %v1424 = vpop.f32.mrb[0].mxu0
    %v1425 = vadd.f32 0.0, %v1424
    %v1426 = vpop.f32.mrb[0].mxu0
    %1427 = vmatprep.mubr.f32.mxu0 0.0
    %1428 = vmatmul.mubr.f32.gmra.mrb[0].mxu0 %v1306
    %v1429 = vpop.f32.mrb[0].mxu0
    %v1430 = vadd.f32 0.0, %v1429
    %v1431 = vpop.f32.mrb[0].mxu0
    %1432 = vmatprep.mubr.f32.mxu0 0.0
    %1433 = vmatmul.mubr.f32.gmra.mrb[0].mxu0 %v1309
    %v1434 = vpop.f32.mrb[0].mxu0
    %v1435 = vadd.f32 0.0, %v1434
    %v1436 = vpop.f32.mrb[0].mxu0
    %1437 = vmatprep.mubr.f32.mxu0 0.0
    %1438 = vmatmul.mubr.f32.gmra.mrb[0].mxu0 %v1312
    %v1439 = vpop.f32.mrb[0].mxu0
    %v1440 = vadd.f32 0.0, %v1439
    %v1441 = vpop.f32.mrb[0].mxu0
    %1442 = vmatprep.mubr.f32.mxu0 0.0
    %1443 = vmatmul.mubr.f32.gmra.mrb[0].mxu0 %v1315
    %v1444 = vpop.f32.mrb[0].mxu0
    %v1445 = vadd.f32 0.0, %v1444
    %v1446 = vpop.f32.mrb[0].mxu0
    %1447 = vmatprep.mubr.f32.mxu0 0.0
    %1448 = vmatmul.mubr.f32.gmra.mrb[0].mxu0 %v1318
    %v1449 = vpop.f32.mrb[0].mxu0
    %v1450 = vadd.f32 0.0, %v1449
    %v1451 = vpop.f32.mrb[0].mxu0
    %1452 = vmatprep.mubr.f32.mxu0 0.0
    %1453 = vmatmul.mubr.f32.gmra.mrb[0].mxu0 %v1321
    %v1454 = vpop.f32.mrb[0].mxu0
    %v1455 = vadd.f32 0.0, %v1454
    %v1456 = vpop.f32.mrb[0].mxu0
    %1457 = vmatprep.mubr.f32.mxu0 0.0
    %1458 = vmatmul.mubr.f32.gmra.mrb[0].mxu0 %v1324
    %v1459 = vpop.f32.mrb[0].mxu0
    %v1460 = vadd.f32 0.0, %v1459
    %v1461 = vpop.f32.mrb[0].mxu0
    %1462 = vmatprep.mubr.f32.mxu0 0.0
    %1463 = vmatmul.mubr.f32.gmra.mrb[0].mxu0 %v1327
    %v1464 = vpop.f32.mrb[0].mxu0
    %v1465 = vadd.f32 0.0, %v1464
    %v1466 = vpop.f32.mrb[0].mxu0
    %1467 = vmatprep.mubr.f32.mxu0 0.0
    %1468 = vmatmul.mubr.f32.gmra.mrb[0].mxu0 %v1330
    %v1469 = vpop.f32.mrb[0].mxu0
    %v1470 = vadd.f32 0.0, %v1469
    %v1471 = vpop.f32.mrb[0].mxu0
    %1472 = vmatprep.mubr.f32.mxu0 0.0
    %1473 = vmatmul.mubr.f32.gmra.mrb[0].mxu0 %v1333
    %v1474 = vpop.f32.mrb[0].mxu0
    %v1475 = vadd.f32 0.0, %v1474
    %v1476 = vpop.f32.mrb[0].mxu0
    %1477 = vmatprep.mubr.f32.mxu0 0.0
    %1478 = vmatmul.mubr.f32.gmra.mrb[0].mxu0 %v1336
    %v1479 = vpop.f32.mrb[0].mxu0
    %v1480 = vadd.f32 0.0, %v1479
    %v1481 = vpop.f32.mrb[0].mxu0
    %1482 = vdwg.mxu0
    %v1483 = vadd.f32 %v1254, %v1405
    %v1484 = vadd.f32 %v1255, %v1410
    %v1485 = vadd.f32 %v1256, %v1415
    %v1486 = vadd.f32 %v1257, %v1420
    %v1487 = vadd.f32 %v1258, %v1425
    %v1488 = vadd.f32 %v1259, %v1430
    %v1489 = vadd.f32 %v1260, %v1435
    %v1490 = vadd.f32 %v1261, %v1440
    %v1491 = vadd.f32 %v1262, %v1445
    %v1492 = vadd.f32 %v1263, %v1450
    %v1493 = vadd.f32 %v1264, %v1455
    %v1494 = vadd.f32 %v1265, %v1460
    %v1495 = vadd.f32 %v1266, %v1465
    %v1496 = vadd.f32 %v1267, %v1470
    %v1497 = vadd.f32 %v1268, %v1475
    %v1498 = vadd.f32 %v1269, %v1480
    %v1499 = vld [vmem:[%s52 + $0x2] sm:$0xff]
    %v1500 = vld [vmem:[%s52 + $0x12] sm:$0xff]
    %v1501 = vld [vmem:[%s52 + $0x22] sm:$0xff]
    %v1502 = vld [vmem:[%s52 + $0x32] sm:$0xff]
    %v1503 = vld [vmem:[%s52 + $0x42] sm:$0xff]
    %v1504 = vld [vmem:[%s52 + $0x52] sm:$0xff]
    %v1505 = vld [vmem:[%s52 + $0x62] sm:$0xff]
    %v1506 = vld [vmem:[%s52 + $0x72] sm:$0xff]
    %v1507 = vld [vmem:[%s52 + $0xa2] sm:$0xff]
    %v1508 = vld [vmem:[%s52 + $0xb2] sm:$0xff]
    %v1509 = vld [vmem:[%s52 + $0xc2] sm:$0xff]
    %v1510 = vld [vmem:[%s52 + $0xd2] sm:$0xff]
    %v1511 = vld [vmem:[%s52 + $0xe2] sm:$0xff]
    %v1512 = vld [vmem:[%s52 + $0xf2] sm:$0xff]
    %v1513 = vld [vmem:[%s52 + $0x102] sm:$0xff]
    %v1514 = vld [vmem:[%s52 + $0x112] sm:$0xff]
    %v1515 = vld [vmem:[#allocation4 + $0xa0] sm:$0xff]
    %v1516 = vld [vmem:[#allocation4 + $0xa8] sm:$0xff]
    %v1517 = vld [vmem:[#allocation4 + $0xb0] sm:$0xff]
    %v1518 = vld [vmem:[#allocation4 + $0xb8] sm:$0xff]
    %v1520 = vsel %vm41, %v1499, 0
    %v1523 = vsel %vm41, %v1500, 0
    %v1526 = vsel %vm41, %v1501, 0
    %v1529 = vsel %vm41, %v1502, 0
    %v1532 = vsel %vm41, %v1503, 0
    %v1535 = vsel %vm41, %v1504, 0
    %v1538 = vsel %vm41, %v1505, 0
    %v1541 = vsel %vm41, %v1506, 0
    %v1544 = vsel %vm41, %v1507, 0
    %v1547 = vsel %vm41, %v1508, 0
    %v1550 = vsel %vm41, %v1509, 0
    %v1553 = vsel %vm41, %v1510, 0
    %v1556 = vsel %vm41, %v1511, 0
    %v1559 = vsel %vm41, %v1512, 0
    %v1562 = vsel %vm41, %v1513, 0
    %v1565 = vsel %vm41, %v1514, 0
    %1567 = vmatprep.subr.mxu0 0.0
    %1568 = vmatpush1.msra.mxu0 %v1515
    %1569 = vmatprep.subr.mxu0 0.0
    %1570 = vmatpush1.msra.mxu0 %v1516
    %1571 = vmatprep.subr.mxu0 0.0
    %1572 = vmatpush1.msra.mxu0 %v1517
    %1573 = vmatprep.subr.mxu0 0.0
    %1574 = vmatpush1.msra.mxu0 %v1518
    %1575 = vmatprep.subr.mxu0 0.0
    %1576 = vmatpush1.msra.mxu0 0.0
    %1577 = vmatprep.subr.mxu0 0.0
    %1578 = vmatpush1.msra.mxu0 0.0
    %1579 = vmatprep.subr.mxu0 0.0
    %1580 = vmatpush1.msra.mxu0 0.0
    %1581 = vmatprep.subr.mxu0 0.0
    %1582 = vmatpush1.msra.mxu0 0.0
    %1583 = vmatprep.subr.mxu0 0.0
    %1584 = vmatpush1.msra.mxu0 0.0
    %1585 = vmatprep.subr.mxu0 0.0
    %1586 = vmatpush1.msra.mxu0 0.0
    %1587 = vmatprep.subr.mxu0 0.0
    %1588 = vmatpush1.msra.mxu0 0.0
    %1589 = vmatprep.subr.mxu0 0.0
    %1590 = vmatpush1.msra.mxu0 0.0
    %1591 = vmatprep.subr.mxu0 0.0
    %1592 = vmatpush1.msra.mxu0 0.0
    %1593 = vmatprep.subr.mxu0 0.0
    %1594 = vmatpush1.msra.mxu0 0.0
    %1595 = vmatprep.subr.mxu0 0.0
    %1596 = vmatpush1.msra.mxu0 0.0
    %1597 = vmatprep.subr.mxu0 0.0
    %1598 = vmatpush1.msra.mxu0 0.0
    %1599 = vmatprep.subr.mxu0 0.0
    %1600 = vmatpush1.msra.mxu0 0.0
    %1601 = vmatprep.subr.mxu0 0.0
    %1602 = vmatpush1.msra.mxu0 0.0
    %1603 = vmatprep.subr.mxu0 0.0
    %1604 = vmatpush1.msra.mxu0 0.0
    %1605 = vmatprep.subr.mxu0 0.0
    %1606 = vmatpush1.msra.mxu0 0.0
    %1607 = vmatprep.subr.mxu0 0.0
    %1608 = vmatpush1.msra.mxu0 0.0
    %1609 = vmatprep.subr.mxu0 0.0
    %1610 = vmatpush1.msra.mxu0 0.0
    %1611 = vmatprep.subr.mxu0 0.0
    %1612 = vmatpush1.msra.mxu0 0.0
    %1613 = vmatprep.subr.mxu0 0.0
    %1614 = vmatpush1.msra.mxu0 0.0
    %1615 = vmatprep.subr.mxu0 0.0
    %1616 = vmatpush1.msra.mxu0 0.0
    %1617 = vmatprep.subr.mxu0 0.0
    %1618 = vmatpush1.msra.mxu0 0.0
    %1619 = vmatprep.subr.mxu0 0.0
    %1620 = vmatpush1.msra.mxu0 0.0
    %1621 = vmatprep.subr.mxu0 0.0
    %1622 = vmatpush1.msra.mxu0 0.0
    %1623 = vmatprep.subr.mxu0 0.0
    %1624 = vmatpush1.msra.mxu0 0.0
    %1625 = vmatprep.subr.mxu0 0.0
    %1626 = vmatpush1.msra.mxu0 0.0
    %1627 = vmatprep.subr.mxu0 0.0
    %1628 = vmatpush1.msra.mxu0 0.0
    %1629 = vmatprep.subr.mxu0 0.0
    %1630 = vmatpush1.msra.mxu0 0.0
    %1631 = vmatprep.mubr.f32.mxu0 0.0
    %1632 = vmatmul.mubr.f32.gmra.mrb[0].mxu0 %v1520
    %v1633 = vpop.f32.mrb[0].mxu0
    %v1634 = vadd.f32 0.0, %v1633
    %v1635 = vpop.f32.mrb[0].mxu0
    %1636 = vmatprep.mubr.f32.mxu0 0.0
    %1637 = vmatmul.mubr.f32.gmra.mrb[0].mxu0 %v1523
    %v1638 = vpop.f32.mrb[0].mxu0
    %v1639 = vadd.f32 0.0, %v1638
    %v1640 = vpop.f32.mrb[0].mxu0
    %1641 = vmatprep.mubr.f32.mxu0 0.0
    %1642 = vmatmul.mubr.f32.gmra.mrb[0].mxu0 %v1526
    %v1643 = vpop.f32.mrb[0].mxu0
    %v1644 = vadd.f32 0.0, %v1643
    %v1645 = vpop.f32.mrb[0].mxu0
    %1646 = vmatprep.mubr.f32.mxu0 0.0
    %1647 = vmatmul.mubr.f32.gmra.mrb[0].mxu0 %v1529
    %v1648 = vpop.f32.mrb[0].mxu0
    %v1649 = vadd.f32 0.0, %v1648
    %v1650 = vpop.f32.mrb[0].mxu0
    %1651 = vmatprep.mubr.f32.mxu0 0.0
    %1652 = vmatmul.mubr.f32.gmra.mrb[0].mxu0 %v1532
    %v1653 = vpop.f32.mrb[0].mxu0
    %v1654 = vadd.f32 0.0, %v1653
    %v1655 = vpop.f32.mrb[0].mxu0
    %1656 = vmatprep.mubr.f32.mxu0 0.0
    %1657 = vmatmul.mubr.f32.gmra.mrb[0].mxu0 %v1535
    %v1658 = vpop.f32.mrb[0].mxu0
    %v1659 = vadd.f32 0.0, %v1658
    %v1660 = vpop.f32.mrb[0].mxu0
    %1661 = vmatprep.mubr.f32.mxu0 0.0
    %1662 = vmatmul.mubr.f32.gmra.mrb[0].mxu0 %v1538
    %v1663 = vpop.f32.mrb[0].mxu0
    %v1664 = vadd.f32 0.0, %v1663
    %v1665 = vpop.f32.mrb[0].mxu0
    %1666 = vmatprep.mubr.f32.mxu0 0.0
    %1667 = vmatmul.mubr.f32.gmra.mrb[0].mxu0 %v1541
    %v1668 = vpop.f32.mrb[0].mxu0
    %v1669 = vadd.f32 0.0, %v1668
    %v1670 = vpop.f32.mrb[0].mxu0
    %1671 = vmatprep.mubr.f32.mxu0 0.0
    %1672 = vmatmul.mubr.f32.gmra.mrb[0].mxu0 %v1544
    %v1673 = vpop.f32.mrb[0].mxu0
    %v1674 = vadd.f32 0.0, %v1673
    %v1675 = vpop.f32.mrb[0].mxu0
    %1676 = vmatprep.mubr.f32.mxu0 0.0
    %1677 = vmatmul.mubr.f32.gmra.mrb[0].mxu0 %v1547
    %v1678 = vpop.f32.mrb[0].mxu0
    %v1679 = vadd.f32 0.0, %v1678
    %v1680 = vpop.f32.mrb[0].mxu0
    %1681 = vmatprep.mubr.f32.mxu0 0.0
    %1682 = vmatmul.mubr.f32.gmra.mrb[0].mxu0 %v1550
    %v1683 = vpop.f32.mrb[0].mxu0
    %v1684 = vadd.f32 0.0, %v1683
    %v1685 = vpop.f32.mrb[0].mxu0
    %1686 = vmatprep.mubr.f32.mxu0 0.0
    %1687 = vmatmul.mubr.f32.gmra.mrb[0].mxu0 %v1553
    %v1688 = vpop.f32.mrb[0].mxu0
    %v1689 = vadd.f32 0.0, %v1688
    %v1690 = vpop.f32.mrb[0].mxu0
    %1691 = vmatprep.mubr.f32.mxu0 0.0
    %1692 = vmatmul.mubr.f32.gmra.mrb[0].mxu0 %v1556
    %v1693 = vpop.f32.mrb[0].mxu0
    %v1694 = vadd.f32 0.0, %v1693
    %v1695 = vpop.f32.mrb[0].mxu0
    %1696 = vmatprep.mubr.f32.mxu0 0.0
    %1697 = vmatmul.mubr.f32.gmra.mrb[0].mxu0 %v1559
    %v1698 = vpop.f32.mrb[0].mxu0
    %v1699 = vadd.f32 0.0, %v1698
    %v1700 = vpop.f32.mrb[0].mxu0
    %1701 = vmatprep.mubr.f32.mxu0 0.0
    %1702 = vmatmul.mubr.f32.gmra.mrb[0].mxu0 %v1562
    %v1703 = vpop.f32.mrb[0].mxu0
    %v1704 = vadd.f32 0.0, %v1703
    %v1705 = vpop.f32.mrb[0].mxu0
    %1706 = vmatprep.mubr.f32.mxu0 0.0
    %1707 = vmatmul.mubr.f32.gmra.mrb[0].mxu0 %v1565
    %v1708 = vpop.f32.mrb[0].mxu0
    %v1709 = vadd.f32 0.0, %v1708
    %v1710 = vpop.f32.mrb[0].mxu0
    %1711 = vdwg.mxu0
    %v1712 = vadd.f32 %v1483, %v1634
    %v1713 = vadd.f32 %v1484, %v1639
    %v1714 = vadd.f32 %v1485, %v1644
    %v1715 = vadd.f32 %v1486, %v1649
    %v1716 = vadd.f32 %v1487, %v1654
    %v1717 = vadd.f32 %v1488, %v1659
    %v1718 = vadd.f32 %v1489, %v1664
    %v1719 = vadd.f32 %v1490, %v1669
    %v1720 = vadd.f32 %v1491, %v1674
    %v1721 = vadd.f32 %v1492, %v1679
    %v1722 = vadd.f32 %v1493, %v1684
    %v1723 = vadd.f32 %v1494, %v1689
    %v1724 = vadd.f32 %v1495, %v1694
    %v1725 = vadd.f32 %v1496, %v1699
    %v1726 = vadd.f32 %v1497, %v1704
    %v1727 = vadd.f32 %v1498, %v1709
    %s1728 = scalar_lea.vmem [#allocation2], 32
    %v1729 = vld [vmem:[%s1728] sm:$0xff]
    %v1730 = vld [vmem:[%s1728 + $0x10] sm:$0xff]
    %v1731 = vld [vmem:[%s1728 + $0x20] sm:$0xff]
    %v1732 = vld [vmem:[%s1728 + $0x30] sm:$0xff]
    %v1733 = vld [vmem:[%s1728 + $0x40] sm:$0xff]
    %v1734 = vld [vmem:[%s1728 + $0x50] sm:$0xff]
    %v1735 = vld [vmem:[%s1728 + $0x60] sm:$0xff]
    %v1736 = vld [vmem:[%s1728 + $0x70] sm:$0xff]
    %v1737 = vld [vmem:[%s1728 + $0xa0] sm:$0xff]
    %v1738 = vld [vmem:[%s1728 + $0xb0] sm:$0xff]
    %v1739 = vld [vmem:[%s1728 + $0xc0] sm:$0xff]
    %v1740 = vld [vmem:[%s1728 + $0xd0] sm:$0xff]
    %v1741 = vld [vmem:[%s1728 + $0xe0] sm:$0xff]
    %v1742 = vld [vmem:[%s1728 + $0xf0] sm:$0xff]
    %v1743 = vld [vmem:[%s1728 + $0x100] sm:$0xff]
    %v1744 = vld [vmem:[%s1728 + $0x110] sm:$0xff]
    %v1745 = vld [vmem:[#allocation4 + $0xc0] sm:$0xff]
    %v1746 = vld [vmem:[#allocation4 + $0xc8] sm:$0xff]
    %v1747 = vld [vmem:[#allocation4 + $0xd0] sm:$0xff]
    %v1748 = vld [vmem:[#allocation4 + $0xd8] sm:$0xff]
    %v1750 = vsel %vm41, %v1729, 0
    %v1753 = vsel %vm41, %v1730, 0
    %v1756 = vsel %vm41, %v1731, 0
    %v1759 = vsel %vm41, %v1732, 0
    %v1762 = vsel %vm41, %v1733, 0
    %v1765 = vsel %vm41, %v1734, 0
    %v1768 = vsel %vm41, %v1735, 0
    %v1771 = vsel %vm41, %v1736, 0
    %v1774 = vsel %vm41, %v1737, 0
    %v1777 = vsel %vm41, %v1738, 0
    %v1780 = vsel %vm41, %v1739, 0
    %v1783 = vsel %vm41, %v1740, 0
    %v1786 = vsel %vm41, %v1741, 0
    %v1789 = vsel %vm41, %v1742, 0
    %v1792 = vsel %vm41, %v1743, 0
    %v1795 = vsel %vm41, %v1744, 0
    %1797 = vmatprep.subr.mxu0 0.0
    %1798 = vmatpush1.msra.mxu0 %v1745
    %1799 = vmatprep.subr.mxu0 0.0
    %1800 = vmatpush1.msra.mxu0 %v1746
    %1801 = vmatprep.subr.mxu0 0.0
    %1802 = vmatpush1.msra.mxu0 %v1747
    %1803 = vmatprep.subr.mxu0 0.0
    %1804 = vmatpush1.msra.mxu0 %v1748
    %1805 = vmatprep.subr.mxu0 0.0
    %1806 = vmatpush1.msra.mxu0 0.0
    %1807 = vmatprep.subr.mxu0 0.0
    %1808 = vmatpush1.msra.mxu0 0.0
    %1809 = vmatprep.subr.mxu0 0.0
    %1810 = vmatpush1.msra.mxu0 0.0
    %1811 = vmatprep.subr.mxu0 0.0
    %1812 = vmatpush1.msra.mxu0 0.0
    %1813 = vmatprep.subr.mxu0 0.0
    %1814 = vmatpush1.msra.mxu0 0.0
    %1815 = vmatprep.subr.mxu0 0.0
    %1816 = vmatpush1.msra.mxu0 0.0
    %1817 = vmatprep.subr.mxu0 0.0
    %1818 = vmatpush1.msra.mxu0 0.0
    %1819 = vmatprep.subr.mxu0 0.0
    %1820 = vmatpush1.msra.mxu0 0.0
    %1821 = vmatprep.subr.mxu0 0.0
    %1822 = vmatpush1.msra.mxu0 0.0
    %1823 = vmatprep.subr.mxu0 0.0
    %1824 = vmatpush1.msra.mxu0 0.0
    %1825 = vmatprep.subr.mxu0 0.0
    %1826 = vmatpush1.msra.mxu0 0.0
    %1827 = vmatprep.subr.mxu0 0.0
    %1828 = vmatpush1.msra.mxu0 0.0
    %1829 = vmatprep.subr.mxu0 0.0
    %1830 = vmatpush1.msra.mxu0 0.0
    %1831 = vmatprep.subr.mxu0 0.0
    %1832 = vmatpush1.msra.mxu0 0.0
    %1833 = vmatprep.subr.mxu0 0.0
    %1834 = vmatpush1.msra.mxu0 0.0
    %1835 = vmatprep.subr.mxu0 0.0
    %1836 = vmatpush1.msra.mxu0 0.0
    %1837 = vmatprep.subr.mxu0 0.0
    %1838 = vmatpush1.msra.mxu0 0.0
    %1839 = vmatprep.subr.mxu0 0.0
    %1840 = vmatpush1.msra.mxu0 0.0
    %1841 = vmatprep.subr.mxu0 0.0
    %1842 = vmatpush1.msra.mxu0 0.0
    %1843 = vmatprep.subr.mxu0 0.0
    %1844 = vmatpush1.msra.mxu0 0.0
    %1845 = vmatprep.subr.mxu0 0.0
    %1846 = vmatpush1.msra.mxu0 0.0
    %1847 = vmatprep.subr.mxu0 0.0
    %1848 = vmatpush1.msra.mxu0 0.0
    %1849 = vmatprep.subr.mxu0 0.0
    %1850 = vmatpush1.msra.mxu0 0.0
    %1851 = vmatprep.subr.mxu0 0.0
    %1852 = vmatpush1.msra.mxu0 0.0
    %1853 = vmatprep.subr.mxu0 0.0
    %1854 = vmatpush1.msra.mxu0 0.0
    %1855 = vmatprep.subr.mxu0 0.0
    %1856 = vmatpush1.msra.mxu0 0.0
    %1857 = vmatprep.subr.mxu0 0.0
    %1858 = vmatpush1.msra.mxu0 0.0
    %1859 = vmatprep.subr.mxu0 0.0
    %1860 = vmatpush1.msra.mxu0 0.0
    %1861 = vmatprep.mubr.f32.mxu0 0.0
    %1862 = vmatmul.mubr.f32.gmra.mrb[0].mxu0 %v1750
    %v1863 = vpop.f32.mrb[0].mxu0
    %v1864 = vadd.f32 0.0, %v1863
    %v1865 = vpop.f32.mrb[0].mxu0
    %1866 = vmatprep.mubr.f32.mxu0 0.0
    %1867 = vmatmul.mubr.f32.gmra.mrb[0].mxu0 %v1753
    %v1868 = vpop.f32.mrb[0].mxu0
    %v1869 = vadd.f32 0.0, %v1868
    %v1870 = vpop.f32.mrb[0].mxu0
    %1871 = vmatprep.mubr.f32.mxu0 0.0
    %1872 = vmatmul.mubr.f32.gmra.mrb[0].mxu0 %v1756
    %v1873 = vpop.f32.mrb[0].mxu0
    %v1874 = vadd.f32 0.0, %v1873
    %v1875 = vpop.f32.mrb[0].mxu0
    %1876 = vmatprep.mubr.f32.mxu0 0.0
    %1877 = vmatmul.mubr.f32.gmra.mrb[0].mxu0 %v1759
    %v1878 = vpop.f32.mrb[0].mxu0
    %v1879 = vadd.f32 0.0, %v1878
    %v1880 = vpop.f32.mrb[0].mxu0
    %1881 = vmatprep.mubr.f32.mxu0 0.0
    %1882 = vmatmul.mubr.f32.gmra.mrb[0].mxu0 %v1762
    %v1883 = vpop.f32.mrb[0].mxu0
    %v1884 = vadd.f32 0.0, %v1883
    %v1885 = vpop.f32.mrb[0].mxu0
    %1886 = vmatprep.mubr.f32.mxu0 0.0
    %1887 = vmatmul.mubr.f32.gmra.mrb[0].mxu0 %v1765
    %v1888 = vpop.f32.mrb[0].mxu0
    %v1889 = vadd.f32 0.0, %v1888
    %v1890 = vpop.f32.mrb[0].mxu0
    %1891 = vmatprep.mubr.f32.mxu0 0.0
    %1892 = vmatmul.mubr.f32.gmra.mrb[0].mxu0 %v1768
    %v1893 = vpop.f32.mrb[0].mxu0
    %v1894 = vadd.f32 0.0, %v1893
    %v1895 = vpop.f32.mrb[0].mxu0
    %1896 = vmatprep.mubr.f32.mxu0 0.0
    %1897 = vmatmul.mubr.f32.gmra.mrb[0].mxu0 %v1771
    %v1898 = vpop.f32.mrb[0].mxu0
    %v1899 = vadd.f32 0.0, %v1898
    %v1900 = vpop.f32.mrb[0].mxu0
    %1901 = vmatprep.mubr.f32.mxu0 0.0
    %1902 = vmatmul.mubr.f32.gmra.mrb[0].mxu0 %v1774
    %v1903 = vpop.f32.mrb[0].mxu0
    %v1904 = vadd.f32 0.0, %v1903
    %v1905 = vpop.f32.mrb[0].mxu0
    %1906 = vmatprep.mubr.f32.mxu0 0.0
    %1907 = vmatmul.mubr.f32.gmra.mrb[0].mxu0 %v1777
    %v1908 = vpop.f32.mrb[0].mxu0
    %v1909 = vadd.f32 0.0, %v1908
    %v1910 = vpop.f32.mrb[0].mxu0
    %1911 = vmatprep.mubr.f32.mxu0 0.0
    %1912 = vmatmul.mubr.f32.gmra.mrb[0].mxu0 %v1780
    %v1913 = vpop.f32.mrb[0].mxu0
    %v1914 = vadd.f32 0.0, %v1913
    %v1915 = vpop.f32.mrb[0].mxu0
    %1916 = vmatprep.mubr.f32.mxu0 0.0
    %1917 = vmatmul.mubr.f32.gmra.mrb[0].mxu0 %v1783
    %v1918 = vpop.f32.mrb[0].mxu0
    %v1919 = vadd.f32 0.0, %v1918
    %v1920 = vpop.f32.mrb[0].mxu0
    %1921 = vmatprep.mubr.f32.mxu0 0.0
    %1922 = vmatmul.mubr.f32.gmra.mrb[0].mxu0 %v1786
    %v1923 = vpop.f32.mrb[0].mxu0
    %v1924 = vadd.f32 0.0, %v1923
    %v1925 = vpop.f32.mrb[0].mxu0
    %1926 = vmatprep.mubr.f32.mxu0 0.0
    %1927 = vmatmul.mubr.f32.gmra.mrb[0].mxu0 %v1789
    %v1928 = vpop.f32.mrb[0].mxu0
    %v1929 = vadd.f32 0.0, %v1928
    %v1930 = vpop.f32.mrb[0].mxu0
    %1931 = vmatprep.mubr.f32.mxu0 0.0
    %1932 = vmatmul.mubr.f32.gmra.mrb[0].mxu0 %v1792
    %v1933 = vpop.f32.mrb[0].mxu0
    %v1934 = vadd.f32 0.0, %v1933
    %v1935 = vpop.f32.mrb[0].mxu0
    %1936 = vmatprep.mubr.f32.mxu0 0.0
    %1937 = vmatmul.mubr.f32.gmra.mrb[0].mxu0 %v1795
    %v1938 = vpop.f32.mrb[0].mxu0
    %v1939 = vadd.f32 0.0, %v1938
    %v1940 = vpop.f32.mrb[0].mxu0
    %1941 = vdwg.mxu0
    %v1942 = vadd.f32 %v1712, %v1864
    %v1943 = vadd.f32 %v1713, %v1869
    %v1944 = vadd.f32 %v1714, %v1874
    %v1945 = vadd.f32 %v1715, %v1879
    %v1946 = vadd.f32 %v1716, %v1884
    %v1947 = vadd.f32 %v1717, %v1889
    %v1948 = vadd.f32 %v1718, %v1894
    %v1949 = vadd.f32 %v1719, %v1899
    %v1950 = vadd.f32 %v1720, %v1904
    %v1951 = vadd.f32 %v1721, %v1909
    %v1952 = vadd.f32 %v1722, %v1914
    %v1953 = vadd.f32 %v1723, %v1919
    %v1954 = vadd.f32 %v1724, %v1924
    %v1955 = vadd.f32 %v1725, %v1929
    %v1956 = vadd.f32 %v1726, %v1934
    %v1957 = vadd.f32 %v1727, %v1939
    %v1958 = vld [vmem:[%s1728 + $0x1] sm:$0xff]
    %v1959 = vld [vmem:[%s1728 + $0x11] sm:$0xff]
    %v1960 = vld [vmem:[%s1728 + $0x21] sm:$0xff]
    %v1961 = vld [vmem:[%s1728 + $0x31] sm:$0xff]
    %v1962 = vld [vmem:[%s1728 + $0x41] sm:$0xff]
    %v1963 = vld [vmem:[%s1728 + $0x51] sm:$0xff]
    %v1964 = vld [vmem:[%s1728 + $0x61] sm:$0xff]
    %v1965 = vld [vmem:[%s1728 + $0x71] sm:$0xff]
    %v1966 = vld [vmem:[%s1728 + $0xa1] sm:$0xff]
    %v1967 = vld [vmem:[%s1728 + $0xb1] sm:$0xff]
    %v1968 = vld [vmem:[%s1728 + $0xc1] sm:$0xff]
    %v1969 = vld [vmem:[%s1728 + $0xd1] sm:$0xff]
    %v1970 = vld [vmem:[%s1728 + $0xe1] sm:$0xff]
    %v1971 = vld [vmem:[%s1728 + $0xf1] sm:$0xff]
    %v1972 = vld [vmem:[%s1728 + $0x101] sm:$0xff]
    %v1973 = vld [vmem:[%s1728 + $0x111] sm:$0xff]
    %v1974 = vld [vmem:[#allocation4 + $0xe0] sm:$0xff]
    %v1975 = vld [vmem:[#allocation4 + $0xe8] sm:$0xff]
    %v1976 = vld [vmem:[#allocation4 + $0xf0] sm:$0xff]
    %v1977 = vld [vmem:[#allocation4 + $0xf8] sm:$0xff]
    %v1979 = vsel %vm41, %v1958, 0
    %v1982 = vsel %vm41, %v1959, 0
    %v1985 = vsel %vm41, %v1960, 0
    %v1988 = vsel %vm41, %v1961, 0
    %v1991 = vsel %vm41, %v1962, 0
    %v1994 = vsel %vm41, %v1963, 0
    %v1997 = vsel %vm41, %v1964, 0
    %v2000 = vsel %vm41, %v1965, 0
    %v2003 = vsel %vm41, %v1966, 0
    %v2006 = vsel %vm41, %v1967, 0
    %v2009 = vsel %vm41, %v1968, 0
    %v2012 = vsel %vm41, %v1969, 0
    %v2015 = vsel %vm41, %v1970, 0
    %v2018 = vsel %vm41, %v1971, 0
    %v2021 = vsel %vm41, %v1972, 0
    %v2024 = vsel %vm41, %v1973, 0
    %2026 = vmatprep.subr.mxu0 0.0
    %2027 = vmatpush1.msra.mxu0 %v1974
    %2028 = vmatprep.subr.mxu0 0.0
    %2029 = vmatpush1.msra.mxu0 %v1975
    %2030 = vmatprep.subr.mxu0 0.0
    %2031 = vmatpush1.msra.mxu0 %v1976
    %2032 = vmatprep.subr.mxu0 0.0
    %2033 = vmatpush1.msra.mxu0 %v1977
    %2034 = vmatprep.subr.mxu0 0.0
    %2035 = vmatpush1.msra.mxu0 0.0
    %2036 = vmatprep.subr.mxu0 0.0
    %2037 = vmatpush1.msra.mxu0 0.0
    %2038 = vmatprep.subr.mxu0 0.0
    %2039 = vmatpush1.msra.mxu0 0.0
    %2040 = vmatprep.subr.mxu0 0.0
    %2041 = vmatpush1.msra.mxu0 0.0
    %2042 = vmatprep.subr.mxu0 0.0
    %2043 = vmatpush1.msra.mxu0 0.0
    %2044 = vmatprep.subr.mxu0 0.0
    %2045 = vmatpush1.msra.mxu0 0.0
    %2046 = vmatprep.subr.mxu0 0.0
    %2047 = vmatpush1.msra.mxu0 0.0
    %2048 = vmatprep.subr.mxu0 0.0
    %2049 = vmatpush1.msra.mxu0 0.0
    %2050 = vmatprep.subr.mxu0 0.0
    %2051 = vmatpush1.msra.mxu0 0.0
    %2052 = vmatprep.subr.mxu0 0.0
    %2053 = vmatpush1.msra.mxu0 0.0
    %2054 = vmatprep.subr.mxu0 0.0
    %2055 = vmatpush1.msra.mxu0 0.0
    %2056 = vmatprep.subr.mxu0 0.0
    %2057 = vmatpush1.msra.mxu0 0.0
    %2058 = vmatprep.subr.mxu0 0.0
    %2059 = vmatpush1.msra.mxu0 0.0
    %2060 = vmatprep.subr.mxu0 0.0
    %2061 = vmatpush1.msra.mxu0 0.0
    %2062 = vmatprep.subr.mxu0 0.0
    %2063 = vmatpush1.msra.mxu0 0.0
    %2064 = vmatprep.subr.mxu0 0.0
    %2065 = vmatpush1.msra.mxu0 0.0
    %2066 = vmatprep.subr.mxu0 0.0
    %2067 = vmatpush1.msra.mxu0 0.0
    %2068 = vmatprep.subr.mxu0 0.0
    %2069 = vmatpush1.msra.mxu0 0.0
    %2070 = vmatprep.subr.mxu0 0.0
    %2071 = vmatpush1.msra.mxu0 0.0
    %2072 = vmatprep.subr.mxu0 0.0
    %2073 = vmatpush1.msra.mxu0 0.0
    %2074 = vmatprep.subr.mxu0 0.0
    %2075 = vmatpush1.msra.mxu0 0.0
    %2076 = vmatprep.subr.mxu0 0.0
    %2077 = vmatpush1.msra.mxu0 0.0
    %2078 = vmatprep.subr.mxu0 0.0
    %2079 = vmatpush1.msra.mxu0 0.0
    %2080 = vmatprep.subr.mxu0 0.0
    %2081 = vmatpush1.msra.mxu0 0.0
    %2082 = vmatprep.subr.mxu0 0.0
    %2083 = vmatpush1.msra.mxu0 0.0
    %2084 = vmatprep.subr.mxu0 0.0
    %2085 = vmatpush1.msra.mxu0 0.0
    %2086 = vmatprep.subr.mxu0 0.0
    %2087 = vmatpush1.msra.mxu0 0.0
    %2088 = vmatprep.subr.mxu0 0.0
    %2089 = vmatpush1.msra.mxu0 0.0
    %2090 = vmatprep.mubr.f32.mxu0 0.0
    %2091 = vmatmul.mubr.f32.gmra.mrb[0].mxu0 %v1979
    %v2092 = vpop.f32.mrb[0].mxu0
    %v2093 = vadd.f32 0.0, %v2092
    %v2094 = vpop.f32.mrb[0].mxu0
    %2095 = vmatprep.mubr.f32.mxu0 0.0
    %2096 = vmatmul.mubr.f32.gmra.mrb[0].mxu0 %v1982
    %v2097 = vpop.f32.mrb[0].mxu0
    %v2098 = vadd.f32 0.0, %v2097
    %v2099 = vpop.f32.mrb[0].mxu0
    %2100 = vmatprep.mubr.f32.mxu0 0.0
    %2101 = vmatmul.mubr.f32.gmra.mrb[0].mxu0 %v1985
    %v2102 = vpop.f32.mrb[0].mxu0
    %v2103 = vadd.f32 0.0, %v2102
    %v2104 = vpop.f32.mrb[0].mxu0
    %2105 = vmatprep.mubr.f32.mxu0 0.0
    %2106 = vmatmul.mubr.f32.gmra.mrb[0].mxu0 %v1988
    %v2107 = vpop.f32.mrb[0].mxu0
    %v2108 = vadd.f32 0.0, %v2107
    %v2109 = vpop.f32.mrb[0].mxu0
    %2110 = vmatprep.mubr.f32.mxu0 0.0
    %2111 = vmatmul.mubr.f32.gmra.mrb[0].mxu0 %v1991
    %v2112 = vpop.f32.mrb[0].mxu0
    %v2113 = vadd.f32 0.0, %v2112
    %v2114 = vpop.f32.mrb[0].mxu0
    %2115 = vmatprep.mubr.f32.mxu0 0.0
    %2116 = vmatmul.mubr.f32.gmra.mrb[0].mxu0 %v1994
    %v2117 = vpop.f32.mrb[0].mxu0
    %v2118 = vadd.f32 0.0, %v2117
    %v2119 = vpop.f32.mrb[0].mxu0
    %2120 = vmatprep.mubr.f32.mxu0 0.0
    %2121 = vmatmul.mubr.f32.gmra.mrb[0].mxu0 %v1997
    %v2122 = vpop.f32.mrb[0].mxu0
    %v2123 = vadd.f32 0.0, %v2122
    %v2124 = vpop.f32.mrb[0].mxu0
    %2125 = vmatprep.mubr.f32.mxu0 0.0
    %2126 = vmatmul.mubr.f32.gmra.mrb[0].mxu0 %v2000
    %v2127 = vpop.f32.mrb[0].mxu0
    %v2128 = vadd.f32 0.0, %v2127
    %v2129 = vpop.f32.mrb[0].mxu0
    %2130 = vmatprep.mubr.f32.mxu0 0.0
    %2131 = vmatmul.mubr.f32.gmra.mrb[0].mxu0 %v2003
    %v2132 = vpop.f32.mrb[0].mxu0
    %v2133 = vadd.f32 0.0, %v2132
    %v2134 = vpop.f32.mrb[0].mxu0
    %2135 = vmatprep.mubr.f32.mxu0 0.0
    %2136 = vmatmul.mubr.f32.gmra.mrb[0].mxu0 %v2006
    %v2137 = vpop.f32.mrb[0].mxu0
    %v2138 = vadd.f32 0.0, %v2137
    %v2139 = vpop.f32.mrb[0].mxu0
    %2140 = vmatprep.mubr.f32.mxu0 0.0
    %2141 = vmatmul.mubr.f32.gmra.mrb[0].mxu0 %v2009
    %v2142 = vpop.f32.mrb[0].mxu0
    %v2143 = vadd.f32 0.0, %v2142
    %v2144 = vpop.f32.mrb[0].mxu0
    %2145 = vmatprep.mubr.f32.mxu0 0.0
    %2146 = vmatmul.mubr.f32.gmra.mrb[0].mxu0 %v2012
    %v2147 = vpop.f32.mrb[0].mxu0
    %v2148 = vadd.f32 0.0, %v2147
    %v2149 = vpop.f32.mrb[0].mxu0
    %2150 = vmatprep.mubr.f32.mxu0 0.0
    %2151 = vmatmul.mubr.f32.gmra.mrb[0].mxu0 %v2015
    %v2152 = vpop.f32.mrb[0].mxu0
    %v2153 = vadd.f32 0.0, %v2152
    %v2154 = vpop.f32.mrb[0].mxu0
    %2155 = vmatprep.mubr.f32.mxu0 0.0
    %2156 = vmatmul.mubr.f32.gmra.mrb[0].mxu0 %v2018
    %v2157 = vpop.f32.mrb[0].mxu0
    %v2158 = vadd.f32 0.0, %v2157
    %v2159 = vpop.f32.mrb[0].mxu0
    %2160 = vmatprep.mubr.f32.mxu0 0.0
    %2161 = vmatmul.mubr.f32.gmra.mrb[0].mxu0 %v2021
    %v2162 = vpop.f32.mrb[0].mxu0
    %v2163 = vadd.f32 0.0, %v2162
    %v2164 = vpop.f32.mrb[0].mxu0
    %2165 = vmatprep.mubr.f32.mxu0 0.0
    %2166 = vmatmul.mubr.f32.gmra.mrb[0].mxu0 %v2024
    %v2167 = vpop.f32.mrb[0].mxu0
    %v2168 = vadd.f32 0.0, %v2167
    %v2169 = vpop.f32.mrb[0].mxu0
    %2170 = vdwg.mxu0
    %v2171 = vadd.f32 %v1942, %v2093
    %v2172 = vadd.f32 %v1943, %v2098
    %v2173 = vadd.f32 %v1944, %v2103
    %v2174 = vadd.f32 %v1945, %v2108
    %v2175 = vadd.f32 %v1946, %v2113
    %v2176 = vadd.f32 %v1947, %v2118
    %v2177 = vadd.f32 %v1948, %v2123
    %v2178 = vadd.f32 %v1949, %v2128
    %v2179 = vadd.f32 %v1950, %v2133
    %v2180 = vadd.f32 %v1951, %v2138
    %v2181 = vadd.f32 %v1952, %v2143
    %v2182 = vadd.f32 %v1953, %v2148
    %v2183 = vadd.f32 %v1954, %v2153
    %v2184 = vadd.f32 %v1955, %v2158
    %v2185 = vadd.f32 %v1956, %v2163
    %v2186 = vadd.f32 %v1957, %v2168
    %v2187 = vld [vmem:[%s1728 + $0x2] sm:$0xff]
    %v2188 = vld [vmem:[%s1728 + $0x12] sm:$0xff]
    %v2189 = vld [vmem:[%s1728 + $0x22] sm:$0xff]
    %v2190 = vld [vmem:[%s1728 + $0x32] sm:$0xff]
    %v2191 = vld [vmem:[%s1728 + $0x42] sm:$0xff]
    %v2192 = vld [vmem:[%s1728 + $0x52] sm:$0xff]
    %v2193 = vld [vmem:[%s1728 + $0x62] sm:$0xff]
    %v2194 = vld [vmem:[%s1728 + $0x72] sm:$0xff]
    %v2195 = vld [vmem:[%s1728 + $0xa2] sm:$0xff]
    %v2196 = vld [vmem:[%s1728 + $0xb2] sm:$0xff]
    %v2197 = vld [vmem:[%s1728 + $0xc2] sm:$0xff]
    %v2198 = vld [vmem:[%s1728 + $0xd2] sm:$0xff]
    %v2199 = vld [vmem:[%s1728 + $0xe2] sm:$0xff]
    %v2200 = vld [vmem:[%s1728 + $0xf2] sm:$0xff]
    %v2201 = vld [vmem:[%s1728 + $0x102] sm:$0xff]
    %v2202 = vld [vmem:[%s1728 + $0x112] sm:$0xff]
    %v2203 = vld [vmem:[#allocation4 + $0x100] sm:$0xff]
    %v2204 = vld [vmem:[#allocation4 + $0x108] sm:$0xff]
    %v2205 = vld [vmem:[#allocation4 + $0x110] sm:$0xff]
    %v2206 = vld [vmem:[#allocation4 + $0x118] sm:$0xff]
    %v2208 = vsel %vm41, %v2187, 0
    %v2211 = vsel %vm41, %v2188, 0
    %v2214 = vsel %vm41, %v2189, 0
    %v2217 = vsel %vm41, %v2190, 0
    %v2220 = vsel %vm41, %v2191, 0
    %v2223 = vsel %vm41, %v2192, 0
    %v2226 = vsel %vm41, %v2193, 0
    %v2229 = vsel %vm41, %v2194, 0
    %v2232 = vsel %vm41, %v2195, 0
    %v2235 = vsel %vm41, %v2196, 0
    %v2238 = vsel %vm41, %v2197, 0
    %v2241 = vsel %vm41, %v2198, 0
    %v2244 = vsel %vm41, %v2199, 0
    %v2247 = vsel %vm41, %v2200, 0
    %v2250 = vsel %vm41, %v2201, 0
    %v2253 = vsel %vm41, %v2202, 0
    %2255 = vmatprep.subr.mxu0 0.0
    %2256 = vmatpush1.msra.mxu0 %v2203
    %2257 = vmatprep.subr.mxu0 0.0
    %2258 = vmatpush1.msra.mxu0 %v2204
    %2259 = vmatprep.subr.mxu0 0.0
    %2260 = vmatpush1.msra.mxu0 %v2205
    %2261 = vmatprep.subr.mxu0 0.0
    %2262 = vmatpush1.msra.mxu0 %v2206
    %2263 = vmatprep.subr.mxu0 0.0
    %2264 = vmatpush1.msra.mxu0 0.0
    %2265 = vmatprep.subr.mxu0 0.0
    %2266 = vmatpush1.msra.mxu0 0.0
    %2267 = vmatprep.subr.mxu0 0.0
    %2268 = vmatpush1.msra.mxu0 0.0
    %2269 = vmatprep.subr.mxu0 0.0
    %2270 = vmatpush1.msra.mxu0 0.0
    %2271 = vmatprep.subr.mxu0 0.0
    %2272 = vmatpush1.msra.mxu0 0.0
    %2273 = vmatprep.subr.mxu0 0.0
    %2274 = vmatpush1.msra.mxu0 0.0
    %2275 = vmatprep.subr.mxu0 0.0
    %2276 = vmatpush1.msra.mxu0 0.0
    %2277 = vmatprep.subr.mxu0 0.0
    %2278 = vmatpush1.msra.mxu0 0.0
    %2279 = vmatprep.subr.mxu0 0.0
    %2280 = vmatpush1.msra.mxu0 0.0
    %2281 = vmatprep.subr.mxu0 0.0
    %2282 = vmatpush1.msra.mxu0 0.0
    %2283 = vmatprep.subr.mxu0 0.0
    %2284 = vmatpush1.msra.mxu0 0.0
    %2285 = vmatprep.subr.mxu0 0.0
    %2286 = vmatpush1.msra.mxu0 0.0
    %2287 = vmatprep.subr.mxu0 0.0
    %2288 = vmatpush1.msra.mxu0 0.0
    %2289 = vmatprep.subr.mxu0 0.0
    %2290 = vmatpush1.msra.mxu0 0.0
    %2291 = vmatprep.subr.mxu0 0.0
    %2292 = vmatpush1.msra.mxu0 0.0
    %2293 = vmatprep.subr.mxu0 0.0
    %2294 = vmatpush1.msra.mxu0 0.0
    %2295 = vmatprep.subr.mxu0 0.0
    %2296 = vmatpush1.msra.mxu0 0.0
    %2297 = vmatprep.subr.mxu0 0.0
    %2298 = vmatpush1.msra.mxu0 0.0
    %2299 = vmatprep.subr.mxu0 0.0
    %2300 = vmatpush1.msra.mxu0 0.0
    %2301 = vmatprep.subr.mxu0 0.0
    %2302 = vmatpush1.msra.mxu0 0.0
    %2303 = vmatprep.subr.mxu0 0.0
    %2304 = vmatpush1.msra.mxu0 0.0
    %2305 = vmatprep.subr.mxu0 0.0
    %2306 = vmatpush1.msra.mxu0 0.0
    %2307 = vmatprep.subr.mxu0 0.0
    %2308 = vmatpush1.msra.mxu0 0.0
    %2309 = vmatprep.subr.mxu0 0.0
    %2310 = vmatpush1.msra.mxu0 0.0
    %2311 = vmatprep.subr.mxu0 0.0
    %2312 = vmatpush1.msra.mxu0 0.0
    %2313 = vmatprep.subr.mxu0 0.0
    %2314 = vmatpush1.msra.mxu0 0.0
    %2315 = vmatprep.subr.mxu0 0.0
    %2316 = vmatpush1.msra.mxu0 0.0
    %2317 = vmatprep.subr.mxu0 0.0
    %2318 = vmatpush1.msra.mxu0 0.0
    %2319 = vmatprep.mubr.f32.mxu0 0.0
    %2320 = vmatmul.mubr.f32.gmra.mrb[0].mxu0 %v2208
    %v2321 = vpop.f32.mrb[0].mxu0
    %v2322 = vadd.f32 0.0, %v2321
    %v2323 = vpop.f32.mrb[0].mxu0
    %2324 = vmatprep.mubr.f32.mxu0 0.0
    %2325 = vmatmul.mubr.f32.gmra.mrb[0].mxu0 %v2211
    %v2326 = vpop.f32.mrb[0].mxu0
    %v2327 = vadd.f32 0.0, %v2326
    %v2328 = vpop.f32.mrb[0].mxu0
    %2329 = vmatprep.mubr.f32.mxu0 0.0
    %2330 = vmatmul.mubr.f32.gmra.mrb[0].mxu0 %v2214
    %v2331 = vpop.f32.mrb[0].mxu0
    %v2332 = vadd.f32 0.0, %v2331
    %v2333 = vpop.f32.mrb[0].mxu0
    %2334 = vmatprep.mubr.f32.mxu0 0.0
    %2335 = vmatmul.mubr.f32.gmra.mrb[0].mxu0 %v2217
    %v2336 = vpop.f32.mrb[0].mxu0
    %v2337 = vadd.f32 0.0, %v2336
    %v2338 = vpop.f32.mrb[0].mxu0
    %2339 = vmatprep.mubr.f32.mxu0 0.0
    %2340 = vmatmul.mubr.f32.gmra.mrb[0].mxu0 %v2220
    %v2341 = vpop.f32.mrb[0].mxu0
    %v2342 = vadd.f32 0.0, %v2341
    %v2343 = vpop.f32.mrb[0].mxu0
    %2344 = vmatprep.mubr.f32.mxu0 0.0
    %2345 = vmatmul.mubr.f32.gmra.mrb[0].mxu0 %v2223
    %v2346 = vpop.f32.mrb[0].mxu0
    %v2347 = vadd.f32 0.0, %v2346
    %v2348 = vpop.f32.mrb[0].mxu0
    %2349 = vmatprep.mubr.f32.mxu0 0.0
    %2350 = vmatmul.mubr.f32.gmra.mrb[0].mxu0 %v2226
    %v2351 = vpop.f32.mrb[0].mxu0
    %v2352 = vadd.f32 0.0, %v2351
    %v2353 = vpop.f32.mrb[0].mxu0
    %2354 = vmatprep.mubr.f32.mxu0 0.0
    %2355 = vmatmul.mubr.f32.gmra.mrb[0].mxu0 %v2229
    %v2356 = vpop.f32.mrb[0].mxu0
    %v2357 = vadd.f32 0.0, %v2356
    %v2358 = vpop.f32.mrb[0].mxu0
    %2359 = vmatprep.mubr.f32.mxu0 0.0
    %2360 = vmatmul.mubr.f32.gmra.mrb[0].mxu0 %v2232
    %v2361 = vpop.f32.mrb[0].mxu0
    %v2362 = vadd.f32 0.0, %v2361
    %v2363 = vpop.f32.mrb[0].mxu0
    %2364 = vmatprep.mubr.f32.mxu0 0.0
    %2365 = vmatmul.mubr.f32.gmra.mrb[0].mxu0 %v2235
    %v2366 = vpop.f32.mrb[0].mxu0
    %v2367 = vadd.f32 0.0, %v2366
    %v2368 = vpop.f32.mrb[0].mxu0
    %2369 = vmatprep.mubr.f32.mxu0 0.0
    %2370 = vmatmul.mubr.f32.gmra.mrb[0].mxu0 %v2238
    %v2371 = vpop.f32.mrb[0].mxu0
    %v2372 = vadd.f32 0.0, %v2371
    %v2373 = vpop.f32.mrb[0].mxu0
    %2374 = vmatprep.mubr.f32.mxu0 0.0
    %2375 = vmatmul.mubr.f32.gmra.mrb[0].mxu0 %v2241
    %v2376 = vpop.f32.mrb[0].mxu0
    %v2377 = vadd.f32 0.0, %v2376
    %v2378 = vpop.f32.mrb[0].mxu0
    %2379 = vmatprep.mubr.f32.mxu0 0.0
    %2380 = vmatmul.mubr.f32.gmra.mrb[0].mxu0 %v2244
    %v2381 = vpop.f32.mrb[0].mxu0
    %v2382 = vadd.f32 0.0, %v2381
    %v2383 = vpop.f32.mrb[0].mxu0
    %2384 = vmatprep.mubr.f32.mxu0 0.0
    %2385 = vmatmul.mubr.f32.gmra.mrb[0].mxu0 %v2247
    %v2386 = vpop.f32.mrb[0].mxu0
    %v2387 = vadd.f32 0.0, %v2386
    %v2388 = vpop.f32.mrb[0].mxu0
    %2389 = vmatprep.mubr.f32.mxu0 0.0
    %2390 = vmatmul.mubr.f32.gmra.mrb[0].mxu0 %v2250
    %v2391 = vpop.f32.mrb[0].mxu0
    %v2392 = vadd.f32 0.0, %v2391
    %v2393 = vpop.f32.mrb[0].mxu0
    %2394 = vmatprep.mubr.f32.mxu0 0.0
    %2395 = vmatmul.mubr.f32.gmra.mrb[0].mxu0 %v2253
    %v2396 = vpop.f32.mrb[0].mxu0
    %v2397 = vadd.f32 0.0, %v2396
    %v2398 = vpop.f32.mrb[0].mxu0
    %2399 = vdwg.mxu0
    %v2400 = vadd.f32 %v2171, %v2322
    %v2401 = vadd.f32 %v2172, %v2327
    %v2402 = vadd.f32 %v2173, %v2332
    %v2403 = vadd.f32 %v2174, %v2337
    %v2404 = vadd.f32 %v2175, %v2342
    %v2405 = vadd.f32 %v2176, %v2347
    %v2406 = vadd.f32 %v2177, %v2352
    %v2407 = vadd.f32 %v2178, %v2357
    %v2408 = vadd.f32 %v2179, %v2362
    %v2409 = vadd.f32 %v2180, %v2367
    %v2410 = vadd.f32 %v2181, %v2372
    %v2411 = vadd.f32 %v2182, %v2377
    %v2412 = vadd.f32 %v2183, %v2382
    %v2413 = vadd.f32 %v2184, %v2387
    %v2414 = vadd.f32 %v2185, %v2392
    %v2415 = vadd.f32 %v2186, %v2397
    %v2416 = vld [vmem:[%s4] sm:$0x1]
    %v2418 = vlaneseq
    %v2419 = vshrl.u32 %v2418, 7
    %v2420 = vsub.s32 0, %v2419
    %v2421 = vrot.slane %v2416, %v2420
    %v2423 = vadd.f32 %v2400, %v2421
    %v2424 = vadd.f32 %v2401, %v2421
    %v2425 = vadd.f32 %v2402, %v2421
    %v2426 = vadd.f32 %v2403, %v2421
    %v2427 = vadd.f32 %v2404, %v2421
    %v2428 = vadd.f32 %v2405, %v2421
    %v2429 = vadd.f32 %v2406, %v2421
    %v2430 = vadd.f32 %v2407, %v2421
    %v2431 = vadd.f32 %v2408, %v2421
    %v2432 = vadd.f32 %v2409, %v2421
    %v2433 = vadd.f32 %v2410, %v2421
    %v2434 = vadd.f32 %v2411, %v2421
    %v2435 = vadd.f32 %v2412, %v2421
    %v2436 = vadd.f32 %v2413, %v2421
    %v2437 = vadd.f32 %v2414, %v2421
    %v2438 = vadd.f32 %v2415, %v2421
    %v2439 = vmax.f32 %v2423, 0.0
    %v2440 = vmax.f32 %v2424, 0.0
    %v2441 = vmax.f32 %v2425, 0.0
    %v2442 = vmax.f32 %v2426, 0.0
    %v2443 = vmax.f32 %v2427, 0.0
    %v2444 = vmax.f32 %v2428, 0.0
    %v2445 = vmax.f32 %v2429, 0.0
    %v2446 = vmax.f32 %v2430, 0.0
    %v2447 = vmax.f32 %v2431, 0.0
    %v2448 = vmax.f32 %v2432, 0.0
    %v2449 = vmax.f32 %v2433, 0.0
    %v2450 = vmax.f32 %v2434, 0.0
    %v2451 = vmax.f32 %v2435, 0.0
    %v2452 = vmax.f32 %v2436, 0.0
    %v2453 = vmax.f32 %v2437, 0.0
    %v2454 = vmax.f32 %v2438, 0.0
    %2455 = vst.msk [vmem:[%s97 + $0x1] sm:$0xff] %vm86, %v2439
    %2456 = vst.msk [vmem:[%s97 + $0x11] sm:$0xff] %vm86, %v2440
    %2457 = vst.msk [vmem:[%s97 + $0x21] sm:$0xff] %vm86, %v2441
    %2458 = vst.msk [vmem:[%s97 + $0x31] sm:$0xff] %vm86, %v2442
    %2459 = vst.msk [vmem:[%s97 + $0x41] sm:$0xff] %vm86, %v2443
    %2460 = vst.msk [vmem:[%s97 + $0x51] sm:$0xff] %vm86, %v2444
    %2461 = vst.msk [vmem:[%s97 + $0x61] sm:$0xff] %vm86, %v2445
    %2462 = vst.msk [vmem:[%s97 + $0x71] sm:$0xff] %vm86, %v2446
    %2463 = vst.msk [vmem:[%s97 + $0xa1] sm:$0xff] %vm86, %v2447
    %2464 = vst.msk [vmem:[%s97 + $0xb1] sm:$0xff] %vm86, %v2448
    %2465 = vst.msk [vmem:[%s97 + $0xc1] sm:$0xff] %vm86, %v2449
    %2466 = vst.msk [vmem:[%s97 + $0xd1] sm:$0xff] %vm86, %v2450
    %2467 = vst.msk [vmem:[%s97 + $0xe1] sm:$0xff] %vm86, %v2451
    %2468 = vst.msk [vmem:[%s97 + $0xf1] sm:$0xff] %vm86, %v2452
    %2469 = vst.msk [vmem:[%s97 + $0x101] sm:$0xff] %vm86, %v2453
    %2470 = vst.msk [vmem:[%s97 + $0x111] sm:$0xff] %vm86, %v2454
    %v2471 = vld [vmem:[#allocation3] sm:$0xff]
    %v2472 = vld [vmem:[#allocation3 + $0x10] sm:$0xff]
    %v2473 = vld [vmem:[#allocation3 + $0x20] sm:$0xff]
    %v2474 = vld [vmem:[#allocation3 + $0x30] sm:$0xff]
    %v2475 = vld [vmem:[#allocation3 + $0x40] sm:$0xff]
    %v2476 = vld [vmem:[#allocation3 + $0x50] sm:$0xff]
    %v2477 = vld [vmem:[#allocation3 + $0x60] sm:$0xff]
    %v2478 = vld [vmem:[#allocation3 + $0x70] sm:$0xff]
    %v2479 = vld [vmem:[#allocation3 + $0xa0] sm:$0xff]
    %v2480 = vld [vmem:[#allocation3 + $0xb0] sm:$0xff]
    %v2481 = vld [vmem:[#allocation3 + $0xc0] sm:$0xff]
    %v2482 = vld [vmem:[#allocation3 + $0xd0] sm:$0xff]
    %v2483 = vld [vmem:[#allocation3 + $0xe0] sm:$0xff]
    %v2484 = vld [vmem:[#allocation3 + $0xf0] sm:$0xff]
    %v2485 = vld [vmem:[#allocation3 + $0x100] sm:$0xff]
    %v2486 = vld [vmem:[#allocation3 + $0x110] sm:$0xff]
    %v2487 = vld [vmem:[%s5] sm:$0xff]
    %v2488 = vld [vmem:[%s5 + $0x8] sm:$0xff]
    %v2489 = vld [vmem:[%s5 + $0x10] sm:$0xff]
    %v2490 = vld [vmem:[%s5 + $0x18] sm:$0xff]
    %v2491 = vld [vmem:[%s5 + $0x20] sm:$0xff]
    %v2492 = vld [vmem:[%s5 + $0x28] sm:$0xff]
    %v2493 = vld [vmem:[%s5 + $0x30] sm:$0xff]
    %v2494 = vld [vmem:[%s5 + $0x38] sm:$0xff]
    %v2495 = vld [vmem:[#allocation3 + $0x1] sm:$0xff]
    %v2496 = vld [vmem:[#allocation3 + $0x11] sm:$0xff]
    %v2497 = vld [vmem:[#allocation3 + $0x21] sm:$0xff]
    %v2498 = vld [vmem:[#allocation3 + $0x31] sm:$0xff]
    %v2499 = vld [vmem:[#allocation3 + $0x41] sm:$0xff]
    %v2500 = vld [vmem:[#allocation3 + $0x51] sm:$0xff]
    %v2501 = vld [vmem:[#allocation3 + $0x61] sm:$0xff]
    %v2502 = vld [vmem:[#allocation3 + $0x71] sm:$0xff]
    %v2503 = vld [vmem:[#allocation3 + $0xa1] sm:$0xff]
    %v2504 = vld [vmem:[#allocation3 + $0xb1] sm:$0xff]
    %v2505 = vld [vmem:[#allocation3 + $0xc1] sm:$0xff]
    %v2506 = vld [vmem:[#allocation3 + $0xd1] sm:$0xff]
    %v2507 = vld [vmem:[#allocation3 + $0xe1] sm:$0xff]
    %v2508 = vld [vmem:[#allocation3 + $0xf1] sm:$0xff]
    %v2509 = vld [vmem:[#allocation3 + $0x101] sm:$0xff]
    %v2510 = vld [vmem:[#allocation3 + $0x111] sm:$0xff]
    %v2511 = vld [vmem:[%s5 + $0x40] sm:$0xff]
    %v2512 = vld [vmem:[%s5 + $0x48] sm:$0xff]
    %v2513 = vld [vmem:[%s5 + $0x50] sm:$0xff]
    %v2514 = vld [vmem:[%s5 + $0x58] sm:$0xff]
    %v2515 = vld [vmem:[%s5 + $0x60] sm:$0xff]
    %v2516 = vld [vmem:[%s5 + $0x68] sm:$0xff]
    %v2517 = vld [vmem:[%s5 + $0x70] sm:$0xff]
    %v2518 = vld [vmem:[%s5 + $0x78] sm:$0xff]
    %v2520 = vsel %vm86, %v2495, 0
    %v2523 = vsel %vm86, %v2496, 0
    %v2526 = vsel %vm86, %v2497, 0
    %v2529 = vsel %vm86, %v2498, 0
    %v2532 = vsel %vm86, %v2499, 0
    %v2535 = vsel %vm86, %v2500, 0
    %v2538 = vsel %vm86, %v2501, 0
    %v2541 = vsel %vm86, %v2502, 0
    %v2544 = vsel %vm86, %v2503, 0
    %v2547 = vsel %vm86, %v2504, 0
    %v2550 = vsel %vm86, %v2505, 0
    %v2553 = vsel %vm86, %v2506, 0
    %v2556 = vsel %vm86, %v2507, 0
    %v2559 = vsel %vm86, %v2508, 0
    %v2562 = vsel %vm86, %v2509, 0
    %v2565 = vsel %vm86, %v2510, 0
    %2567 = vmatprep.subr.mxu0 0.0
    %2568 = vmatpush1.msra.mxu0 %v2511
    %2569 = vmatprep.subr.mxu0 0.0
    %2570 = vmatpush1.msra.mxu0 %v2512
    %2571 = vmatprep.subr.mxu0 0.0
    %2572 = vmatpush1.msra.mxu0 %v2513
    %2573 = vmatprep.subr.mxu0 0.0
    %2574 = vmatpush1.msra.mxu0 %v2514
    %2575 = vmatprep.subr.mxu0 0.0
    %2576 = vmatpush1.msra.mxu0 %v2515
    %2577 = vmatprep.subr.mxu0 0.0
    %2578 = vmatpush1.msra.mxu0 %v2516
    %2579 = vmatprep.subr.mxu0 0.0
    %2580 = vmatpush1.msra.mxu0 %v2517
    %2581 = vmatprep.subr.mxu0 0.0
    %2582 = vmatpush1.msra.mxu0 %v2518
    %2583 = vmatprep.subr.mxu0 0.0
    %2584 = vmatpush1.msra.mxu0 0.0
    %2585 = vmatprep.subr.mxu0 0.0
    %2586 = vmatpush1.msra.mxu0 0.0
    %2587 = vmatprep.subr.mxu0 0.0
    %2588 = vmatpush1.msra.mxu0 0.0
    %2589 = vmatprep.subr.mxu0 0.0
    %2590 = vmatpush1.msra.mxu0 0.0
    %2591 = vmatprep.subr.mxu0 0.0
    %2592 = vmatpush1.msra.mxu0 0.0
    %2593 = vmatprep.subr.mxu0 0.0
    %2594 = vmatpush1.msra.mxu0 0.0
    %2595 = vmatprep.subr.mxu0 0.0
    %2596 = vmatpush1.msra.mxu0 0.0
    %2597 = vmatprep.subr.mxu0 0.0
    %2598 = vmatpush1.msra.mxu0 0.0
    %2599 = vmatprep.subr.mxu0 0.0
    %2600 = vmatpush1.msra.mxu0 0.0
    %2601 = vmatprep.subr.mxu0 0.0
    %2602 = vmatpush1.msra.mxu0 0.0
    %2603 = vmatprep.subr.mxu0 0.0
    %2604 = vmatpush1.msra.mxu0 0.0
    %2605 = vmatprep.subr.mxu0 0.0
    %2606 = vmatpush1.msra.mxu0 0.0
    %2607 = vmatprep.subr.mxu0 0.0
    %2608 = vmatpush1.msra.mxu0 0.0
    %2609 = vmatprep.subr.mxu0 0.0
    %2610 = vmatpush1.msra.mxu0 0.0
    %2611 = vmatprep.subr.mxu0 0.0
    %2612 = vmatpush1.msra.mxu0 0.0
    %2613 = vmatprep.subr.mxu0 0.0
    %2614 = vmatpush1.msra.mxu0 0.0
    %2615 = vmatprep.subr.mxu0 0.0
    %2616 = vmatpush1.msra.mxu0 0.0
    %2617 = vmatprep.subr.mxu0 0.0
    %2618 = vmatpush1.msra.mxu0 0.0
    %2619 = vmatprep.subr.mxu0 0.0
    %2620 = vmatpush1.msra.mxu0 0.0
    %2621 = vmatprep.subr.mxu0 0.0
    %2622 = vmatpush1.msra.mxu0 0.0
    %2623 = vmatprep.subr.mxu0 0.0
    %2624 = vmatpush1.msra.mxu0 0.0
    %2625 = vmatprep.subr.mxu0 0.0
    %2626 = vmatpush1.msra.mxu0 0.0
    %2627 = vmatprep.subr.mxu0 0.0
    %2628 = vmatpush1.msra.mxu0 0.0
    %2629 = vmatprep.subr.mxu0 0.0
    %2630 = vmatpush1.msra.mxu0 0.0
    %2631 = vmatprep.mubr.f32.mxu0 0.0
    %2632 = vmatmul.mubr.f32.gmra.mrb[0].mxu0 %v2520
    %v2633 = vpop.f32.mrb[0].mxu0
    %v2634 = vadd.f32 0.0, %v2633
    %v2635 = vpop.f32.mrb[0].mxu0
    %2636 = vmatprep.mubr.f32.mxu0 0.0
    %2637 = vmatmul.mubr.f32.gmra.mrb[0].mxu0 %v2523
    %v2638 = vpop.f32.mrb[0].mxu0
    %v2639 = vadd.f32 0.0, %v2638
    %v2640 = vpop.f32.mrb[0].mxu0
    %2641 = vmatprep.mubr.f32.mxu0 0.0
    %2642 = vmatmul.mubr.f32.gmra.mrb[0].mxu0 %v2526
    %v2643 = vpop.f32.mrb[0].mxu0
    %v2644 = vadd.f32 0.0, %v2643
    %v2645 = vpop.f32.mrb[0].mxu0
    %2646 = vmatprep.mubr.f32.mxu0 0.0
    %2647 = vmatmul.mubr.f32.gmra.mrb[0].mxu0 %v2529
    %v2648 = vpop.f32.mrb[0].mxu0
    %v2649 = vadd.f32 0.0, %v2648
    %v2650 = vpop.f32.mrb[0].mxu0
    %2651 = vmatprep.mubr.f32.mxu0 0.0
    %2652 = vmatmul.mubr.f32.gmra.mrb[0].mxu0 %v2532
    %v2653 = vpop.f32.mrb[0].mxu0
    %v2654 = vadd.f32 0.0, %v2653
    %v2655 = vpop.f32.mrb[0].mxu0
    %2656 = vmatprep.mubr.f32.mxu0 0.0
    %2657 = vmatmul.mubr.f32.gmra.mrb[0].mxu0 %v2535
    %v2658 = vpop.f32.mrb[0].mxu0
    %v2659 = vadd.f32 0.0, %v2658
    %v2660 = vpop.f32.mrb[0].mxu0
    %2661 = vmatprep.mubr.f32.mxu0 0.0
    %2662 = vmatmul.mubr.f32.gmra.mrb[0].mxu0 %v2538
    %v2663 = vpop.f32.mrb[0].mxu0
    %v2664 = vadd.f32 0.0, %v2663
    %v2665 = vpop.f32.mrb[0].mxu0
    %2666 = vmatprep.mubr.f32.mxu0 0.0
    %2667 = vmatmul.mubr.f32.gmra.mrb[0].mxu0 %v2541
    %v2668 = vpop.f32.mrb[0].mxu0
    %v2669 = vadd.f32 0.0, %v2668
    %v2670 = vpop.f32.mrb[0].mxu0
    %2671 = vmatprep.mubr.f32.mxu0 0.0
    %2672 = vmatmul.mubr.f32.gmra.mrb[0].mxu0 %v2544
    %v2673 = vpop.f32.mrb[0].mxu0
    %v2674 = vadd.f32 0.0, %v2673
    %v2675 = vpop.f32.mrb[0].mxu0
    %2676 = vmatprep.mubr.f32.mxu0 0.0
    %2677 = vmatmul.mubr.f32.gmra.mrb[0].mxu0 %v2547
    %v2678 = vpop.f32.mrb[0].mxu0
    %v2679 = vadd.f32 0.0, %v2678
    %v2680 = vpop.f32.mrb[0].mxu0
    %2681 = vmatprep.mubr.f32.mxu0 0.0
    %2682 = vmatmul.mubr.f32.gmra.mrb[0].mxu0 %v2550
    %v2683 = vpop.f32.mrb[0].mxu0
    %v2684 = vadd.f32 0.0, %v2683
    %v2685 = vpop.f32.mrb[0].mxu0
    %2686 = vmatprep.mubr.f32.mxu0 0.0
    %2687 = vmatmul.mubr.f32.gmra.mrb[0].mxu0 %v2553
    %v2688 = vpop.f32.mrb[0].mxu0
    %v2689 = vadd.f32 0.0, %v2688
    %v2690 = vpop.f32.mrb[0].mxu0
    %2691 = vmatprep.mubr.f32.mxu0 0.0
    %2692 = vmatmul.mubr.f32.gmra.mrb[0].mxu0 %v2556
    %v2693 = vpop.f32.mrb[0].mxu0
    %v2694 = vadd.f32 0.0, %v2693
    %v2695 = vpop.f32.mrb[0].mxu0
    %2696 = vmatprep.mubr.f32.mxu0 0.0
    %2697 = vmatmul.mubr.f32.gmra.mrb[0].mxu0 %v2559
    %v2698 = vpop.f32.mrb[0].mxu0
    %v2699 = vadd.f32 0.0, %v2698
    %v2700 = vpop.f32.mrb[0].mxu0
    %2701 = vmatprep.mubr.f32.mxu0 0.0
    %2702 = vmatmul.mubr.f32.gmra.mrb[0].mxu0 %v2562
    %v2703 = vpop.f32.mrb[0].mxu0
    %v2704 = vadd.f32 0.0, %v2703
    %v2705 = vpop.f32.mrb[0].mxu0
    %2706 = vmatprep.mubr.f32.mxu0 0.0
    %2707 = vmatmul.mubr.f32.gmra.mrb[0].mxu0 %v2565
    %v2708 = vpop.f32.mrb[0].mxu0
    %v2709 = vadd.f32 0.0, %v2708
    %v2710 = vpop.f32.mrb[0].mxu0
    %2711 = vdwg.mxu0
    %v2713 = vsel %vm86, %v2471, 0
    %v2716 = vsel %vm86, %v2472, 0
    %v2719 = vsel %vm86, %v2473, 0
    %v2722 = vsel %vm86, %v2474, 0
    %v2725 = vsel %vm86, %v2475, 0
    %v2728 = vsel %vm86, %v2476, 0
    %v2731 = vsel %vm86, %v2477, 0
    %v2734 = vsel %vm86, %v2478, 0
    %v2737 = vsel %vm86, %v2479, 0
    %v2740 = vsel %vm86, %v2480, 0
    %v2743 = vsel %vm86, %v2481, 0
    %v2746 = vsel %vm86, %v2482, 0
    %v2749 = vsel %vm86, %v2483, 0
    %v2752 = vsel %vm86, %v2484, 0
    %v2755 = vsel %vm86, %v2485, 0
    %v2758 = vsel %vm86, %v2486, 0
    %2760 = vmatprep.subr.mxu0 0.0
    %2761 = vmatpush1.msra.mxu0 %v2487
    %2762 = vmatprep.subr.mxu0 0.0
    %2763 = vmatpush1.msra.mxu0 %v2488
    %2764 = vmatprep.subr.mxu0 0.0
    %2765 = vmatpush1.msra.mxu0 %v2489
    %2766 = vmatprep.subr.mxu0 0.0
    %2767 = vmatpush1.msra.mxu0 %v2490
    %2768 = vmatprep.subr.mxu0 0.0
    %2769 = vmatpush1.msra.mxu0 %v2491
    %2770 = vmatprep.subr.mxu0 0.0
    %2771 = vmatpush1.msra.mxu0 %v2492
    %2772 = vmatprep.subr.mxu0 0.0
    %2773 = vmatpush1.msra.mxu0 %v2493
    %2774 = vmatprep.subr.mxu0 0.0
    %2775 = vmatpush1.msra.mxu0 %v2494
    %2776 = vmatprep.subr.mxu0 0.0
    %2777 = vmatpush1.msra.mxu0 0.0
    %2778 = vmatprep.subr.mxu0 0.0
    %2779 = vmatpush1.msra.mxu0 0.0
    %2780 = vmatprep.subr.mxu0 0.0
    %2781 = vmatpush1.msra.mxu0 0.0
    %2782 = vmatprep.subr.mxu0 0.0
    %2783 = vmatpush1.msra.mxu0 0.0
    %2784 = vmatprep.subr.mxu0 0.0
    %2785 = vmatpush1.msra.mxu0 0.0
    %2786 = vmatprep.subr.mxu0 0.0
    %2787 = vmatpush1.msra.mxu0 0.0
    %2788 = vmatprep.subr.mxu0 0.0
    %2789 = vmatpush1.msra.mxu0 0.0
    %2790 = vmatprep.subr.mxu0 0.0
    %2791 = vmatpush1.msra.mxu0 0.0
    %2792 = vmatprep.subr.mxu0 0.0
    %2793 = vmatpush1.msra.mxu0 0.0
    %2794 = vmatprep.subr.mxu0 0.0
    %2795 = vmatpush1.msra.mxu0 0.0
    %2796 = vmatprep.subr.mxu0 0.0
    %2797 = vmatpush1.msra.mxu0 0.0
    %2798 = vmatprep.subr.mxu0 0.0
    %2799 = vmatpush1.msra.mxu0 0.0
    %2800 = vmatprep.subr.mxu0 0.0
    %2801 = vmatpush1.msra.mxu0 0.0
    %2802 = vmatprep.subr.mxu0 0.0
    %2803 = vmatpush1.msra.mxu0 0.0
    %2804 = vmatprep.subr.mxu0 0.0
    %2805 = vmatpush1.msra.mxu0 0.0
    %2806 = vmatprep.subr.mxu0 0.0
    %2807 = vmatpush1.msra.mxu0 0.0
    %2808 = vmatprep.subr.mxu0 0.0
    %2809 = vmatpush1.msra.mxu0 0.0
    %2810 = vmatprep.subr.mxu0 0.0
    %2811 = vmatpush1.msra.mxu0 0.0
    %2812 = vmatprep.subr.mxu0 0.0
    %2813 = vmatpush1.msra.mxu0 0.0
    %2814 = vmatprep.subr.mxu0 0.0
    %2815 = vmatpush1.msra.mxu0 0.0
    %2816 = vmatprep.subr.mxu0 0.0
    %2817 = vmatpush1.msra.mxu0 0.0
    %2818 = vmatprep.subr.mxu0 0.0
    %2819 = vmatpush1.msra.mxu0 0.0
    %2820 = vmatprep.subr.mxu0 0.0
    %2821 = vmatpush1.msra.mxu0 0.0
    %2822 = vmatprep.subr.mxu0 0.0
    %2823 = vmatpush1.msra.mxu0 0.0
    %2824 = vmatprep.mubr.f32.mxu0 0.0
    %2825 = vmatmul.mubr.f32.gmra.mrb[0].mxu0 %v2713
    %v2826 = vpop.f32.mrb[0].mxu0
    %v2827 = vadd.f32 %v2634, %v2826
    %v2828 = vpop.f32.mrb[0].mxu0
    %2829 = vmatprep.mubr.f32.mxu0 0.0
    %2830 = vmatmul.mubr.f32.gmra.mrb[0].mxu0 %v2716
    %v2831 = vpop.f32.mrb[0].mxu0
    %v2832 = vadd.f32 %v2639, %v2831
    %v2833 = vpop.f32.mrb[0].mxu0
    %2834 = vmatprep.mubr.f32.mxu0 0.0
    %2835 = vmatmul.mubr.f32.gmra.mrb[0].mxu0 %v2719
    %v2836 = vpop.f32.mrb[0].mxu0
    %v2837 = vadd.f32 %v2644, %v2836
    %v2838 = vpop.f32.mrb[0].mxu0
    %2839 = vmatprep.mubr.f32.mxu0 0.0
    %2840 = vmatmul.mubr.f32.gmra.mrb[0].mxu0 %v2722
    %v2841 = vpop.f32.mrb[0].mxu0
    %v2842 = vadd.f32 %v2649, %v2841
    %v2843 = vpop.f32.mrb[0].mxu0
    %2844 = vmatprep.mubr.f32.mxu0 0.0
    %2845 = vmatmul.mubr.f32.gmra.mrb[0].mxu0 %v2725
    %v2846 = vpop.f32.mrb[0].mxu0
    %v2847 = vadd.f32 %v2654, %v2846
    %v2848 = vpop.f32.mrb[0].mxu0
    %2849 = vmatprep.mubr.f32.mxu0 0.0
    %2850 = vmatmul.mubr.f32.gmra.mrb[0].mxu0 %v2728
    %v2851 = vpop.f32.mrb[0].mxu0
    %v2852 = vadd.f32 %v2659, %v2851
    %v2853 = vpop.f32.mrb[0].mxu0
    %2854 = vmatprep.mubr.f32.mxu0 0.0
    %2855 = vmatmul.mubr.f32.gmra.mrb[0].mxu0 %v2731
    %v2856 = vpop.f32.mrb[0].mxu0
    %v2857 = vadd.f32 %v2664, %v2856
    %v2858 = vpop.f32.mrb[0].mxu0
    %2859 = vmatprep.mubr.f32.mxu0 0.0
    %2860 = vmatmul.mubr.f32.gmra.mrb[0].mxu0 %v2734
    %v2861 = vpop.f32.mrb[0].mxu0
    %v2862 = vadd.f32 %v2669, %v2861
    %v2863 = vpop.f32.mrb[0].mxu0
    %2864 = vmatprep.mubr.f32.mxu0 0.0
    %2865 = vmatmul.mubr.f32.gmra.mrb[0].mxu0 %v2737
    %v2866 = vpop.f32.mrb[0].mxu0
    %v2867 = vadd.f32 %v2674, %v2866
    %v2868 = vpop.f32.mrb[0].mxu0
    %2869 = vmatprep.mubr.f32.mxu0 0.0
    %2870 = vmatmul.mubr.f32.gmra.mrb[0].mxu0 %v2740
    %v2871 = vpop.f32.mrb[0].mxu0
    %v2872 = vadd.f32 %v2679, %v2871
    %v2873 = vpop.f32.mrb[0].mxu0
    %2874 = vmatprep.mubr.f32.mxu0 0.0
    %2875 = vmatmul.mubr.f32.gmra.mrb[0].mxu0 %v2743
    %v2876 = vpop.f32.mrb[0].mxu0
    %v2877 = vadd.f32 %v2684, %v2876
    %v2878 = vpop.f32.mrb[0].mxu0
    %2879 = vmatprep.mubr.f32.mxu0 0.0
    %2880 = vmatmul.mubr.f32.gmra.mrb[0].mxu0 %v2746
    %v2881 = vpop.f32.mrb[0].mxu0
    %v2882 = vadd.f32 %v2689, %v2881
    %v2883 = vpop.f32.mrb[0].mxu0
    %2884 = vmatprep.mubr.f32.mxu0 0.0
    %2885 = vmatmul.mubr.f32.gmra.mrb[0].mxu0 %v2749
    %v2886 = vpop.f32.mrb[0].mxu0
    %v2887 = vadd.f32 %v2694, %v2886
    %v2888 = vpop.f32.mrb[0].mxu0
    %2889 = vmatprep.mubr.f32.mxu0 0.0
    %2890 = vmatmul.mubr.f32.gmra.mrb[0].mxu0 %v2752
    %v2891 = vpop.f32.mrb[0].mxu0
    %v2892 = vadd.f32 %v2699, %v2891
    %v2893 = vpop.f32.mrb[0].mxu0
    %2894 = vmatprep.mubr.f32.mxu0 0.0
    %2895 = vmatmul.mubr.f32.gmra.mrb[0].mxu0 %v2755
    %v2896 = vpop.f32.mrb[0].mxu0
    %v2897 = vadd.f32 %v2704, %v2896
    %v2898 = vpop.f32.mrb[0].mxu0
    %2899 = vmatprep.mubr.f32.mxu0 0.0
    %2900 = vmatmul.mubr.f32.gmra.mrb[0].mxu0 %v2758
    %v2901 = vpop.f32.mrb[0].mxu0
    %v2902 = vadd.f32 %v2709, %v2901
    %v2903 = vpop.f32.mrb[0].mxu0
    %2904 = vdwg.mxu0
    %v2905 = vld [vmem:[#allocation3 + $0x2] sm:$0xff]
    %v2906 = vld [vmem:[#allocation3 + $0x12] sm:$0xff]
    %v2907 = vld [vmem:[#allocation3 + $0x22] sm:$0xff]
    %v2908 = vld [vmem:[#allocation3 + $0x32] sm:$0xff]
    %v2909 = vld [vmem:[#allocation3 + $0x42] sm:$0xff]
    %v2910 = vld [vmem:[#allocation3 + $0x52] sm:$0xff]
    %v2911 = vld [vmem:[#allocation3 + $0x62] sm:$0xff]
    %v2912 = vld [vmem:[#allocation3 + $0x72] sm:$0xff]
    %v2913 = vld [vmem:[#allocation3 + $0xa2] sm:$0xff]
    %v2914 = vld [vmem:[#allocation3 + $0xb2] sm:$0xff]
    %v2915 = vld [vmem:[#allocation3 + $0xc2] sm:$0xff]
    %v2916 = vld [vmem:[#allocation3 + $0xd2] sm:$0xff]
    %v2917 = vld [vmem:[#allocation3 + $0xe2] sm:$0xff]
    %v2918 = vld [vmem:[#allocation3 + $0xf2] sm:$0xff]
    %v2919 = vld [vmem:[#allocation3 + $0x102] sm:$0xff]
    %v2920 = vld [vmem:[#allocation3 + $0x112] sm:$0xff]
    %v2921 = vld [vmem:[%s5 + $0x80] sm:$0xff]
    %v2922 = vld [vmem:[%s5 + $0x88] sm:$0xff]
    %v2923 = vld [vmem:[%s5 + $0x90] sm:$0xff]
    %v2924 = vld [vmem:[%s5 + $0x98] sm:$0xff]
    %v2925 = vld [vmem:[%s5 + $0xa0] sm:$0xff]
    %v2926 = vld [vmem:[%s5 + $0xa8] sm:$0xff]
    %v2927 = vld [vmem:[%s5 + $0xb0] sm:$0xff]
    %v2928 = vld [vmem:[%s5 + $0xb8] sm:$0xff]
    %v2930 = vsel %vm86, %v2905, 0
    %v2933 = vsel %vm86, %v2906, 0
    %v2936 = vsel %vm86, %v2907, 0
    %v2939 = vsel %vm86, %v2908, 0
    %v2942 = vsel %vm86, %v2909, 0
    %v2945 = vsel %vm86, %v2910, 0
    %v2948 = vsel %vm86, %v2911, 0
    %v2951 = vsel %vm86, %v2912, 0
    %v2954 = vsel %vm86, %v2913, 0
    %v2957 = vsel %vm86, %v2914, 0
    %v2960 = vsel %vm86, %v2915, 0
    %v2963 = vsel %vm86, %v2916, 0
    %v2966 = vsel %vm86, %v2917, 0
    %v2969 = vsel %vm86, %v2918, 0
    %v2972 = vsel %vm86, %v2919, 0
    %v2975 = vsel %vm86, %v2920, 0
    %2977 = vmatprep.subr.mxu0 0.0
    %2978 = vmatpush1.msra.mxu0 %v2921
    %2979 = vmatprep.subr.mxu0 0.0
    %2980 = vmatpush1.msra.mxu0 %v2922
    %2981 = vmatprep.subr.mxu0 0.0
    %2982 = vmatpush1.msra.mxu0 %v2923
    %2983 = vmatprep.subr.mxu0 0.0
    %2984 = vmatpush1.msra.mxu0 %v2924
    %2985 = vmatprep.subr.mxu0 0.0
    %2986 = vmatpush1.msra.mxu0 %v2925
    %2987 = vmatprep.subr.mxu0 0.0
    %2988 = vmatpush1.msra.mxu0 %v2926
    %2989 = vmatprep.subr.mxu0 0.0
    %2990 = vmatpush1.msra.mxu0 %v2927
    %2991 = vmatprep.subr.mxu0 0.0
    %2992 = vmatpush1.msra.mxu0 %v2928
    %2993 = vmatprep.subr.mxu0 0.0
    %2994 = vmatpush1.msra.mxu0 0.0
    %2995 = vmatprep.subr.mxu0 0.0
    %2996 = vmatpush1.msra.mxu0 0.0
    %2997 = vmatprep.subr.mxu0 0.0
    %2998 = vmatpush1.msra.mxu0 0.0
    %2999 = vmatprep.subr.mxu0 0.0
    %3000 = vmatpush1.msra.mxu0 0.0
    %3001 = vmatprep.subr.mxu0 0.0
    %3002 = vmatpush1.msra.mxu0 0.0
    %3003 = vmatprep.subr.mxu0 0.0
    %3004 = vmatpush1.msra.mxu0 0.0
    %3005 = vmatprep.subr.mxu0 0.0
    %3006 = vmatpush1.msra.mxu0 0.0
    %3007 = vmatprep.subr.mxu0 0.0
    %3008 = vmatpush1.msra.mxu0 0.0
    %3009 = vmatprep.subr.mxu0 0.0
    %3010 = vmatpush1.msra.mxu0 0.0
    %3011 = vmatprep.subr.mxu0 0.0
    %3012 = vmatpush1.msra.mxu0 0.0
    %3013 = vmatprep.subr.mxu0 0.0
    %3014 = vmatpush1.msra.mxu0 0.0
    %3015 = vmatprep.subr.mxu0 0.0
    %3016 = vmatpush1.msra.mxu0 0.0
    %3017 = vmatprep.subr.mxu0 0.0
    %3018 = vmatpush1.msra.mxu0 0.0
    %3019 = vmatprep.subr.mxu0 0.0
    %3020 = vmatpush1.msra.mxu0 0.0
    %3021 = vmatprep.subr.mxu0 0.0
    %3022 = vmatpush1.msra.mxu0 0.0
    %3023 = vmatprep.subr.mxu0 0.0
    %3024 = vmatpush1.msra.mxu0 0.0
    %3025 = vmatprep.subr.mxu0 0.0
    %3026 = vmatpush1.msra.mxu0 0.0
    %3027 = vmatprep.subr.mxu0 0.0
    %3028 = vmatpush1.msra.mxu0 0.0
    %3029 = vmatprep.subr.mxu0 0.0
    %3030 = vmatpush1.msra.mxu0 0.0
    %3031 = vmatprep.subr.mxu0 0.0
    %3032 = vmatpush1.msra.mxu0 0.0
    %3033 = vmatprep.subr.mxu0 0.0
    %3034 = vmatpush1.msra.mxu0 0.0
    %3035 = vmatprep.subr.mxu0 0.0
    %3036 = vmatpush1.msra.mxu0 0.0
    %3037 = vmatprep.subr.mxu0 0.0
    %3038 = vmatpush1.msra.mxu0 0.0
    %3039 = vmatprep.subr.mxu0 0.0
    %3040 = vmatpush1.msra.mxu0 0.0
    %3041 = vmatprep.mubr.f32.mxu0 0.0
    %3042 = vmatmul.mubr.f32.gmra.mrb[0].mxu0 %v2930
    %v3043 = vpop.f32.mrb[0].mxu0
    %v3044 = vadd.f32 0.0, %v3043
    %v3045 = vpop.f32.mrb[0].mxu0
    %3046 = vmatprep.mubr.f32.mxu0 0.0
    %3047 = vmatmul.mubr.f32.gmra.mrb[0].mxu0 %v2933
    %v3048 = vpop.f32.mrb[0].mxu0
    %v3049 = vadd.f32 0.0, %v3048
    %v3050 = vpop.f32.mrb[0].mxu0
    %3051 = vmatprep.mubr.f32.mxu0 0.0
    %3052 = vmatmul.mubr.f32.gmra.mrb[0].mxu0 %v2936
    %v3053 = vpop.f32.mrb[0].mxu0
    %v3054 = vadd.f32 0.0, %v3053
    %v3055 = vpop.f32.mrb[0].mxu0
    %3056 = vmatprep.mubr.f32.mxu0 0.0
    %3057 = vmatmul.mubr.f32.gmra.mrb[0].mxu0 %v2939
    %v3058 = vpop.f32.mrb[0].mxu0
    %v3059 = vadd.f32 0.0, %v3058
    %v3060 = vpop.f32.mrb[0].mxu0
    %3061 = vmatprep.mubr.f32.mxu0 0.0
    %3062 = vmatmul.mubr.f32.gmra.mrb[0].mxu0 %v2942
    %v3063 = vpop.f32.mrb[0].mxu0
    %v3064 = vadd.f32 0.0, %v3063
    %v3065 = vpop.f32.mrb[0].mxu0
    %3066 = vmatprep.mubr.f32.mxu0 0.0
    %3067 = vmatmul.mubr.f32.gmra.mrb[0].mxu0 %v2945
    %v3068 = vpop.f32.mrb[0].mxu0
    %v3069 = vadd.f32 0.0, %v3068
    %v3070 = vpop.f32.mrb[0].mxu0
    %3071 = vmatprep.mubr.f32.mxu0 0.0
    %3072 = vmatmul.mubr.f32.gmra.mrb[0].mxu0 %v2948
    %v3073 = vpop.f32.mrb[0].mxu0
    %v3074 = vadd.f32 0.0, %v3073
    %v3075 = vpop.f32.mrb[0].mxu0
    %3076 = vmatprep.mubr.f32.mxu0 0.0
    %3077 = vmatmul.mubr.f32.gmra.mrb[0].mxu0 %v2951
    %v3078 = vpop.f32.mrb[0].mxu0
    %v3079 = vadd.f32 0.0, %v3078
    %v3080 = vpop.f32.mrb[0].mxu0
    %3081 = vmatprep.mubr.f32.mxu0 0.0
    %3082 = vmatmul.mubr.f32.gmra.mrb[0].mxu0 %v2954
    %v3083 = vpop.f32.mrb[0].mxu0
    %v3084 = vadd.f32 0.0, %v3083
    %v3085 = vpop.f32.mrb[0].mxu0
    %3086 = vmatprep.mubr.f32.mxu0 0.0
    %3087 = vmatmul.mubr.f32.gmra.mrb[0].mxu0 %v2957
    %v3088 = vpop.f32.mrb[0].mxu0
    %v3089 = vadd.f32 0.0, %v3088
    %v3090 = vpop.f32.mrb[0].mxu0
    %3091 = vmatprep.mubr.f32.mxu0 0.0
    %3092 = vmatmul.mubr.f32.gmra.mrb[0].mxu0 %v2960
    %v3093 = vpop.f32.mrb[0].mxu0
    %v3094 = vadd.f32 0.0, %v3093
    %v3095 = vpop.f32.mrb[0].mxu0
    %3096 = vmatprep.mubr.f32.mxu0 0.0
    %3097 = vmatmul.mubr.f32.gmra.mrb[0].mxu0 %v2963
    %v3098 = vpop.f32.mrb[0].mxu0
    %v3099 = vadd.f32 0.0, %v3098
    %v3100 = vpop.f32.mrb[0].mxu0
    %3101 = vmatprep.mubr.f32.mxu0 0.0
    %3102 = vmatmul.mubr.f32.gmra.mrb[0].mxu0 %v2966
    %v3103 = vpop.f32.mrb[0].mxu0
    %v3104 = vadd.f32 0.0, %v3103
    %v3105 = vpop.f32.mrb[0].mxu0
    %3106 = vmatprep.mubr.f32.mxu0 0.0
    %3107 = vmatmul.mubr.f32.gmra.mrb[0].mxu0 %v2969
    %v3108 = vpop.f32.mrb[0].mxu0
    %v3109 = vadd.f32 0.0, %v3108
    %v3110 = vpop.f32.mrb[0].mxu0
    %3111 = vmatprep.mubr.f32.mxu0 0.0
    %3112 = vmatmul.mubr.f32.gmra.mrb[0].mxu0 %v2972
    %v3113 = vpop.f32.mrb[0].mxu0
    %v3114 = vadd.f32 0.0, %v3113
    %v3115 = vpop.f32.mrb[0].mxu0
    %3116 = vmatprep.mubr.f32.mxu0 0.0
    %3117 = vmatmul.mubr.f32.gmra.mrb[0].mxu0 %v2975
    %v3118 = vpop.f32.mrb[0].mxu0
    %v3119 = vadd.f32 0.0, %v3118
    %v3120 = vpop.f32.mrb[0].mxu0
    %3121 = vdwg.mxu0
    %v3122 = vadd.f32 %v2827, %v3044
    %v3123 = vadd.f32 %v2832, %v3049
    %v3124 = vadd.f32 %v2837, %v3054
    %v3125 = vadd.f32 %v2842, %v3059
    %v3126 = vadd.f32 %v2847, %v3064
    %v3127 = vadd.f32 %v2852, %v3069
    %v3128 = vadd.f32 %v2857, %v3074
    %v3129 = vadd.f32 %v2862, %v3079
    %v3130 = vadd.f32 %v2867, %v3084
    %v3131 = vadd.f32 %v2872, %v3089
    %v3132 = vadd.f32 %v2877, %v3094
    %v3133 = vadd.f32 %v2882, %v3099
    %v3134 = vadd.f32 %v2887, %v3104
    %v3135 = vadd.f32 %v2892, %v3109
    %v3136 = vadd.f32 %v2897, %v3114
    %v3137 = vadd.f32 %v2902, %v3119
    %v3138 = vld [vmem:[%s97] sm:$0xff]
    %v3139 = vld [vmem:[%s97 + $0x10] sm:$0xff]
    %v3140 = vld [vmem:[%s97 + $0x20] sm:$0xff]
    %v3141 = vld [vmem:[%s97 + $0x30] sm:$0xff]
    %v3142 = vld [vmem:[%s97 + $0x40] sm:$0xff]
    %v3143 = vld [vmem:[%s97 + $0x50] sm:$0xff]
    %v3144 = vld [vmem:[%s97 + $0x60] sm:$0xff]
    %v3145 = vld [vmem:[%s97 + $0x70] sm:$0xff]
    %v3146 = vld [vmem:[%s97 + $0xa0] sm:$0xff]
    %v3147 = vld [vmem:[%s97 + $0xb0] sm:$0xff]
    %v3148 = vld [vmem:[%s97 + $0xc0] sm:$0xff]
    %v3149 = vld [vmem:[%s97 + $0xd0] sm:$0xff]
    %v3150 = vld [vmem:[%s97 + $0xe0] sm:$0xff]
    %v3151 = vld [vmem:[%s97 + $0xf0] sm:$0xff]
    %v3152 = vld [vmem:[%s97 + $0x100] sm:$0xff]
    %v3153 = vld [vmem:[%s97 + $0x110] sm:$0xff]
    %v3154 = vld [vmem:[%s5 + $0xc0] sm:$0xff]
    %v3155 = vld [vmem:[%s5 + $0xc8] sm:$0xff]
    %v3156 = vld [vmem:[%s5 + $0xd0] sm:$0xff]
    %v3157 = vld [vmem:[%s5 + $0xd8] sm:$0xff]
    %v3158 = vld [vmem:[%s5 + $0xe0] sm:$0xff]
    %v3159 = vld [vmem:[%s5 + $0xe8] sm:$0xff]
    %v3160 = vld [vmem:[%s5 + $0xf0] sm:$0xff]
    %v3161 = vld [vmem:[%s5 + $0xf8] sm:$0xff]
    %v3163 = vsel %vm86, %v3138, 0
    %v3166 = vsel %vm86, %v3139, 0
    %v3169 = vsel %vm86, %v3140, 0
    %v3172 = vsel %vm86, %v3141, 0
    %v3175 = vsel %vm86, %v3142, 0
    %v3178 = vsel %vm86, %v3143, 0
    %v3181 = vsel %vm86, %v3144, 0
    %v3184 = vsel %vm86, %v3145, 0
    %v3187 = vsel %vm86, %v3146, 0
    %v3190 = vsel %vm86, %v3147, 0
    %v3193 = vsel %vm86, %v3148, 0
    %v3196 = vsel %vm86, %v3149, 0
    %v3199 = vsel %vm86, %v3150, 0
    %v3202 = vsel %vm86, %v3151, 0
    %v3205 = vsel %vm86, %v3152, 0
    %v3208 = vsel %vm86, %v3153, 0
    %3210 = vmatprep.subr.mxu0 0.0
    %3211 = vmatpush1.msra.mxu0 %v3154
    %3212 = vmatprep.subr.mxu0 0.0
    %3213 = vmatpush1.msra.mxu0 %v3155
    %3214 = vmatprep.subr.mxu0 0.0
    %3215 = vmatpush1.msra.mxu0 %v3156
    %3216 = vmatprep.subr.mxu0 0.0
    %3217 = vmatpush1.msra.mxu0 %v3157
    %3218 = vmatprep.subr.mxu0 0.0
    %3219 = vmatpush1.msra.mxu0 %v3158
    %3220 = vmatprep.subr.mxu0 0.0
    %3221 = vmatpush1.msra.mxu0 %v3159
    %3222 = vmatprep.subr.mxu0 0.0
    %3223 = vmatpush1.msra.mxu0 %v3160
    %3224 = vmatprep.subr.mxu0 0.0
    %3225 = vmatpush1.msra.mxu0 %v3161
    %3226 = vmatprep.subr.mxu0 0.0
    %3227 = vmatpush1.msra.mxu0 0.0
    %3228 = vmatprep.subr.mxu0 0.0
    %3229 = vmatpush1.msra.mxu0 0.0
    %3230 = vmatprep.subr.mxu0 0.0
    %3231 = vmatpush1.msra.mxu0 0.0
    %3232 = vmatprep.subr.mxu0 0.0
    %3233 = vmatpush1.msra.mxu0 0.0
    %3234 = vmatprep.subr.mxu0 0.0
    %3235 = vmatpush1.msra.mxu0 0.0
    %3236 = vmatprep.subr.mxu0 0.0
    %3237 = vmatpush1.msra.mxu0 0.0
    %3238 = vmatprep.subr.mxu0 0.0
    %3239 = vmatpush1.msra.mxu0 0.0
    %3240 = vmatprep.subr.mxu0 0.0
    %3241 = vmatpush1.msra.mxu0 0.0
    %3242 = vmatprep.subr.mxu0 0.0
    %3243 = vmatpush1.msra.mxu0 0.0
    %3244 = vmatprep.subr.mxu0 0.0
    %3245 = vmatpush1.msra.mxu0 0.0
    %3246 = vmatprep.subr.mxu0 0.0
    %3247 = vmatpush1.msra.mxu0 0.0
    %3248 = vmatprep.subr.mxu0 0.0
    %3249 = vmatpush1.msra.mxu0 0.0
    %3250 = vmatprep.subr.mxu0 0.0
    %3251 = vmatpush1.msra.mxu0 0.0
    %3252 = vmatprep.subr.mxu0 0.0
    %3253 = vmatpush1.msra.mxu0 0.0
    %3254 = vmatprep.subr.mxu0 0.0
    %3255 = vmatpush1.msra.mxu0 0.0
    %3256 = vmatprep.subr.mxu0 0.0
    %3257 = vmatpush1.msra.mxu0 0.0
    %3258 = vmatprep.subr.mxu0 0.0
    %3259 = vmatpush1.msra.mxu0 0.0
    %3260 = vmatprep.subr.mxu0 0.0
    %3261 = vmatpush1.msra.mxu0 0.0
    %3262 = vmatprep.subr.mxu0 0.0
    %3263 = vmatpush1.msra.mxu0 0.0
    %3264 = vmatprep.subr.mxu0 0.0
    %3265 = vmatpush1.msra.mxu0 0.0
    %3266 = vmatprep.subr.mxu0 0.0
    %3267 = vmatpush1.msra.mxu0 0.0
    %3268 = vmatprep.subr.mxu0 0.0
    %3269 = vmatpush1.msra.mxu0 0.0
    %3270 = vmatprep.subr.mxu0 0.0
    %3271 = vmatpush1.msra.mxu0 0.0
    %3272 = vmatprep.subr.mxu0 0.0
    %3273 = vmatpush1.msra.mxu0 0.0
    %3274 = vmatprep.mubr.f32.mxu0 0.0
    %3275 = vmatmul.mubr.f32.gmra.mrb[0].mxu0 %v3163
    %v3276 = vpop.f32.mrb[0].mxu0
    %v3277 = vadd.f32 0.0, %v3276
    %v3278 = vpop.f32.mrb[0].mxu0
    %3279 = vmatprep.mubr.f32.mxu0 0.0
    %3280 = vmatmul.mubr.f32.gmra.mrb[0].mxu0 %v3166
    %v3281 = vpop.f32.mrb[0].mxu0
    %v3282 = vadd.f32 0.0, %v3281
    %v3283 = vpop.f32.mrb[0].mxu0
    %3284 = vmatprep.mubr.f32.mxu0 0.0
    %3285 = vmatmul.mubr.f32.gmra.mrb[0].mxu0 %v3169
    %v3286 = vpop.f32.mrb[0].mxu0
    %v3287 = vadd.f32 0.0, %v3286
    %v3288 = vpop.f32.mrb[0].mxu0
    %3289 = vmatprep.mubr.f32.mxu0 0.0
    %3290 = vmatmul.mubr.f32.gmra.mrb[0].mxu0 %v3172
    %v3291 = vpop.f32.mrb[0].mxu0
    %v3292 = vadd.f32 0.0, %v3291
    %v3293 = vpop.f32.mrb[0].mxu0
    %3294 = vmatprep.mubr.f32.mxu0 0.0
    %3295 = vmatmul.mubr.f32.gmra.mrb[0].mxu0 %v3175
    %v3296 = vpop.f32.mrb[0].mxu0
    %v3297 = vadd.f32 0.0, %v3296
    %v3298 = vpop.f32.mrb[0].mxu0
    %3299 = vmatprep.mubr.f32.mxu0 0.0
    %3300 = vmatmul.mubr.f32.gmra.mrb[0].mxu0 %v3178
    %v3301 = vpop.f32.mrb[0].mxu0
    %v3302 = vadd.f32 0.0, %v3301
    %v3303 = vpop.f32.mrb[0].mxu0
    %3304 = vmatprep.mubr.f32.mxu0 0.0
    %3305 = vmatmul.mubr.f32.gmra.mrb[0].mxu0 %v3181
    %v3306 = vpop.f32.mrb[0].mxu0
    %v3307 = vadd.f32 0.0, %v3306
    %v3308 = vpop.f32.mrb[0].mxu0
    %3309 = vmatprep.mubr.f32.mxu0 0.0
    %3310 = vmatmul.mubr.f32.gmra.mrb[0].mxu0 %v3184
    %v3311 = vpop.f32.mrb[0].mxu0
    %v3312 = vadd.f32 0.0, %v3311
    %v3313 = vpop.f32.mrb[0].mxu0
    %3314 = vmatprep.mubr.f32.mxu0 0.0
    %3315 = vmatmul.mubr.f32.gmra.mrb[0].mxu0 %v3187
    %v3316 = vpop.f32.mrb[0].mxu0
    %v3317 = vadd.f32 0.0, %v3316
    %v3318 = vpop.f32.mrb[0].mxu0
    %3319 = vmatprep.mubr.f32.mxu0 0.0
    %3320 = vmatmul.mubr.f32.gmra.mrb[0].mxu0 %v3190
    %v3321 = vpop.f32.mrb[0].mxu0
    %v3322 = vadd.f32 0.0, %v3321
    %v3323 = vpop.f32.mrb[0].mxu0
    %3324 = vmatprep.mubr.f32.mxu0 0.0
    %3325 = vmatmul.mubr.f32.gmra.mrb[0].mxu0 %v3193
    %v3326 = vpop.f32.mrb[0].mxu0
    %v3327 = vadd.f32 0.0, %v3326
    %v3328 = vpop.f32.mrb[0].mxu0
    %3329 = vmatprep.mubr.f32.mxu0 0.0
    %3330 = vmatmul.mubr.f32.gmra.mrb[0].mxu0 %v3196
    %v3331 = vpop.f32.mrb[0].mxu0
    %v3332 = vadd.f32 0.0, %v3331
    %v3333 = vpop.f32.mrb[0].mxu0
    %3334 = vmatprep.mubr.f32.mxu0 0.0
    %3335 = vmatmul.mubr.f32.gmra.mrb[0].mxu0 %v3199
    %v3336 = vpop.f32.mrb[0].mxu0
    %v3337 = vadd.f32 0.0, %v3336
    %v3338 = vpop.f32.mrb[0].mxu0
    %3339 = vmatprep.mubr.f32.mxu0 0.0
    %3340 = vmatmul.mubr.f32.gmra.mrb[0].mxu0 %v3202
    %v3341 = vpop.f32.mrb[0].mxu0
    %v3342 = vadd.f32 0.0, %v3341
    %v3343 = vpop.f32.mrb[0].mxu0
    %3344 = vmatprep.mubr.f32.mxu0 0.0
    %3345 = vmatmul.mubr.f32.gmra.mrb[0].mxu0 %v3205
    %v3346 = vpop.f32.mrb[0].mxu0
    %v3347 = vadd.f32 0.0, %v3346
    %v3348 = vpop.f32.mrb[0].mxu0
    %3349 = vmatprep.mubr.f32.mxu0 0.0
    %3350 = vmatmul.mubr.f32.gmra.mrb[0].mxu0 %v3208
    %v3351 = vpop.f32.mrb[0].mxu0
    %v3352 = vadd.f32 0.0, %v3351
    %v3353 = vpop.f32.mrb[0].mxu0
    %3354 = vdwg.mxu0
    %v3355 = vadd.f32 %v3122, %v3277
    %v3356 = vadd.f32 %v3123, %v3282
    %v3357 = vadd.f32 %v3124, %v3287
    %v3358 = vadd.f32 %v3125, %v3292
    %v3359 = vadd.f32 %v3126, %v3297
    %v3360 = vadd.f32 %v3127, %v3302
    %v3361 = vadd.f32 %v3128, %v3307
    %v3362 = vadd.f32 %v3129, %v3312
    %v3363 = vadd.f32 %v3130, %v3317
    %v3364 = vadd.f32 %v3131, %v3322
    %v3365 = vadd.f32 %v3132, %v3327
    %v3366 = vadd.f32 %v3133, %v3332
    %v3367 = vadd.f32 %v3134, %v3337
    %v3368 = vadd.f32 %v3135, %v3342
    %v3369 = vadd.f32 %v3136, %v3347
    %v3370 = vadd.f32 %v3137, %v3352
    %v3371 = vld [vmem:[%s97 + $0x1] sm:$0xff]
    %v3372 = vld [vmem:[%s97 + $0x11] sm:$0xff]
    %v3373 = vld [vmem:[%s97 + $0x21] sm:$0xff]
    %v3374 = vld [vmem:[%s97 + $0x31] sm:$0xff]
    %v3375 = vld [vmem:[%s97 + $0x41] sm:$0xff]
    %v3376 = vld [vmem:[%s97 + $0x51] sm:$0xff]
    %v3377 = vld [vmem:[%s97 + $0x61] sm:$0xff]
    %v3378 = vld [vmem:[%s97 + $0x71] sm:$0xff]
    %v3379 = vld [vmem:[%s97 + $0xa1] sm:$0xff]
    %v3380 = vld [vmem:[%s97 + $0xb1] sm:$0xff]
    %v3381 = vld [vmem:[%s97 + $0xc1] sm:$0xff]
    %v3382 = vld [vmem:[%s97 + $0xd1] sm:$0xff]
    %v3383 = vld [vmem:[%s97 + $0xe1] sm:$0xff]
    %v3384 = vld [vmem:[%s97 + $0xf1] sm:$0xff]
    %v3385 = vld [vmem:[%s97 + $0x101] sm:$0xff]
    %v3386 = vld [vmem:[%s97 + $0x111] sm:$0xff]
    %v3387 = vld [vmem:[%s5 + $0x100] sm:$0xff]
    %v3388 = vld [vmem:[%s5 + $0x108] sm:$0xff]
    %v3389 = vld [vmem:[%s5 + $0x110] sm:$0xff]
    %v3390 = vld [vmem:[%s5 + $0x118] sm:$0xff]
    %v3391 = vld [vmem:[%s5 + $0x120] sm:$0xff]
    %v3392 = vld [vmem:[%s5 + $0x128] sm:$0xff]
    %v3393 = vld [vmem:[%s5 + $0x130] sm:$0xff]
    %v3394 = vld [vmem:[%s5 + $0x138] sm:$0xff]
    %v3396 = vsel %vm86, %v3371, 0
    %v3399 = vsel %vm86, %v3372, 0
    %v3402 = vsel %vm86, %v3373, 0
    %v3405 = vsel %vm86, %v3374, 0
    %v3408 = vsel %vm86, %v3375, 0
    %v3411 = vsel %vm86, %v3376, 0
    %v3414 = vsel %vm86, %v3377, 0
    %v3417 = vsel %vm86, %v3378, 0
    %v3420 = vsel %vm86, %v3379, 0
    %v3423 = vsel %vm86, %v3380, 0
    %v3426 = vsel %vm86, %v3381, 0
    %v3429 = vsel %vm86, %v3382, 0
    %v3432 = vsel %vm86, %v3383, 0
    %v3435 = vsel %vm86, %v3384, 0
    %v3438 = vsel %vm86, %v3385, 0
    %v3441 = vsel %vm86, %v3386, 0
    %3443 = vmatprep.subr.mxu0 0.0
    %3444 = vmatpush1.msra.mxu0 %v3387
    %3445 = vmatprep.subr.mxu0 0.0
    %3446 = vmatpush1.msra.mxu0 %v3388
    %3447 = vmatprep.subr.mxu0 0.0
    %3448 = vmatpush1.msra.mxu0 %v3389
    %3449 = vmatprep.subr.mxu0 0.0
    %3450 = vmatpush1.msra.mxu0 %v3390
    %3451 = vmatprep.subr.mxu0 0.0
    %3452 = vmatpush1.msra.mxu0 %v3391
    %3453 = vmatprep.subr.mxu0 0.0
    %3454 = vmatpush1.msra.mxu0 %v3392
    %3455 = vmatprep.subr.mxu0 0.0
    %3456 = vmatpush1.msra.mxu0 %v3393
    %3457 = vmatprep.subr.mxu0 0.0
    %3458 = vmatpush1.msra.mxu0 %v3394
    %3459 = vmatprep.subr.mxu0 0.0
    %3460 = vmatpush1.msra.mxu0 0.0
    %3461 = vmatprep.subr.mxu0 0.0
    %3462 = vmatpush1.msra.mxu0 0.0
    %3463 = vmatprep.subr.mxu0 0.0
    %3464 = vmatpush1.msra.mxu0 0.0
    %3465 = vmatprep.subr.mxu0 0.0
    %3466 = vmatpush1.msra.mxu0 0.0
    %3467 = vmatprep.subr.mxu0 0.0
    %3468 = vmatpush1.msra.mxu0 0.0
    %3469 = vmatprep.subr.mxu0 0.0
    %3470 = vmatpush1.msra.mxu0 0.0
    %3471 = vmatprep.subr.mxu0 0.0
    %3472 = vmatpush1.msra.mxu0 0.0
    %3473 = vmatprep.subr.mxu0 0.0
    %3474 = vmatpush1.msra.mxu0 0.0
    %3475 = vmatprep.subr.mxu0 0.0
    %3476 = vmatpush1.msra.mxu0 0.0
    %3477 = vmatprep.subr.mxu0 0.0
    %3478 = vmatpush1.msra.mxu0 0.0
    %3479 = vmatprep.subr.mxu0 0.0
    %3480 = vmatpush1.msra.mxu0 0.0
    %3481 = vmatprep.subr.mxu0 0.0
    %3482 = vmatpush1.msra.mxu0 0.0
    %3483 = vmatprep.subr.mxu0 0.0
    %3484 = vmatpush1.msra.mxu0 0.0
    %3485 = vmatprep.subr.mxu0 0.0
    %3486 = vmatpush1.msra.mxu0 0.0
    %3487 = vmatprep.subr.mxu0 0.0
    %3488 = vmatpush1.msra.mxu0 0.0
    %3489 = vmatprep.subr.mxu0 0.0
    %3490 = vmatpush1.msra.mxu0 0.0
    %3491 = vmatprep.subr.mxu0 0.0
    %3492 = vmatpush1.msra.mxu0 0.0
    %3493 = vmatprep.subr.mxu0 0.0
    %3494 = vmatpush1.msra.mxu0 0.0
    %3495 = vmatprep.subr.mxu0 0.0
    %3496 = vmatpush1.msra.mxu0 0.0
    %3497 = vmatprep.subr.mxu0 0.0
    %3498 = vmatpush1.msra.mxu0 0.0
    %3499 = vmatprep.subr.mxu0 0.0
    %3500 = vmatpush1.msra.mxu0 0.0
    %3501 = vmatprep.subr.mxu0 0.0
    %3502 = vmatpush1.msra.mxu0 0.0
    %3503 = vmatprep.subr.mxu0 0.0
    %3504 = vmatpush1.msra.mxu0 0.0
    %3505 = vmatprep.subr.mxu0 0.0
    %3506 = vmatpush1.msra.mxu0 0.0
    %3507 = vmatprep.mubr.f32.mxu0 0.0
    %3508 = vmatmul.mubr.f32.gmra.mrb[0].mxu0 %v3396
    %v3509 = vpop.f32.mrb[0].mxu0
    %v3510 = vadd.f32 0.0, %v3509
    %v3511 = vpop.f32.mrb[0].mxu0
    %3512 = vmatprep.mubr.f32.mxu0 0.0
    %3513 = vmatmul.mubr.f32.gmra.mrb[0].mxu0 %v3399
    %v3514 = vpop.f32.mrb[0].mxu0
    %v3515 = vadd.f32 0.0, %v3514
    %v3516 = vpop.f32.mrb[0].mxu0
    %3517 = vmatprep.mubr.f32.mxu0 0.0
    %3518 = vmatmul.mubr.f32.gmra.mrb[0].mxu0 %v3402
    %v3519 = vpop.f32.mrb[0].mxu0
    %v3520 = vadd.f32 0.0, %v3519
    %v3521 = vpop.f32.mrb[0].mxu0
    %3522 = vmatprep.mubr.f32.mxu0 0.0
    %3523 = vmatmul.mubr.f32.gmra.mrb[0].mxu0 %v3405
    %v3524 = vpop.f32.mrb[0].mxu0
    %v3525 = vadd.f32 0.0, %v3524
    %v3526 = vpop.f32.mrb[0].mxu0
    %3527 = vmatprep.mubr.f32.mxu0 0.0
    %3528 = vmatmul.mubr.f32.gmra.mrb[0].mxu0 %v3408
    %v3529 = vpop.f32.mrb[0].mxu0
    %v3530 = vadd.f32 0.0, %v3529
    %v3531 = vpop.f32.mrb[0].mxu0
    %3532 = vmatprep.mubr.f32.mxu0 0.0
    %3533 = vmatmul.mubr.f32.gmra.mrb[0].mxu0 %v3411
    %v3534 = vpop.f32.mrb[0].mxu0
    %v3535 = vadd.f32 0.0, %v3534
    %v3536 = vpop.f32.mrb[0].mxu0
    %3537 = vmatprep.mubr.f32.mxu0 0.0
    %3538 = vmatmul.mubr.f32.gmra.mrb[0].mxu0 %v3414
    %v3539 = vpop.f32.mrb[0].mxu0
    %v3540 = vadd.f32 0.0, %v3539
    %v3541 = vpop.f32.mrb[0].mxu0
    %3542 = vmatprep.mubr.f32.mxu0 0.0
    %3543 = vmatmul.mubr.f32.gmra.mrb[0].mxu0 %v3417
    %v3544 = vpop.f32.mrb[0].mxu0
    %v3545 = vadd.f32 0.0, %v3544
    %v3546 = vpop.f32.mrb[0].mxu0
    %3547 = vmatprep.mubr.f32.mxu0 0.0
    %3548 = vmatmul.mubr.f32.gmra.mrb[0].mxu0 %v3420
    %v3549 = vpop.f32.mrb[0].mxu0
    %v3550 = vadd.f32 0.0, %v3549
    %v3551 = vpop.f32.mrb[0].mxu0
    %3552 = vmatprep.mubr.f32.mxu0 0.0
    %3553 = vmatmul.mubr.f32.gmra.mrb[0].mxu0 %v3423
    %v3554 = vpop.f32.mrb[0].mxu0
    %v3555 = vadd.f32 0.0, %v3554
    %v3556 = vpop.f32.mrb[0].mxu0
    %3557 = vmatprep.mubr.f32.mxu0 0.0
    %3558 = vmatmul.mubr.f32.gmra.mrb[0].mxu0 %v3426
    %v3559 = vpop.f32.mrb[0].mxu0
    %v3560 = vadd.f32 0.0, %v3559
    %v3561 = vpop.f32.mrb[0].mxu0
    %3562 = vmatprep.mubr.f32.mxu0 0.0
    %3563 = vmatmul.mubr.f32.gmra.mrb[0].mxu0 %v3429
    %v3564 = vpop.f32.mrb[0].mxu0
    %v3565 = vadd.f32 0.0, %v3564
    %v3566 = vpop.f32.mrb[0].mxu0
    %3567 = vmatprep.mubr.f32.mxu0 0.0
    %3568 = vmatmul.mubr.f32.gmra.mrb[0].mxu0 %v3432
    %v3569 = vpop.f32.mrb[0].mxu0
    %v3570 = vadd.f32 0.0, %v3569
    %v3571 = vpop.f32.mrb[0].mxu0
    %3572 = vmatprep.mubr.f32.mxu0 0.0
    %3573 = vmatmul.mubr.f32.gmra.mrb[0].mxu0 %v3435
    %v3574 = vpop.f32.mrb[0].mxu0
    %v3575 = vadd.f32 0.0, %v3574
    %v3576 = vpop.f32.mrb[0].mxu0
    %3577 = vmatprep.mubr.f32.mxu0 0.0
    %3578 = vmatmul.mubr.f32.gmra.mrb[0].mxu0 %v3438
    %v3579 = vpop.f32.mrb[0].mxu0
    %v3580 = vadd.f32 0.0, %v3579
    %v3581 = vpop.f32.mrb[0].mxu0
    %3582 = vmatprep.mubr.f32.mxu0 0.0
    %3583 = vmatmul.mubr.f32.gmra.mrb[0].mxu0 %v3441
    %v3584 = vpop.f32.mrb[0].mxu0
    %v3585 = vadd.f32 0.0, %v3584
    %v3586 = vpop.f32.mrb[0].mxu0
    %3587 = vdwg.mxu0
    %v3588 = vadd.f32 %v3355, %v3510
    %v3589 = vadd.f32 %v3356, %v3515
    %v3590 = vadd.f32 %v3357, %v3520
    %v3591 = vadd.f32 %v3358, %v3525
    %v3592 = vadd.f32 %v3359, %v3530
    %v3593 = vadd.f32 %v3360, %v3535
    %v3594 = vadd.f32 %v3361, %v3540
    %v3595 = vadd.f32 %v3362, %v3545
    %v3596 = vadd.f32 %v3363, %v3550
    %v3597 = vadd.f32 %v3364, %v3555
    %v3598 = vadd.f32 %v3365, %v3560
    %v3599 = vadd.f32 %v3366, %v3565
    %v3600 = vadd.f32 %v3367, %v3570
    %v3601 = vadd.f32 %v3368, %v3575
    %v3602 = vadd.f32 %v3369, %v3580
    %v3603 = vadd.f32 %v3370, %v3585
    %v3604 = vld [vmem:[%s97 + $0x2] sm:$0xff]
    %v3605 = vld [vmem:[%s97 + $0x12] sm:$0xff]
    %v3606 = vld [vmem:[%s97 + $0x22] sm:$0xff]
    %v3607 = vld [vmem:[%s97 + $0x32] sm:$0xff]
    %v3608 = vld [vmem:[%s97 + $0x42] sm:$0xff]
    %v3609 = vld [vmem:[%s97 + $0x52] sm:$0xff]
    %v3610 = vld [vmem:[%s97 + $0x62] sm:$0xff]
    %v3611 = vld [vmem:[%s97 + $0x72] sm:$0xff]
    %v3612 = vld [vmem:[%s97 + $0xa2] sm:$0xff]
    %v3613 = vld [vmem:[%s97 + $0xb2] sm:$0xff]
    %v3614 = vld [vmem:[%s97 + $0xc2] sm:$0xff]
    %v3615 = vld [vmem:[%s97 + $0xd2] sm:$0xff]
    %v3616 = vld [vmem:[%s97 + $0xe2] sm:$0xff]
    %v3617 = vld [vmem:[%s97 + $0xf2] sm:$0xff]
    %v3618 = vld [vmem:[%s97 + $0x102] sm:$0xff]
    %v3619 = vld [vmem:[%s97 + $0x112] sm:$0xff]
    %v3620 = vld [vmem:[%s5 + $0x140] sm:$0xff]
    %v3621 = vld [vmem:[%s5 + $0x148] sm:$0xff]
    %v3622 = vld [vmem:[%s5 + $0x150] sm:$0xff]
    %v3623 = vld [vmem:[%s5 + $0x158] sm:$0xff]
    %v3624 = vld [vmem:[%s5 + $0x160] sm:$0xff]
    %v3625 = vld [vmem:[%s5 + $0x168] sm:$0xff]
    %v3626 = vld [vmem:[%s5 + $0x170] sm:$0xff]
    %v3627 = vld [vmem:[%s5 + $0x178] sm:$0xff]
    %v3629 = vsel %vm86, %v3604, 0
    %v3632 = vsel %vm86, %v3605, 0
    %v3635 = vsel %vm86, %v3606, 0
    %v3638 = vsel %vm86, %v3607, 0
    %v3641 = vsel %vm86, %v3608, 0
    %v3644 = vsel %vm86, %v3609, 0
    %v3647 = vsel %vm86, %v3610, 0
    %v3650 = vsel %vm86, %v3611, 0
    %v3653 = vsel %vm86, %v3612, 0
    %v3656 = vsel %vm86, %v3613, 0
    %v3659 = vsel %vm86, %v3614, 0
    %v3662 = vsel %vm86, %v3615, 0
    %v3665 = vsel %vm86, %v3616, 0
    %v3668 = vsel %vm86, %v3617, 0
    %v3671 = vsel %vm86, %v3618, 0
    %v3674 = vsel %vm86, %v3619, 0
    %3676 = vmatprep.subr.mxu0 0.0
    %3677 = vmatpush1.msra.mxu0 %v3620
    %3678 = vmatprep.subr.mxu0 0.0
    %3679 = vmatpush1.msra.mxu0 %v3621
    %3680 = vmatprep.subr.mxu0 0.0
    %3681 = vmatpush1.msra.mxu0 %v3622
    %3682 = vmatprep.subr.mxu0 0.0
    %3683 = vmatpush1.msra.mxu0 %v3623
    %3684 = vmatprep.subr.mxu0 0.0
    %3685 = vmatpush1.msra.mxu0 %v3624
    %3686 = vmatprep.subr.mxu0 0.0
    %3687 = vmatpush1.msra.mxu0 %v3625
    %3688 = vmatprep.subr.mxu0 0.0
    %3689 = vmatpush1.msra.mxu0 %v3626
    %3690 = vmatprep.subr.mxu0 0.0
    %3691 = vmatpush1.msra.mxu0 %v3627
    %3692 = vmatprep.subr.mxu0 0.0
    %3693 = vmatpush1.msra.mxu0 0.0
    %3694 = vmatprep.subr.mxu0 0.0
    %3695 = vmatpush1.msra.mxu0 0.0
    %3696 = vmatprep.subr.mxu0 0.0
    %3697 = vmatpush1.msra.mxu0 0.0
    %3698 = vmatprep.subr.mxu0 0.0
    %3699 = vmatpush1.msra.mxu0 0.0
    %3700 = vmatprep.subr.mxu0 0.0
    %3701 = vmatpush1.msra.mxu0 0.0
    %3702 = vmatprep.subr.mxu0 0.0
    %3703 = vmatpush1.msra.mxu0 0.0
    %3704 = vmatprep.subr.mxu0 0.0
    %3705 = vmatpush1.msra.mxu0 0.0
    %3706 = vmatprep.subr.mxu0 0.0
    %3707 = vmatpush1.msra.mxu0 0.0
    %3708 = vmatprep.subr.mxu0 0.0
    %3709 = vmatpush1.msra.mxu0 0.0
    %3710 = vmatprep.subr.mxu0 0.0
    %3711 = vmatpush1.msra.mxu0 0.0
    %3712 = vmatprep.subr.mxu0 0.0
    %3713 = vmatpush1.msra.mxu0 0.0
    %3714 = vmatprep.subr.mxu0 0.0
    %3715 = vmatpush1.msra.mxu0 0.0
    %3716 = vmatprep.subr.mxu0 0.0
    %3717 = vmatpush1.msra.mxu0 0.0
    %3718 = vmatprep.subr.mxu0 0.0
    %3719 = vmatpush1.msra.mxu0 0.0
    %3720 = vmatprep.subr.mxu0 0.0
    %3721 = vmatpush1.msra.mxu0 0.0
    %3722 = vmatprep.subr.mxu0 0.0
    %3723 = vmatpush1.msra.mxu0 0.0
    %3724 = vmatprep.subr.mxu0 0.0
    %3725 = vmatpush1.msra.mxu0 0.0
    %3726 = vmatprep.subr.mxu0 0.0
    %3727 = vmatpush1.msra.mxu0 0.0
    %3728 = vmatprep.subr.mxu0 0.0
    %3729 = vmatpush1.msra.mxu0 0.0
    %3730 = vmatprep.subr.mxu0 0.0
    %3731 = vmatpush1.msra.mxu0 0.0
    %3732 = vmatprep.subr.mxu0 0.0
    %3733 = vmatpush1.msra.mxu0 0.0
    %3734 = vmatprep.subr.mxu0 0.0
    %3735 = vmatpush1.msra.mxu0 0.0
    %3736 = vmatprep.subr.mxu0 0.0
    %3737 = vmatpush1.msra.mxu0 0.0
    %3738 = vmatprep.subr.mxu0 0.0
    %3739 = vmatpush1.msra.mxu0 0.0
    %3740 = vmatprep.mubr.f32.mxu0 0.0
    %3741 = vmatmul.mubr.f32.gmra.mrb[0].mxu0 %v3629
    %v3742 = vpop.f32.mrb[0].mxu0
    %v3743 = vadd.f32 0.0, %v3742
    %v3744 = vpop.f32.mrb[0].mxu0
    %3745 = vmatprep.mubr.f32.mxu0 0.0
    %3746 = vmatmul.mubr.f32.gmra.mrb[0].mxu0 %v3632
    %v3747 = vpop.f32.mrb[0].mxu0
    %v3748 = vadd.f32 0.0, %v3747
    %v3749 = vpop.f32.mrb[0].mxu0
    %3750 = vmatprep.mubr.f32.mxu0 0.0
    %3751 = vmatmul.mubr.f32.gmra.mrb[0].mxu0 %v3635
    %v3752 = vpop.f32.mrb[0].mxu0
    %v3753 = vadd.f32 0.0, %v3752
    %v3754 = vpop.f32.mrb[0].mxu0
    %3755 = vmatprep.mubr.f32.mxu0 0.0
    %3756 = vmatmul.mubr.f32.gmra.mrb[0].mxu0 %v3638
    %v3757 = vpop.f32.mrb[0].mxu0
    %v3758 = vadd.f32 0.0, %v3757
    %v3759 = vpop.f32.mrb[0].mxu0
    %3760 = vmatprep.mubr.f32.mxu0 0.0
    %3761 = vmatmul.mubr.f32.gmra.mrb[0].mxu0 %v3641
    %v3762 = vpop.f32.mrb[0].mxu0
    %v3763 = vadd.f32 0.0, %v3762
    %v3764 = vpop.f32.mrb[0].mxu0
    %3765 = vmatprep.mubr.f32.mxu0 0.0
    %3766 = vmatmul.mubr.f32.gmra.mrb[0].mxu0 %v3644
    %v3767 = vpop.f32.mrb[0].mxu0
    %v3768 = vadd.f32 0.0, %v3767
    %v3769 = vpop.f32.mrb[0].mxu0
    %3770 = vmatprep.mubr.f32.mxu0 0.0
    %3771 = vmatmul.mubr.f32.gmra.mrb[0].mxu0 %v3647
    %v3772 = vpop.f32.mrb[0].mxu0
    %v3773 = vadd.f32 0.0, %v3772
    %v3774 = vpop.f32.mrb[0].mxu0
    %3775 = vmatprep.mubr.f32.mxu0 0.0
    %3776 = vmatmul.mubr.f32.gmra.mrb[0].mxu0 %v3650
    %v3777 = vpop.f32.mrb[0].mxu0
    %v3778 = vadd.f32 0.0, %v3777
    %v3779 = vpop.f32.mrb[0].mxu0
    %3780 = vmatprep.mubr.f32.mxu0 0.0
    %3781 = vmatmul.mubr.f32.gmra.mrb[0].mxu0 %v3653
    %v3782 = vpop.f32.mrb[0].mxu0
    %v3783 = vadd.f32 0.0, %v3782
    %v3784 = vpop.f32.mrb[0].mxu0
    %3785 = vmatprep.mubr.f32.mxu0 0.0
    %3786 = vmatmul.mubr.f32.gmra.mrb[0].mxu0 %v3656
    %v3787 = vpop.f32.mrb[0].mxu0
    %v3788 = vadd.f32 0.0, %v3787
    %v3789 = vpop.f32.mrb[0].mxu0
    %3790 = vmatprep.mubr.f32.mxu0 0.0
    %3791 = vmatmul.mubr.f32.gmra.mrb[0].mxu0 %v3659
    %v3792 = vpop.f32.mrb[0].mxu0
    %v3793 = vadd.f32 0.0, %v3792
    %v3794 = vpop.f32.mrb[0].mxu0
    %3795 = vmatprep.mubr.f32.mxu0 0.0
    %3796 = vmatmul.mubr.f32.gmra.mrb[0].mxu0 %v3662
    %v3797 = vpop.f32.mrb[0].mxu0
    %v3798 = vadd.f32 0.0, %v3797
    %v3799 = vpop.f32.mrb[0].mxu0
    %3800 = vmatprep.mubr.f32.mxu0 0.0
    %3801 = vmatmul.mubr.f32.gmra.mrb[0].mxu0 %v3665
    %v3802 = vpop.f32.mrb[0].mxu0
    %v3803 = vadd.f32 0.0, %v3802
    %v3804 = vpop.f32.mrb[0].mxu0
    %3805 = vmatprep.mubr.f32.mxu0 0.0
    %3806 = vmatmul.mubr.f32.gmra.mrb[0].mxu0 %v3668
    %v3807 = vpop.f32.mrb[0].mxu0
    %v3808 = vadd.f32 0.0, %v3807
    %v3809 = vpop.f32.mrb[0].mxu0
    %3810 = vmatprep.mubr.f32.mxu0 0.0
    %3811 = vmatmul.mubr.f32.gmra.mrb[0].mxu0 %v3671
    %v3812 = vpop.f32.mrb[0].mxu0
    %v3813 = vadd.f32 0.0, %v3812
    %v3814 = vpop.f32.mrb[0].mxu0
    %3815 = vmatprep.mubr.f32.mxu0 0.0
    %3816 = vmatmul.mubr.f32.gmra.mrb[0].mxu0 %v3674
    %v3817 = vpop.f32.mrb[0].mxu0
    %v3818 = vadd.f32 0.0, %v3817
    %v3819 = vpop.f32.mrb[0].mxu0
    %3820 = vdwg.mxu0
    %v3821 = vadd.f32 %v3588, %v3743
    %v3822 = vadd.f32 %v3589, %v3748
    %v3823 = vadd.f32 %v3590, %v3753
    %v3824 = vadd.f32 %v3591, %v3758
    %v3825 = vadd.f32 %v3592, %v3763
    %v3826 = vadd.f32 %v3593, %v3768
    %v3827 = vadd.f32 %v3594, %v3773
    %v3828 = vadd.f32 %v3595, %v3778
    %v3829 = vadd.f32 %v3596, %v3783
    %v3830 = vadd.f32 %v3597, %v3788
    %v3831 = vadd.f32 %v3598, %v3793
    %v3832 = vadd.f32 %v3599, %v3798
    %v3833 = vadd.f32 %v3600, %v3803
    %v3834 = vadd.f32 %v3601, %v3808
    %v3835 = vadd.f32 %v3602, %v3813
    %v3836 = vadd.f32 %v3603, %v3818
    %s3837 = scalar_lea.vmem [#allocation3], 32
    %v3838 = vld [vmem:[%s3837] sm:$0xff]
    %v3839 = vld [vmem:[%s3837 + $0x10] sm:$0xff]
    %v3840 = vld [vmem:[%s3837 + $0x20] sm:$0xff]
    %v3841 = vld [vmem:[%s3837 + $0x30] sm:$0xff]
    %v3842 = vld [vmem:[%s3837 + $0x40] sm:$0xff]
    %v3843 = vld [vmem:[%s3837 + $0x50] sm:$0xff]
    %v3844 = vld [vmem:[%s3837 + $0x60] sm:$0xff]
    %v3845 = vld [vmem:[%s3837 + $0x70] sm:$0xff]
    %v3846 = vld [vmem:[%s3837 + $0xa0] sm:$0xff]
    %v3847 = vld [vmem:[%s3837 + $0xb0] sm:$0xff]
    %v3848 = vld [vmem:[%s3837 + $0xc0] sm:$0xff]
    %v3849 = vld [vmem:[%s3837 + $0xd0] sm:$0xff]
    %v3850 = vld [vmem:[%s3837 + $0xe0] sm:$0xff]
    %v3851 = vld [vmem:[%s3837 + $0xf0] sm:$0xff]
    %v3852 = vld [vmem:[%s3837 + $0x100] sm:$0xff]
    %v3853 = vld [vmem:[%s3837 + $0x110] sm:$0xff]
    %v3854 = vld [vmem:[%s5 + $0x180] sm:$0xff]
    %v3855 = vld [vmem:[%s5 + $0x188] sm:$0xff]
    %v3856 = vld [vmem:[%s5 + $0x190] sm:$0xff]
    %v3857 = vld [vmem:[%s5 + $0x198] sm:$0xff]
    %v3858 = vld [vmem:[%s5 + $0x1a0] sm:$0xff]
    %v3859 = vld [vmem:[%s5 + $0x1a8] sm:$0xff]
    %v3860 = vld [vmem:[%s5 + $0x1b0] sm:$0xff]
    %v3861 = vld [vmem:[%s5 + $0x1b8] sm:$0xff]
    %v3863 = vsel %vm86, %v3838, 0
    %v3866 = vsel %vm86, %v3839, 0
    %v3869 = vsel %vm86, %v3840, 0
    %v3872 = vsel %vm86, %v3841, 0
    %v3875 = vsel %vm86, %v3842, 0
    %v3878 = vsel %vm86, %v3843, 0
    %v3881 = vsel %vm86, %v3844, 0
    %v3884 = vsel %vm86, %v3845, 0
    %v3887 = vsel %vm86, %v3846, 0
    %v3890 = vsel %vm86, %v3847, 0
    %v3893 = vsel %vm86, %v3848, 0
    %v3896 = vsel %vm86, %v3849, 0
    %v3899 = vsel %vm86, %v3850, 0
    %v3902 = vsel %vm86, %v3851, 0
    %v3905 = vsel %vm86, %v3852, 0
    %v3908 = vsel %vm86, %v3853, 0
    %3910 = vmatprep.subr.mxu0 0.0
    %3911 = vmatpush1.msra.mxu0 %v3854
    %3912 = vmatprep.subr.mxu0 0.0
    %3913 = vmatpush1.msra.mxu0 %v3855
    %3914 = vmatprep.subr.mxu0 0.0
    %3915 = vmatpush1.msra.mxu0 %v3856
    %3916 = vmatprep.subr.mxu0 0.0
    %3917 = vmatpush1.msra.mxu0 %v3857
    %3918 = vmatprep.subr.mxu0 0.0
    %3919 = vmatpush1.msra.mxu0 %v3858
    %3920 = vmatprep.subr.mxu0 0.0
    %3921 = vmatpush1.msra.mxu0 %v3859
    %3922 = vmatprep.subr.mxu0 0.0
    %3923 = vmatpush1.msra.mxu0 %v3860
    %3924 = vmatprep.subr.mxu0 0.0
    %3925 = vmatpush1.msra.mxu0 %v3861
    %3926 = vmatprep.subr.mxu0 0.0
    %3927 = vmatpush1.msra.mxu0 0.0
    %3928 = vmatprep.subr.mxu0 0.0
    %3929 = vmatpush1.msra.mxu0 0.0
    %3930 = vmatprep.subr.mxu0 0.0
    %3931 = vmatpush1.msra.mxu0 0.0
    %3932 = vmatprep.subr.mxu0 0.0
    %3933 = vmatpush1.msra.mxu0 0.0
    %3934 = vmatprep.subr.mxu0 0.0
    %3935 = vmatpush1.msra.mxu0 0.0
    %3936 = vmatprep.subr.mxu0 0.0
    %3937 = vmatpush1.msra.mxu0 0.0
    %3938 = vmatprep.subr.mxu0 0.0
    %3939 = vmatpush1.msra.mxu0 0.0
    %3940 = vmatprep.subr.mxu0 0.0
    %3941 = vmatpush1.msra.mxu0 0.0
    %3942 = vmatprep.subr.mxu0 0.0
    %3943 = vmatpush1.msra.mxu0 0.0
    %3944 = vmatprep.subr.mxu0 0.0
    %3945 = vmatpush1.msra.mxu0 0.0
    %3946 = vmatprep.subr.mxu0 0.0
    %3947 = vmatpush1.msra.mxu0 0.0
    %3948 = vmatprep.subr.mxu0 0.0
    %3949 = vmatpush1.msra.mxu0 0.0
    %3950 = vmatprep.subr.mxu0 0.0
    %3951 = vmatpush1.msra.mxu0 0.0
    %3952 = vmatprep.subr.mxu0 0.0
    %3953 = vmatpush1.msra.mxu0 0.0
    %3954 = vmatprep.subr.mxu0 0.0
    %3955 = vmatpush1.msra.mxu0 0.0
    %3956 = vmatprep.subr.mxu0 0.0
    %3957 = vmatpush1.msra.mxu0 0.0
    %3958 = vmatprep.subr.mxu0 0.0
    %3959 = vmatpush1.msra.mxu0 0.0
    %3960 = vmatprep.subr.mxu0 0.0
    %3961 = vmatpush1.msra.mxu0 0.0
    %3962 = vmatprep.subr.mxu0 0.0
    %3963 = vmatpush1.msra.mxu0 0.0
    %3964 = vmatprep.subr.mxu0 0.0
    %3965 = vmatpush1.msra.mxu0 0.0
    %3966 = vmatprep.subr.mxu0 0.0
    %3967 = vmatpush1.msra.mxu0 0.0
    %3968 = vmatprep.subr.mxu0 0.0
    %3969 = vmatpush1.msra.mxu0 0.0
    %3970 = vmatprep.subr.mxu0 0.0
    %3971 = vmatpush1.msra.mxu0 0.0
    %3972 = vmatprep.subr.mxu0 0.0
    %3973 = vmatpush1.msra.mxu0 0.0
    %3974 = vmatprep.mubr.f32.mxu0 0.0
    %3975 = vmatmul.mubr.f32.gmra.mrb[0].mxu0 %v3863
    %v3976 = vpop.f32.mrb[0].mxu0
    %v3977 = vadd.f32 0.0, %v3976
    %v3978 = vpop.f32.mrb[0].mxu0
    %3979 = vmatprep.mubr.f32.mxu0 0.0
    %3980 = vmatmul.mubr.f32.gmra.mrb[0].mxu0 %v3866
    %v3981 = vpop.f32.mrb[0].mxu0
    %v3982 = vadd.f32 0.0, %v3981
    %v3983 = vpop.f32.mrb[0].mxu0
    %3984 = vmatprep.mubr.f32.mxu0 0.0
    %3985 = vmatmul.mubr.f32.gmra.mrb[0].mxu0 %v3869
    %v3986 = vpop.f32.mrb[0].mxu0
    %v3987 = vadd.f32 0.0, %v3986
    %v3988 = vpop.f32.mrb[0].mxu0
    %3989 = vmatprep.mubr.f32.mxu0 0.0
    %3990 = vmatmul.mubr.f32.gmra.mrb[0].mxu0 %v3872
    %v3991 = vpop.f32.mrb[0].mxu0
    %v3992 = vadd.f32 0.0, %v3991
    %v3993 = vpop.f32.mrb[0].mxu0
    %3994 = vmatprep.mubr.f32.mxu0 0.0
    %3995 = vmatmul.mubr.f32.gmra.mrb[0].mxu0 %v3875
    %v3996 = vpop.f32.mrb[0].mxu0
    %v3997 = vadd.f32 0.0, %v3996
    %v3998 = vpop.f32.mrb[0].mxu0
    %3999 = vmatprep.mubr.f32.mxu0 0.0
    %4000 = vmatmul.mubr.f32.gmra.mrb[0].mxu0 %v3878
    %v4001 = vpop.f32.mrb[0].mxu0
    %v4002 = vadd.f32 0.0, %v4001
    %v4003 = vpop.f32.mrb[0].mxu0
    %4004 = vmatprep.mubr.f32.mxu0 0.0
    %4005 = vmatmul.mubr.f32.gmra.mrb[0].mxu0 %v3881
    %v4006 = vpop.f32.mrb[0].mxu0
    %v4007 = vadd.f32 0.0, %v4006
    %v4008 = vpop.f32.mrb[0].mxu0
    %4009 = vmatprep.mubr.f32.mxu0 0.0
    %4010 = vmatmul.mubr.f32.gmra.mrb[0].mxu0 %v3884
    %v4011 = vpop.f32.mrb[0].mxu0
    %v4012 = vadd.f32 0.0, %v4011
    %v4013 = vpop.f32.mrb[0].mxu0
    %4014 = vmatprep.mubr.f32.mxu0 0.0
    %4015 = vmatmul.mubr.f32.gmra.mrb[0].mxu0 %v3887
    %v4016 = vpop.f32.mrb[0].mxu0
    %v4017 = vadd.f32 0.0, %v4016
    %v4018 = vpop.f32.mrb[0].mxu0
    %4019 = vmatprep.mubr.f32.mxu0 0.0
    %4020 = vmatmul.mubr.f32.gmra.mrb[0].mxu0 %v3890
    %v4021 = vpop.f32.mrb[0].mxu0
    %v4022 = vadd.f32 0.0, %v4021
    %v4023 = vpop.f32.mrb[0].mxu0
    %4024 = vmatprep.mubr.f32.mxu0 0.0
    %4025 = vmatmul.mubr.f32.gmra.mrb[0].mxu0 %v3893
    %v4026 = vpop.f32.mrb[0].mxu0
    %v4027 = vadd.f32 0.0, %v4026
    %v4028 = vpop.f32.mrb[0].mxu0
    %4029 = vmatprep.mubr.f32.mxu0 0.0
    %4030 = vmatmul.mubr.f32.gmra.mrb[0].mxu0 %v3896
    %v4031 = vpop.f32.mrb[0].mxu0
    %v4032 = vadd.f32 0.0, %v4031
    %v4033 = vpop.f32.mrb[0].mxu0
    %4034 = vmatprep.mubr.f32.mxu0 0.0
    %4035 = vmatmul.mubr.f32.gmra.mrb[0].mxu0 %v3899
    %v4036 = vpop.f32.mrb[0].mxu0
    %v4037 = vadd.f32 0.0, %v4036
    %v4038 = vpop.f32.mrb[0].mxu0
    %4039 = vmatprep.mubr.f32.mxu0 0.0
    %4040 = vmatmul.mubr.f32.gmra.mrb[0].mxu0 %v3902
    %v4041 = vpop.f32.mrb[0].mxu0
    %v4042 = vadd.f32 0.0, %v4041
    %v4043 = vpop.f32.mrb[0].mxu0
    %4044 = vmatprep.mubr.f32.mxu0 0.0
    %4045 = vmatmul.mubr.f32.gmra.mrb[0].mxu0 %v3905
    %v4046 = vpop.f32.mrb[0].mxu0
    %v4047 = vadd.f32 0.0, %v4046
    %v4048 = vpop.f32.mrb[0].mxu0
    %4049 = vmatprep.mubr.f32.mxu0 0.0
    %4050 = vmatmul.mubr.f32.gmra.mrb[0].mxu0 %v3908
    %v4051 = vpop.f32.mrb[0].mxu0
    %v4052 = vadd.f32 0.0, %v4051
    %v4053 = vpop.f32.mrb[0].mxu0
    %4054 = vdwg.mxu0
    %v4055 = vadd.f32 %v3821, %v3977
    %v4056 = vadd.f32 %v3822, %v3982
    %v4057 = vadd.f32 %v3823, %v3987
    %v4058 = vadd.f32 %v3824, %v3992
    %v4059 = vadd.f32 %v3825, %v3997
    %v4060 = vadd.f32 %v3826, %v4002
    %v4061 = vadd.f32 %v3827, %v4007
    %v4062 = vadd.f32 %v3828, %v4012
    %v4063 = vadd.f32 %v3829, %v4017
    %v4064 = vadd.f32 %v3830, %v4022
    %v4065 = vadd.f32 %v3831, %v4027
    %v4066 = vadd.f32 %v3832, %v4032
    %v4067 = vadd.f32 %v3833, %v4037
    %v4068 = vadd.f32 %v3834, %v4042
    %v4069 = vadd.f32 %v3835, %v4047
    %v4070 = vadd.f32 %v3836, %v4052
    %v4071 = vld [vmem:[%s3837 + $0x1] sm:$0xff]
    %v4072 = vld [vmem:[%s3837 + $0x11] sm:$0xff]
    %v4073 = vld [vmem:[%s3837 + $0x21] sm:$0xff]
    %v4074 = vld [vmem:[%s3837 + $0x31] sm:$0xff]
    %v4075 = vld [vmem:[%s3837 + $0x41] sm:$0xff]
    %v4076 = vld [vmem:[%s3837 + $0x51] sm:$0xff]
    %v4077 = vld [vmem:[%s3837 + $0x61] sm:$0xff]
    %v4078 = vld [vmem:[%s3837 + $0x71] sm:$0xff]
    %v4079 = vld [vmem:[%s3837 + $0xa1] sm:$0xff]
    %v4080 = vld [vmem:[%s3837 + $0xb1] sm:$0xff]
    %v4081 = vld [vmem:[%s3837 + $0xc1] sm:$0xff]
    %v4082 = vld [vmem:[%s3837 + $0xd1] sm:$0xff]
    %v4083 = vld [vmem:[%s3837 + $0xe1] sm:$0xff]
    %v4084 = vld [vmem:[%s3837 + $0xf1] sm:$0xff]
    %v4085 = vld [vmem:[%s3837 + $0x101] sm:$0xff]
    %v4086 = vld [vmem:[%s3837 + $0x111] sm:$0xff]
    %v4087 = vld [vmem:[%s5 + $0x1c0] sm:$0xff]
    %v4088 = vld [vmem:[%s5 + $0x1c8] sm:$0xff]
    %v4089 = vld [vmem:[%s5 + $0x1d0] sm:$0xff]
    %v4090 = vld [vmem:[%s5 + $0x1d8] sm:$0xff]
    %v4091 = vld [vmem:[%s5 + $0x1e0] sm:$0xff]
    %v4092 = vld [vmem:[%s5 + $0x1e8] sm:$0xff]
    %v4093 = vld [vmem:[%s5 + $0x1f0] sm:$0xff]
    %v4094 = vld [vmem:[%s5 + $0x1f8] sm:$0xff]
    %v4096 = vsel %vm86, %v4071, 0
    %v4099 = vsel %vm86, %v4072, 0
    %v4102 = vsel %vm86, %v4073, 0
    %v4105 = vsel %vm86, %v4074, 0
    %v4108 = vsel %vm86, %v4075, 0
    %v4111 = vsel %vm86, %v4076, 0
    %v4114 = vsel %vm86, %v4077, 0
    %v4117 = vsel %vm86, %v4078, 0
    %v4120 = vsel %vm86, %v4079, 0
    %v4123 = vsel %vm86, %v4080, 0
    %v4126 = vsel %vm86, %v4081, 0
    %v4129 = vsel %vm86, %v4082, 0
    %v4132 = vsel %vm86, %v4083, 0
    %v4135 = vsel %vm86, %v4084, 0
    %v4138 = vsel %vm86, %v4085, 0
    %v4141 = vsel %vm86, %v4086, 0
    %4143 = vmatprep.subr.mxu0 0.0
    %4144 = vmatpush1.msra.mxu0 %v4087
    %4145 = vmatprep.subr.mxu0 0.0
    %4146 = vmatpush1.msra.mxu0 %v4088
    %4147 = vmatprep.subr.mxu0 0.0
    %4148 = vmatpush1.msra.mxu0 %v4089
    %4149 = vmatprep.subr.mxu0 0.0
    %4150 = vmatpush1.msra.mxu0 %v4090
    %4151 = vmatprep.subr.mxu0 0.0
    %4152 = vmatpush1.msra.mxu0 %v4091
    %4153 = vmatprep.subr.mxu0 0.0
    %4154 = vmatpush1.msra.mxu0 %v4092
    %4155 = vmatprep.subr.mxu0 0.0
    %4156 = vmatpush1.msra.mxu0 %v4093
    %4157 = vmatprep.subr.mxu0 0.0
    %4158 = vmatpush1.msra.mxu0 %v4094
    %4159 = vmatprep.subr.mxu0 0.0
    %4160 = vmatpush1.msra.mxu0 0.0
    %4161 = vmatprep.subr.mxu0 0.0
    %4162 = vmatpush1.msra.mxu0 0.0
    %4163 = vmatprep.subr.mxu0 0.0
    %4164 = vmatpush1.msra.mxu0 0.0
    %4165 = vmatprep.subr.mxu0 0.0
    %4166 = vmatpush1.msra.mxu0 0.0
    %4167 = vmatprep.subr.mxu0 0.0
    %4168 = vmatpush1.msra.mxu0 0.0
    %4169 = vmatprep.subr.mxu0 0.0
    %4170 = vmatpush1.msra.mxu0 0.0
    %4171 = vmatprep.subr.mxu0 0.0
    %4172 = vmatpush1.msra.mxu0 0.0
    %4173 = vmatprep.subr.mxu0 0.0
    %4174 = vmatpush1.msra.mxu0 0.0
    %4175 = vmatprep.subr.mxu0 0.0
    %4176 = vmatpush1.msra.mxu0 0.0
    %4177 = vmatprep.subr.mxu0 0.0
    %4178 = vmatpush1.msra.mxu0 0.0
    %4179 = vmatprep.subr.mxu0 0.0
    %4180 = vmatpush1.msra.mxu0 0.0
    %4181 = vmatprep.subr.mxu0 0.0
    %4182 = vmatpush1.msra.mxu0 0.0
    %4183 = vmatprep.subr.mxu0 0.0
    %4184 = vmatpush1.msra.mxu0 0.0
    %4185 = vmatprep.subr.mxu0 0.0
    %4186 = vmatpush1.msra.mxu0 0.0
    %4187 = vmatprep.subr.mxu0 0.0
    %4188 = vmatpush1.msra.mxu0 0.0
    %4189 = vmatprep.subr.mxu0 0.0
    %4190 = vmatpush1.msra.mxu0 0.0
    %4191 = vmatprep.subr.mxu0 0.0
    %4192 = vmatpush1.msra.mxu0 0.0
    %4193 = vmatprep.subr.mxu0 0.0
    %4194 = vmatpush1.msra.mxu0 0.0
    %4195 = vmatprep.subr.mxu0 0.0
    %4196 = vmatpush1.msra.mxu0 0.0
    %4197 = vmatprep.subr.mxu0 0.0
    %4198 = vmatpush1.msra.mxu0 0.0
    %4199 = vmatprep.subr.mxu0 0.0
    %4200 = vmatpush1.msra.mxu0 0.0
    %4201 = vmatprep.subr.mxu0 0.0
    %4202 = vmatpush1.msra.mxu0 0.0
    %4203 = vmatprep.subr.mxu0 0.0
    %4204 = vmatpush1.msra.mxu0 0.0
    %4205 = vmatprep.subr.mxu0 0.0
    %4206 = vmatpush1.msra.mxu0 0.0
    %4207 = vmatprep.mubr.f32.mxu0 0.0
    %4208 = vmatmul.mubr.f32.gmra.mrb[0].mxu0 %v4096
    %v4209 = vpop.f32.mrb[0].mxu0
    %v4210 = vadd.f32 0.0, %v4209
    %v4211 = vpop.f32.mrb[0].mxu0
    %4212 = vmatprep.mubr.f32.mxu0 0.0
    %4213 = vmatmul.mubr.f32.gmra.mrb[0].mxu0 %v4099
    %v4214 = vpop.f32.mrb[0].mxu0
    %v4215 = vadd.f32 0.0, %v4214
    %v4216 = vpop.f32.mrb[0].mxu0
    %4217 = vmatprep.mubr.f32.mxu0 0.0
    %4218 = vmatmul.mubr.f32.gmra.mrb[0].mxu0 %v4102
    %v4219 = vpop.f32.mrb[0].mxu0
    %v4220 = vadd.f32 0.0, %v4219
    %v4221 = vpop.f32.mrb[0].mxu0
    %4222 = vmatprep.mubr.f32.mxu0 0.0
    %4223 = vmatmul.mubr.f32.gmra.mrb[0].mxu0 %v4105
    %v4224 = vpop.f32.mrb[0].mxu0
    %v4225 = vadd.f32 0.0, %v4224
    %v4226 = vpop.f32.mrb[0].mxu0
    %4227 = vmatprep.mubr.f32.mxu0 0.0
    %4228 = vmatmul.mubr.f32.gmra.mrb[0].mxu0 %v4108
    %v4229 = vpop.f32.mrb[0].mxu0
    %v4230 = vadd.f32 0.0, %v4229
    %v4231 = vpop.f32.mrb[0].mxu0
    %4232 = vmatprep.mubr.f32.mxu0 0.0
    %4233 = vmatmul.mubr.f32.gmra.mrb[0].mxu0 %v4111
    %v4234 = vpop.f32.mrb[0].mxu0
    %v4235 = vadd.f32 0.0, %v4234
    %v4236 = vpop.f32.mrb[0].mxu0
    %4237 = vmatprep.mubr.f32.mxu0 0.0
    %4238 = vmatmul.mubr.f32.gmra.mrb[0].mxu0 %v4114
    %v4239 = vpop.f32.mrb[0].mxu0
    %v4240 = vadd.f32 0.0, %v4239
    %v4241 = vpop.f32.mrb[0].mxu0
    %4242 = vmatprep.mubr.f32.mxu0 0.0
    %4243 = vmatmul.mubr.f32.gmra.mrb[0].mxu0 %v4117
    %v4244 = vpop.f32.mrb[0].mxu0
    %v4245 = vadd.f32 0.0, %v4244
    %v4246 = vpop.f32.mrb[0].mxu0
    %4247 = vmatprep.mubr.f32.mxu0 0.0
    %4248 = vmatmul.mubr.f32.gmra.mrb[0].mxu0 %v4120
    %v4249 = vpop.f32.mrb[0].mxu0
    %v4250 = vadd.f32 0.0, %v4249
    %v4251 = vpop.f32.mrb[0].mxu0
    %4252 = vmatprep.mubr.f32.mxu0 0.0
    %4253 = vmatmul.mubr.f32.gmra.mrb[0].mxu0 %v4123
    %v4254 = vpop.f32.mrb[0].mxu0
    %v4255 = vadd.f32 0.0, %v4254
    %v4256 = vpop.f32.mrb[0].mxu0
    %4257 = vmatprep.mubr.f32.mxu0 0.0
    %4258 = vmatmul.mubr.f32.gmra.mrb[0].mxu0 %v4126
    %v4259 = vpop.f32.mrb[0].mxu0
    %v4260 = vadd.f32 0.0, %v4259
    %v4261 = vpop.f32.mrb[0].mxu0
    %4262 = vmatprep.mubr.f32.mxu0 0.0
    %4263 = vmatmul.mubr.f32.gmra.mrb[0].mxu0 %v4129
    %v4264 = vpop.f32.mrb[0].mxu0
    %v4265 = vadd.f32 0.0, %v4264
    %v4266 = vpop.f32.mrb[0].mxu0
    %4267 = vmatprep.mubr.f32.mxu0 0.0
    %4268 = vmatmul.mubr.f32.gmra.mrb[0].mxu0 %v4132
    %v4269 = vpop.f32.mrb[0].mxu0
    %v4270 = vadd.f32 0.0, %v4269
    %v4271 = vpop.f32.mrb[0].mxu0
    %4272 = vmatprep.mubr.f32.mxu0 0.0
    %4273 = vmatmul.mubr.f32.gmra.mrb[0].mxu0 %v4135
    %v4274 = vpop.f32.mrb[0].mxu0
    %v4275 = vadd.f32 0.0, %v4274
    %v4276 = vpop.f32.mrb[0].mxu0
    %4277 = vmatprep.mubr.f32.mxu0 0.0
    %4278 = vmatmul.mubr.f32.gmra.mrb[0].mxu0 %v4138
    %v4279 = vpop.f32.mrb[0].mxu0
    %v4280 = vadd.f32 0.0, %v4279
    %v4281 = vpop.f32.mrb[0].mxu0
    %4282 = vmatprep.mubr.f32.mxu0 0.0
    %4283 = vmatmul.mubr.f32.gmra.mrb[0].mxu0 %v4141
    %v4284 = vpop.f32.mrb[0].mxu0
    %v4285 = vadd.f32 0.0, %v4284
    %v4286 = vpop.f32.mrb[0].mxu0
    %4287 = vdwg.mxu0
    %v4288 = vadd.f32 %v4055, %v4210
    %v4289 = vadd.f32 %v4056, %v4215
    %v4290 = vadd.f32 %v4057, %v4220
    %v4291 = vadd.f32 %v4058, %v4225
    %v4292 = vadd.f32 %v4059, %v4230
    %v4293 = vadd.f32 %v4060, %v4235
    %v4294 = vadd.f32 %v4061, %v4240
    %v4295 = vadd.f32 %v4062, %v4245
    %v4296 = vadd.f32 %v4063, %v4250
    %v4297 = vadd.f32 %v4064, %v4255
    %v4298 = vadd.f32 %v4065, %v4260
    %v4299 = vadd.f32 %v4066, %v4265
    %v4300 = vadd.f32 %v4067, %v4270
    %v4301 = vadd.f32 %v4068, %v4275
    %v4302 = vadd.f32 %v4069, %v4280
    %v4303 = vadd.f32 %v4070, %v4285
    %v4304 = vld [vmem:[%s3837 + $0x2] sm:$0xff]
    %v4305 = vld [vmem:[%s3837 + $0x12] sm:$0xff]
    %v4306 = vld [vmem:[%s3837 + $0x22] sm:$0xff]
    %v4307 = vld [vmem:[%s3837 + $0x32] sm:$0xff]
    %v4308 = vld [vmem:[%s3837 + $0x42] sm:$0xff]
    %v4309 = vld [vmem:[%s3837 + $0x52] sm:$0xff]
    %v4310 = vld [vmem:[%s3837 + $0x62] sm:$0xff]
    %v4311 = vld [vmem:[%s3837 + $0x72] sm:$0xff]
    %v4312 = vld [vmem:[%s3837 + $0xa2] sm:$0xff]
    %v4313 = vld [vmem:[%s3837 + $0xb2] sm:$0xff]
    %v4314 = vld [vmem:[%s3837 + $0xc2] sm:$0xff]
    %v4315 = vld [vmem:[%s3837 + $0xd2] sm:$0xff]
    %v4316 = vld [vmem:[%s3837 + $0xe2] sm:$0xff]
    %v4317 = vld [vmem:[%s3837 + $0xf2] sm:$0xff]
    %v4318 = vld [vmem:[%s3837 + $0x102] sm:$0xff]
    %v4319 = vld [vmem:[%s3837 + $0x112] sm:$0xff]
    %v4320 = vld [vmem:[%s5 + $0x200] sm:$0xff]
    %v4321 = vld [vmem:[%s5 + $0x208] sm:$0xff]
    %v4322 = vld [vmem:[%s5 + $0x210] sm:$0xff]
    %v4323 = vld [vmem:[%s5 + $0x218] sm:$0xff]
    %v4324 = vld [vmem:[%s5 + $0x220] sm:$0xff]
    %v4325 = vld [vmem:[%s5 + $0x228] sm:$0xff]
    %v4326 = vld [vmem:[%s5 + $0x230] sm:$0xff]
    %v4327 = vld [vmem:[%s5 + $0x238] sm:$0xff]
    %v4329 = vsel %vm86, %v4304, 0
    %v4332 = vsel %vm86, %v4305, 0
    %v4335 = vsel %vm86, %v4306, 0
    %v4338 = vsel %vm86, %v4307, 0
    %v4341 = vsel %vm86, %v4308, 0
    %v4344 = vsel %vm86, %v4309, 0
    %v4347 = vsel %vm86, %v4310, 0
    %v4350 = vsel %vm86, %v4311, 0
    %v4353 = vsel %vm86, %v4312, 0
    %v4356 = vsel %vm86, %v4313, 0
    %v4359 = vsel %vm86, %v4314, 0
    %v4362 = vsel %vm86, %v4315, 0
    %v4365 = vsel %vm86, %v4316, 0
    %v4368 = vsel %vm86, %v4317, 0
    %v4371 = vsel %vm86, %v4318, 0
    %v4374 = vsel %vm86, %v4319, 0
    %4376 = vmatprep.subr.mxu0 0.0
    %4377 = vmatpush1.msra.mxu0 %v4320
    %4378 = vmatprep.subr.mxu0 0.0
    %4379 = vmatpush1.msra.mxu0 %v4321
    %4380 = vmatprep.subr.mxu0 0.0
    %4381 = vmatpush1.msra.mxu0 %v4322
    %4382 = vmatprep.subr.mxu0 0.0
    %4383 = vmatpush1.msra.mxu0 %v4323
    %4384 = vmatprep.subr.mxu0 0.0
    %4385 = vmatpush1.msra.mxu0 %v4324
    %4386 = vmatprep.subr.mxu0 0.0
    %4387 = vmatpush1.msra.mxu0 %v4325
    %4388 = vmatprep.subr.mxu0 0.0
    %4389 = vmatpush1.msra.mxu0 %v4326
    %4390 = vmatprep.subr.mxu0 0.0
    %4391 = vmatpush1.msra.mxu0 %v4327
    %4392 = vmatprep.subr.mxu0 0.0
    %4393 = vmatpush1.msra.mxu0 0.0
    %4394 = vmatprep.subr.mxu0 0.0
    %4395 = vmatpush1.msra.mxu0 0.0
    %4396 = vmatprep.subr.mxu0 0.0
    %4397 = vmatpush1.msra.mxu0 0.0
    %4398 = vmatprep.subr.mxu0 0.0
    %4399 = vmatpush1.msra.mxu0 0.0
    %4400 = vmatprep.subr.mxu0 0.0
    %4401 = vmatpush1.msra.mxu0 0.0
    %4402 = vmatprep.subr.mxu0 0.0
    %4403 = vmatpush1.msra.mxu0 0.0
    %4404 = vmatprep.subr.mxu0 0.0
    %4405 = vmatpush1.msra.mxu0 0.0
    %4406 = vmatprep.subr.mxu0 0.0
    %4407 = vmatpush1.msra.mxu0 0.0
    %4408 = vmatprep.subr.mxu0 0.0
    %4409 = vmatpush1.msra.mxu0 0.0
    %4410 = vmatprep.subr.mxu0 0.0
    %4411 = vmatpush1.msra.mxu0 0.0
    %4412 = vmatprep.subr.mxu0 0.0
    %4413 = vmatpush1.msra.mxu0 0.0
    %4414 = vmatprep.subr.mxu0 0.0
    %4415 = vmatpush1.msra.mxu0 0.0
    %4416 = vmatprep.subr.mxu0 0.0
    %4417 = vmatpush1.msra.mxu0 0.0
    %4418 = vmatprep.subr.mxu0 0.0
    %4419 = vmatpush1.msra.mxu0 0.0
    %4420 = vmatprep.subr.mxu0 0.0
    %4421 = vmatpush1.msra.mxu0 0.0
    %4422 = vmatprep.subr.mxu0 0.0
    %4423 = vmatpush1.msra.mxu0 0.0
    %4424 = vmatprep.subr.mxu0 0.0
    %4425 = vmatpush1.msra.mxu0 0.0
    %4426 = vmatprep.subr.mxu0 0.0
    %4427 = vmatpush1.msra.mxu0 0.0
    %4428 = vmatprep.subr.mxu0 0.0
    %4429 = vmatpush1.msra.mxu0 0.0
    %4430 = vmatprep.subr.mxu0 0.0
    %4431 = vmatpush1.msra.mxu0 0.0
    %4432 = vmatprep.subr.mxu0 0.0
    %4433 = vmatpush1.msra.mxu0 0.0
    %4434 = vmatprep.subr.mxu0 0.0
    %4435 = vmatpush1.msra.mxu0 0.0
    %4436 = vmatprep.subr.mxu0 0.0
    %4437 = vmatpush1.msra.mxu0 0.0
    %4438 = vmatprep.subr.mxu0 0.0
    %4439 = vmatpush1.msra.mxu0 0.0
    %4440 = vmatprep.mubr.f32.mxu0 0.0
    %4441 = vmatmul.mubr.f32.gmra.mrb[0].mxu0 %v4329
    %v4442 = vpop.f32.mrb[0].mxu0
    %v4443 = vadd.f32 0.0, %v4442
    %v4444 = vpop.f32.mrb[0].mxu0
    %4445 = vmatprep.mubr.f32.mxu0 0.0
    %4446 = vmatmul.mubr.f32.gmra.mrb[0].mxu0 %v4332
    %v4447 = vpop.f32.mrb[0].mxu0
    %v4448 = vadd.f32 0.0, %v4447
    %v4449 = vpop.f32.mrb[0].mxu0
    %4450 = vmatprep.mubr.f32.mxu0 0.0
    %4451 = vmatmul.mubr.f32.gmra.mrb[0].mxu0 %v4335
    %v4452 = vpop.f32.mrb[0].mxu0
    %v4453 = vadd.f32 0.0, %v4452
    %v4454 = vpop.f32.mrb[0].mxu0
    %4455 = vmatprep.mubr.f32.mxu0 0.0
    %4456 = vmatmul.mubr.f32.gmra.mrb[0].mxu0 %v4338
    %v4457 = vpop.f32.mrb[0].mxu0
    %v4458 = vadd.f32 0.0, %v4457
    %v4459 = vpop.f32.mrb[0].mxu0
    %4460 = vmatprep.mubr.f32.mxu0 0.0
    %4461 = vmatmul.mubr.f32.gmra.mrb[0].mxu0 %v4341
    %v4462 = vpop.f32.mrb[0].mxu0
    %v4463 = vadd.f32 0.0, %v4462
    %v4464 = vpop.f32.mrb[0].mxu0
    %4465 = vmatprep.mubr.f32.mxu0 0.0
    %4466 = vmatmul.mubr.f32.gmra.mrb[0].mxu0 %v4344
    %v4467 = vpop.f32.mrb[0].mxu0
    %v4468 = vadd.f32 0.0, %v4467
    %v4469 = vpop.f32.mrb[0].mxu0
    %4470 = vmatprep.mubr.f32.mxu0 0.0
    %4471 = vmatmul.mubr.f32.gmra.mrb[0].mxu0 %v4347
    %v4472 = vpop.f32.mrb[0].mxu0
    %v4473 = vadd.f32 0.0, %v4472
    %v4474 = vpop.f32.mrb[0].mxu0
    %4475 = vmatprep.mubr.f32.mxu0 0.0
    %4476 = vmatmul.mubr.f32.gmra.mrb[0].mxu0 %v4350
    %v4477 = vpop.f32.mrb[0].mxu0
    %v4478 = vadd.f32 0.0, %v4477
    %v4479 = vpop.f32.mrb[0].mxu0
    %4480 = vmatprep.mubr.f32.mxu0 0.0
    %4481 = vmatmul.mubr.f32.gmra.mrb[0].mxu0 %v4353
    %v4482 = vpop.f32.mrb[0].mxu0
    %v4483 = vadd.f32 0.0, %v4482
    %v4484 = vpop.f32.mrb[0].mxu0
    %4485 = vmatprep.mubr.f32.mxu0 0.0
    %4486 = vmatmul.mubr.f32.gmra.mrb[0].mxu0 %v4356
    %v4487 = vpop.f32.mrb[0].mxu0
    %v4488 = vadd.f32 0.0, %v4487
    %v4489 = vpop.f32.mrb[0].mxu0
    %4490 = vmatprep.mubr.f32.mxu0 0.0
    %4491 = vmatmul.mubr.f32.gmra.mrb[0].mxu0 %v4359
    %v4492 = vpop.f32.mrb[0].mxu0
    %v4493 = vadd.f32 0.0, %v4492
    %v4494 = vpop.f32.mrb[0].mxu0
    %4495 = vmatprep.mubr.f32.mxu0 0.0
    %4496 = vmatmul.mubr.f32.gmra.mrb[0].mxu0 %v4362
    %v4497 = vpop.f32.mrb[0].mxu0
    %v4498 = vadd.f32 0.0, %v4497
    %v4499 = vpop.f32.mrb[0].mxu0
    %4500 = vmatprep.mubr.f32.mxu0 0.0
    %4501 = vmatmul.mubr.f32.gmra.mrb[0].mxu0 %v4365
    %v4502 = vpop.f32.mrb[0].mxu0
    %v4503 = vadd.f32 0.0, %v4502
    %v4504 = vpop.f32.mrb[0].mxu0
    %4505 = vmatprep.mubr.f32.mxu0 0.0
    %4506 = vmatmul.mubr.f32.gmra.mrb[0].mxu0 %v4368
    %v4507 = vpop.f32.mrb[0].mxu0
    %v4508 = vadd.f32 0.0, %v4507
    %v4509 = vpop.f32.mrb[0].mxu0
    %4510 = vmatprep.mubr.f32.mxu0 0.0
    %4511 = vmatmul.mubr.f32.gmra.mrb[0].mxu0 %v4371
    %v4512 = vpop.f32.mrb[0].mxu0
    %v4513 = vadd.f32 0.0, %v4512
    %v4514 = vpop.f32.mrb[0].mxu0
    %4515 = vmatprep.mubr.f32.mxu0 0.0
    %4516 = vmatmul.mubr.f32.gmra.mrb[0].mxu0 %v4374
    %v4517 = vpop.f32.mrb[0].mxu0
    %v4518 = vadd.f32 0.0, %v4517
    %v4519 = vpop.f32.mrb[0].mxu0
    %4520 = vdwg.mxu0
    %v4521 = vadd.f32 %v4288, %v4443
    %v4522 = vadd.f32 %v4289, %v4448
    %v4523 = vadd.f32 %v4290, %v4453
    %v4524 = vadd.f32 %v4291, %v4458
    %v4525 = vadd.f32 %v4292, %v4463
    %v4526 = vadd.f32 %v4293, %v4468
    %v4527 = vadd.f32 %v4294, %v4473
    %v4528 = vadd.f32 %v4295, %v4478
    %v4529 = vadd.f32 %v4296, %v4483
    %v4530 = vadd.f32 %v4297, %v4488
    %v4531 = vadd.f32 %v4298, %v4493
    %v4532 = vadd.f32 %v4299, %v4498
    %v4533 = vadd.f32 %v4300, %v4503
    %v4534 = vadd.f32 %v4301, %v4508
    %v4535 = vadd.f32 %v4302, %v4513
    %v4536 = vadd.f32 %v4303, %v4518
    %v4537 = vld [vmem:[%s6] sm:$0x1]
    %v4539 = vlaneseq
    %v4540 = vshrl.u32 %v4539, 7
    %v4541 = vsub.s32 0, %v4540
    %v4542 = vrot.slane %v4537, %v4541
    %v4544 = vadd.f32 %v4521, %v4542
    %v4545 = vadd.f32 %v4522, %v4542
    %v4546 = vadd.f32 %v4523, %v4542
    %v4547 = vadd.f32 %v4524, %v4542
    %v4548 = vadd.f32 %v4525, %v4542
    %v4549 = vadd.f32 %v4526, %v4542
    %v4550 = vadd.f32 %v4527, %v4542
    %v4551 = vadd.f32 %v4528, %v4542
    %v4552 = vadd.f32 %v4529, %v4542
    %v4553 = vadd.f32 %v4530, %v4542
    %v4554 = vadd.f32 %v4531, %v4542
    %v4555 = vadd.f32 %v4532, %v4542
    %v4556 = vadd.f32 %v4533, %v4542
    %v4557 = vadd.f32 %v4534, %v4542
    %v4558 = vadd.f32 %v4535, %v4542
    %v4559 = vadd.f32 %v4536, %v4542
    %v4560 = vmax.f32 %v4544, 0.0
    %v4561 = vmax.f32 %v4545, 0.0
    %v4562 = vmax.f32 %v4546, 0.0
    %v4563 = vmax.f32 %v4547, 0.0
    %v4564 = vmax.f32 %v4548, 0.0
    %v4565 = vmax.f32 %v4549, 0.0
    %v4566 = vmax.f32 %v4550, 0.0
    %v4567 = vmax.f32 %v4551, 0.0
    %v4568 = vmax.f32 %v4552, 0.0
    %v4569 = vmax.f32 %v4553, 0.0
    %v4570 = vmax.f32 %v4554, 0.0
    %v4571 = vmax.f32 %v4555, 0.0
    %v4572 = vmax.f32 %v4556, 0.0
    %v4573 = vmax.f32 %v4557, 0.0
    %v4574 = vmax.f32 %v4558, 0.0
    %v4575 = vmax.f32 %v4559, 0.0
    %4576 = vst [vmem:[#allocation7] sm:$0xff] %v4560
    %4577 = vst [vmem:[#allocation7 + $0x8] sm:$0xff] %v4561
    %4578 = vst [vmem:[#allocation7 + $0x10] sm:$0xff] %v4562
    %4579 = vst [vmem:[#allocation7 + $0x18] sm:$0xff] %v4563
    %4580 = vst [vmem:[#allocation7 + $0x20] sm:$0xff] %v4564
    %4581 = vst [vmem:[#allocation7 + $0x28] sm:$0xff] %v4565
    %4582 = vst [vmem:[#allocation7 + $0x30] sm:$0xff] %v4566
    %4583 = vst [vmem:[#allocation7 + $0x38] sm:$0xff] %v4567
    %4584 = vst [vmem:[#allocation7 + $0x40] sm:$0xff] %v4568
    %4585 = vst [vmem:[#allocation7 + $0x48] sm:$0xff] %v4569
    %4586 = vst [vmem:[#allocation7 + $0x50] sm:$0xff] %v4570
    %4587 = vst [vmem:[#allocation7 + $0x58] sm:$0xff] %v4571
    %4588 = vst [vmem:[#allocation7 + $0x60] sm:$0xff] %v4572
    %4589 = vst [vmem:[#allocation7 + $0x68] sm:$0xff] %v4573
    %4590 = vst [vmem:[#allocation7 + $0x70] sm:$0xff] %v4574
    %4591 = vst [vmem:[#allocation7 + $0x78] sm:$0xff] %v4575
    // Predicated region
    $region34: #{match3_features_extractor.1} parent=1 // pred_check
      _
    $region35: #{match3_features_extractor.1} parent=1 // pred_check_branch
      %4593 = sbr.rel (0) target = $region37
    $region36: #{match3_features_extractor.1} parent=1 // pred_region
      %s4595 = ssub.s32 2048, 2048
      %4596 = vsyncadd [#allocation6], %s4595
      %s4597 = sshll.u32 [#allocation7], 4
      %s4598 = int_to_ptr.vmem [resolvable:$true] %s4597
      %4603 = dma.vmem_to_hbm [thread:$0]  %s4598, 2048, %s7, [#allocation6], 128, 128, 8
    $region37: #{match3_features_extractor.1} parent=1 // pred_fallthru
      _
    // Predicated region
    $region38: #{match3_features_extractor.1} parent=1 // pred_check
      _
    $region39: #{match3_features_extractor.1} parent=1 // pred_check_branch
      %4605 = sbr.rel (0) target = $region41
    $region40: #{match3_features_extractor.1} parent=1 // pred_region
      %4606 = dma.done [#allocation6], 2048
    $region41: #{match3_features_extractor.1} parent=1 // pred_fallthru
      _
    %4607 = vsyncpa [#allocation5], 1
    %4608 = vsyncpa [#allocation6], 1

</llo_original>
